<compile_context>
chip_gen: v6e
topology: v6e:2x2x1
jax: 0.10.0
libtpu: 0.0.40
codegen_flags: <defaults>
</compile_context>

<pallas_src>
import functools

import jax
import jax.numpy as jnp
from jax import lax
from jax.experimental import pallas as pl
from jax.experimental.pallas import tpu as pltpu


def _round_up(x, m):
    return ((x + m - 1) // m) * m


def _gram_kernel(emb_ref, asg_ref, w_ref, g_ref, x_ref, *, d, c):
    """One (batch, split, n_tile) grid step: normalize, weight, fused Gram."""
    k = pl.program_id(2)                      # reduction axis (last)
    tn = x_ref.shape[0]
    pad_cols = x_ref.shape[1] - (d + c)

    @pl.when(k == 0)
    def _():
        g_ref[...] = jnp.zeros_like(g_ref)
        if pad_cols > 0:
            # Zero the lane padding once per (batch, split); data columns are
            # fully rewritten every step, so this stays valid across k.
            x_ref[:, d + c:] = jnp.zeros((tn, pad_cols), jnp.float32)

    e = emb_ref[...].astype(jnp.float32)      # (tn, D)
    a = asg_ref[...].astype(jnp.float32)      # (tn, C)
    w = w_ref[...].astype(jnp.float32)        # (tn, 1)

    # F.normalize(x, dim=-1, p=2, eps=1e-12): x / max(||x||, eps), then * w.
    # rsqrt on the clamped squared norm preserves the eps semantics exactly
    # (sqrt is monotone) and runs on the EUP slot.
    eps2 = 1e-24
    se = w * lax.rsqrt(jnp.maximum(jnp.sum(e * e, axis=-1, keepdims=True), eps2))
    sa = w * lax.rsqrt(jnp.maximum(jnp.sum(a * a, axis=-1, keepdims=True), eps2))

    x_ref[:, :d] = e * se
    x_ref[:, d:d + c] = a * sa

    x = x_ref[...]                            # (tn, P) lane-dense slab
    # Single fused Gram: G += X^T X  (contract the point axis, axis 0).
    g_ref[...] += lax.dot_general(
        x, x, (((0,), (0,)), ((), ())), preferred_element_type=jnp.float32)


@functools.partial(jax.jit, static_argnames=("tn", "n_split"))
def whitened_kmeans_loss(embedding, assignments, weights=None, *, tn=2048,
                         n_split=1):
    """Exact port of WhitenedKMeansLoss.forward (whitened K-means, eq. (6))."""
    batch_size = embedding.shape[0]
    embedding_size = embedding.shape[-1]
    num_sources = assignments.shape[-1]
    D, C = embedding_size, num_sources

    emb = embedding.reshape(batch_size, -1, D)
    asg = assignments.reshape(batch_size, -1, C)
    n_points = emb.shape[1]
    if weights is None:
        w = jnp.ones((batch_size, n_points, 1), jnp.float32)
    else:
        w = weights.reshape(batch_size, -1, 1)

    # Tile / pad the point axis.  Zero-padded rows normalize to zero rows and
    # contribute nothing to the Grams, so padding is exact.
    tn_eff = _round_up(min(tn, n_points), 8)
    n_pad = _round_up(n_points, tn_eff * n_split)
    if n_pad != n_points:
        pad = ((0, 0), (0, n_pad - n_points), (0, 0))
        emb = jnp.pad(emb, pad)
        asg = jnp.pad(asg, pad)
        w = jnp.pad(w, pad)
    S = n_split
    K = n_pad // (tn_eff * S)
    P = _round_up(D + C, 128)         # lane-dense fused-Gram width

    kernel = functools.partial(_gram_kernel, d=D, c=C)

    itemsize = jnp.dtype(emb.dtype).itemsize
    cost = pl.CostEstimate(
        flops=2 * batch_size * n_pad * P * P,
        transcendentals=2 * batch_size * n_pad,
        bytes_accessed=(batch_size * n_pad * (D + C + 1) * itemsize
                        + batch_size * S * P * P * 4),
    )

    g = pl.pallas_call(
        kernel,
        out_shape=jax.ShapeDtypeStruct((batch_size, S, P, P), jnp.float32),
        grid_spec=pltpu.PrefetchScalarGridSpec(
            num_scalar_prefetch=0,
            grid=(batch_size, S, K),
            in_specs=[
                pl.BlockSpec((None, tn_eff, D), lambda b, s, k: (b, s * K + k, 0)),
                pl.BlockSpec((None, tn_eff, C), lambda b, s, k: (b, s * K + k, 0)),
                pl.BlockSpec((None, tn_eff, 1), lambda b, s, k: (b, s * K + k, 0)),
            ],
            out_specs=pl.BlockSpec((None, None, P, P),
                                   lambda b, s, k: (b, s, 0, 0)),
            scratch_shapes=[pltpu.VMEM((tn_eff, P), jnp.float32)],
        ),
        compiler_params=pltpu.CompilerParams(
            dimension_semantics=("parallel", "parallel", "arbitrary")),
        cost_estimate=cost,
    )(emb, asg, w)

    g = jnp.sum(g, axis=1)            # sum per-split partial Grams -> (B, P, P)
    vtv = g[:, :D, :D]
    vty = g[:, :D, D:D + C]
    yty = g[:, D:D + C, D:D + C]

    # TODO(synk): torch.inverse has no Pallas equivalent; the tiny DxD / CxC
    # inverses and the final trace/loss scalar are plain JAX glue.
    ivtv = jnp.linalg.inv(vtv + jnp.eye(D, dtype=jnp.float32))
    iyty = jnp.linalg.inv(yty + jnp.eye(C, dtype=jnp.float32))
    trace = jnp.sum((ivtv @ vty) * (vty @ iyty))
    total_dim = (D + C) * batch_size
    loss = total_dim - 2.0 * trace
    return loss / batch_size


def _reference_loss(embedding, assignments, weights=None):
    """Pure-JAX reference mirroring the PyTorch module (for sanity check)."""
    B = embedding.shape[0]
    D = embedding.shape[-1]
    C = assignments.shape[-1]
    e = embedding.reshape(B, -1, D).astype(jnp.float32)
    a = assignments.reshape(B, -1, C).astype(jnp.float32)
    e = e / jnp.maximum(jnp.linalg.norm(e, axis=-1, keepdims=True), 1e-12)
    a = a / jnp.maximum(jnp.linalg.norm(a, axis=-1, keepdims=True), 1e-12)
    if weights is not None:
        w = weights.reshape(B, -1, 1).astype(jnp.float32)
        e = w * e
        a = w * a
    vtv = jnp.einsum("bnd,bne->bde", e, e)
    vty = jnp.einsum("bnd,bnc->bdc", e, a)
    yty = jnp.einsum("bnc,bnk->bck", a, a)
    ivtv = jnp.linalg.inv(vtv + jnp.eye(D))
    iyty = jnp.linalg.inv(yty + jnp.eye(C))
    trace = jnp.sum((ivtv @ vty) * (vty @ iyty))
    return ((D + C) * B - 2.0 * trace) / B


if __name__ == "__main__":
    key = jax.random.PRNGKey(0)
    k1, k2, k3 = jax.random.split(key, 3)

    B, T, F, D, C = 2, 8, 8, 32, 4    # embedding (B,T,F,D); N = T*F = 64 points
    embedding = jax.random.normal(k1, (B, T, F, D), jnp.float32)
    # ideal-binary-mask-like assignments (one-hot over sources per point)
    labels = jax.random.randint(k2, (B, T, F), 0, C)
    assignments = jax.nn.one_hot(labels, C, dtype=jnp.float32)
    weights = jax.random.uniform(k3, (B, T, F), jnp.float32)

    # Default path: single split, one big tile (tn_eff == N here).
    loss = jax.block_until_ready(
        whitened_kmeans_loss(embedding, assignments, weights))
    ref = jax.block_until_ready(_reference_loss(embedding, assignments, weights))
    assert jnp.allclose(loss, ref, rtol=1e-3, atol=1e-3), (loss, ref)

    # Exercise the multi-split (v7x dual-TensorCore) path, the k-reduction
    # accumulation loop, and the weights=None branch.
    loss2 = jax.block_until_ready(
        whitened_kmeans_loss(embedding, assignments, None, tn=16, n_split=2))
    ref2 = jax.block_until_ready(_reference_loss(embedding, assignments, None))
    assert jnp.allclose(loss2, ref2, rtol=1e-3, atol=1e-3), (loss2, ref2)

    print("KERNEL_OK")
</pallas_src>

<mosaic_0001>
module attributes {stable_mosaic.version = 11 : i64} {
  func.func @_gram_kernel(%arg0: i32, %arg1: i32, %arg2: i32, %arg3: memref<1x64x32xf32, #tpu.memory_space<vmem>>, %arg4: memref<1x64x4xf32, #tpu.memory_space<vmem>>, %arg5: memref<1x64x1xf32, #tpu.memory_space<vmem>>, %arg6: memref<1x1x128x128xf32, #tpu.memory_space<vmem>>, %arg7: memref<64x128xf32, #tpu.memory_space<vmem>>) attributes {dimension_semantics = [#tpu.dimension_semantics<parallel>, #tpu.dimension_semantics<parallel>, #tpu.dimension_semantics<arbitrary>], iteration_bounds = array<i64: 2, 1, 1>, scalar_prefetch = 0 : i64, scratch_operands = 1 : i64, tpu.core_type = #tpu.core_type<tc>, window_params = [{transform_indices = @transform_0, window_bounds = array<i64: 1, 64, 32>}, {transform_indices = @transform_1, window_bounds = array<i64: 1, 64, 4>}, {transform_indices = @transform_2, window_bounds = array<i64: 1, 64, 1>}, {transform_indices = @transform_3, window_bounds = array<i64: 1, 1, 128, 128>}]} {
    %c0_i32 = arith.constant 0 : i32
    %0 = arith.cmpi eq, %arg2, %c0_i32 : i32
    %1 = arith.extui %0 : i1 to i32
    %c0_i32_0 = arith.constant 0 : i32
    %2 = arith.cmpi ne, %1, %c0_i32_0 : i32
    scf.if %2 {
      %cst_26 = arith.constant 0.000000e+00 : f32
      %37 = vector.broadcast %cst_26 : f32 to vector<128x128xf32>
      %c0_27 = arith.constant 0 : index
      %c0_28 = arith.constant 0 : index
      %c0_29 = arith.constant 0 : index
      %c0_30 = arith.constant 0 : index
      %38 = vector.load %arg6[%c0_27, %c0_28, %c0_29, %c0_30] : memref<1x1x128x128xf32, #tpu.memory_space<vmem>>, vector<1x1x128x128xf32>
      %39 = vector.shape_cast %38 : vector<1x1x128x128xf32> to vector<128x128xf32>
      %40 = vector.shape_cast %37 : vector<128x128xf32> to vector<1x1x128x128xf32>
      tpu.vector_store %arg6[%c0_27, %c0_28, %c0_29, %c0_30], %40 {strides = array<i32>} : memref<1x1x128x128xf32, #tpu.memory_space<vmem>>, vector<1x1x128x128xf32>,
      %cst_31 = arith.constant 0.000000e+00 : f32
      %41 = vector.broadcast %cst_31 : f32 to vector<64x92xf32>
      %c0_32 = arith.constant 0 : index
      %c36 = arith.constant 36 : index
      %42 = vector.load %arg7[%c0_32, %c36] : memref<64x128xf32, #tpu.memory_space<vmem>>, vector<64x92xf32>
      tpu.vector_store %arg7[%c0_32, %c36], %41 {strides = array<i32>} : memref<64x128xf32, #tpu.memory_space<vmem>>, vector<64x92xf32>,
    } else {
    }
    %c0 = arith.constant 0 : index
    %c0_1 = arith.constant 0 : index
    %c0_2 = arith.constant 0 : index
    %3 = vector.load %arg3[%c0, %c0_1, %c0_2] : memref<1x64x32xf32, #tpu.memory_space<vmem>>, vector<1x64x32xf32>
    %4 = vector.shape_cast %3 : vector<1x64x32xf32> to vector<64x32xf32>
    %c0_3 = arith.constant 0 : index
    %c0_4 = arith.constant 0 : index
    %c0_5 = arith.constant 0 : index
    %5 = vector.load %arg4[%c0_3, %c0_4, %c0_5] : memref<1x64x4xf32, #tpu.memory_space<vmem>>, vector<1x64x4xf32>
    %6 = vector.shape_cast %5 : vector<1x64x4xf32> to vector<64x4xf32>
    %c0_6 = arith.constant 0 : index
    %c0_7 = arith.constant 0 : index
    %c0_8 = arith.constant 0 : index
    %7 = vector.load %arg5[%c0_6, %c0_7, %c0_8] : memref<1x64x1xf32, #tpu.memory_space<vmem>>, vector<1x64x1xf32>
    %8 = vector.shape_cast %7 : vector<1x64x1xf32> to vector<64x1xf32>
    %9 = arith.mulf %4, %4 : vector<64x32xf32>
    %cst = arith.constant dense<0.000000e+00> : vector<64xf32>
    %10 = vector.multi_reduction <add>, %9, %cst [1] : vector<64x32xf32> to vector<64xf32>
    %11 = vector.shape_cast %10 : vector<64xf32> to vector<64x1xf32>
    %cst_9 = arith.constant 1.000000e-24 : f32
    %12 = vector.broadcast %cst_9 : f32 to vector<64x1xf32>
    %13 = arith.maximumf %11, %12 : vector<64x1xf32>
    %14 = math.rsqrt %13 : vector<64x1xf32>
    %15 = arith.mulf %8, %14 : vector<64x1xf32>
    %16 = arith.mulf %6, %6 : vector<64x4xf32>
    %cst_10 = arith.constant dense<0.000000e+00> : vector<64xf32>
    %17 = vector.multi_reduction <add>, %16, %cst_10 [1] : vector<64x4xf32> to vector<64xf32>
    %18 = vector.shape_cast %17 : vector<64xf32> to vector<64x1xf32>
    %cst_11 = arith.constant 1.000000e-24 : f32
    %19 = vector.broadcast %cst_11 : f32 to vector<64x1xf32>
    %20 = arith.maximumf %18, %19 : vector<64x1xf32>
    %21 = math.rsqrt %20 : vector<64x1xf32>
    %22 = arith.mulf %8, %21 : vector<64x1xf32>
    %23 = vector.broadcast %15 : vector<64x1xf32> to vector<64x32xf32>
    %24 = arith.mulf %4, %23 : vector<64x32xf32>
    %c0_12 = arith.constant 0 : index
    %c0_13 = arith.constant 0 : index
    %25 = vector.load %arg7[%c0_12, %c0_13] : memref<64x128xf32, #tpu.memory_space<vmem>>, vector<64x32xf32>
    tpu.vector_store %arg7[%c0_12, %c0_13], %24 {strides = array<i32>} : memref<64x128xf32, #tpu.memory_space<vmem>>, vector<64x32xf32>,
    %26 = vector.broadcast %22 : vector<64x1xf32> to vector<64x4xf32>
    %27 = arith.mulf %6, %26 : vector<64x4xf32>
    %c0_14 = arith.constant 0 : index
    %c32 = arith.constant 32 : index
    %28 = vector.load %arg7[%c0_14, %c32] : memref<64x128xf32, #tpu.memory_space<vmem>>, vector<64x4xf32>
    tpu.vector_store %arg7[%c0_14, %c32], %27 {strides = array<i32>} : memref<64x128xf32, #tpu.memory_space<vmem>>, vector<64x4xf32>,
    %c0_15 = arith.constant 0 : index
    %c0_16 = arith.constant 0 : index
    %29 = vector.load %arg7[%c0_15, %c0_16] : memref<64x128xf32, #tpu.memory_space<vmem>>, vector<64x128xf32>
    %c0_17 = arith.constant 0 : index
    %c0_18 = arith.constant 0 : index
    %c0_19 = arith.constant 0 : index
    %c0_20 = arith.constant 0 : index
    %30 = vector.load %arg6[%c0_17, %c0_18, %c0_19, %c0_20] : memref<1x1x128x128xf32, #tpu.memory_space<vmem>>, vector<1x1x128x128xf32>
    %31 = vector.shape_cast %30 : vector<1x1x128x128xf32> to vector<128x128xf32>
    %cst_21 = arith.constant dense<0.000000e+00> : vector<128x128xf32>
    %32 = tpu.matmul %29, %29, %cst_21 {dimension_numbers = #tpu.dot_dimension_numbers<[0], [0], [1], [1], [0, 1, 1, 1], [], []>} : vector<64x128xf32>, vector<64x128xf32>, vector<128x128xf32> -> vector<128x128xf32>
    %33 = arith.addf %31, %32 : vector<128x128xf32>
    %c0_22 = arith.constant 0 : index
    %c0_23 = arith.constant 0 : index
    %c0_24 = arith.constant 0 : index
    %c0_25 = arith.constant 0 : index
    %34 = vector.load %arg6[%c0_22, %c0_23, %c0_24, %c0_25] : memref<1x1x128x128xf32, #tpu.memory_space<vmem>>, vector<1x1x128x128xf32>
    %35 = vector.shape_cast %34 : vector<1x1x128x128xf32> to vector<128x128xf32>
    %36 = vector.shape_cast %33 : vector<128x128xf32> to vector<1x1x128x128xf32>
    tpu.vector_store %arg6[%c0_22, %c0_23, %c0_24, %c0_25], %36 {strides = array<i32>} : memref<1x1x128x128xf32, #tpu.memory_space<vmem>>, vector<1x1x128x128xf32>,
    return
  }
  func.func @transform_0(%arg0: i32, %arg1: i32, %arg2: i32) -> (i32, i32, i32) {
    %c1_i32 = arith.constant 1 : i32
    %0 = arith.muli %arg1, %c1_i32 : i32
    %1 = arith.addi %0, %arg2 : i32
    %c0_i32 = arith.constant 0 : i32
    %c0_i32_0 = arith.constant 0 : i32
    return %arg0, %1, %c0_i32 : i32, i32, i32
  }
  func.func @transform_1(%arg0: i32, %arg1: i32, %arg2: i32) -> (i32, i32, i32) {
    %c1_i32 = arith.constant 1 : i32
    %0 = arith.muli %arg1, %c1_i32 : i32
    %1 = arith.addi %0, %arg2 : i32
    %c0_i32 = arith.constant 0 : i32
    %c0_i32_0 = arith.constant 0 : i32
    return %arg0, %1, %c0_i32 : i32, i32, i32
  }
  func.func @transform_2(%arg0: i32, %arg1: i32, %arg2: i32) -> (i32, i32, i32) {
    %c1_i32 = arith.constant 1 : i32
    %0 = arith.muli %arg1, %c1_i32 : i32
    %1 = arith.addi %0, %arg2 : i32
    %c0_i32 = arith.constant 0 : i32
    %c0_i32_0 = arith.constant 0 : i32
    return %arg0, %1, %c0_i32 : i32, i32, i32
  }
  func.func @transform_3(%arg0: i32, %arg1: i32, %arg2: i32) -> (i32, i32, i32, i32) {
    %c0_i32 = arith.constant 0 : i32
    %c0_i32_0 = arith.constant 0 : i32
    %c0_i32_1 = arith.constant 0 : i32
    return %arg0, %arg1, %c0_i32, %c0_i32_0 : i32, i32, i32, i32
  }
}

</mosaic_0001>

<llo_original>
// kernel: custom-call.22
$region0: #{custom-call.22}
  %s0 = inlined_call_operand.vmem [shape: f32[2,32,32], index: 0, kind: input, shape index: {}]
  %s1 = inlined_call_operand.vmem [shape: f32[2,32,32], index: 1, kind: output, shape index: {0}]
  %s2 = inlined_call_operand.hbm [shape: s32[2,32], index: 2, kind: output, shape index: {1}]
  %s3 = inlined_call_operand.vmem [shape: s32[2,32], index: 3, kind: output, shape index: {2}]
  %4 = xla_tuple %s1, %s2, %s3
  $region1: #{custom-call.22} parent=0
    #allocation0 [shape = 'u8[32768]{0}', space=vmem, size = 0x8000, scoped, tag = 'operand span for operand 0']
    #allocation1 [shape = 'u8[32768]{0}', space=vmem, size = 0x8000, scoped, tag = 'operand span for operand 1']
    #allocation2 [shape = 'u8[4096]{0}', space=vmem, size = 0x1000, scoped, tag = 'operand span for operand 2']
    #allocation3 [shape = 'u8[2048]{0}', space=vmem, size = 0x800, scoped, tag = 'packed  for operand 2']
    #allocation4 [shape = 's32[2]{0}', space=sflag, size = 0x8, scoped, tag = 'scoped memory for custom-call.22']
    #allocation5 [shape = 'u8[4096]{0}', space=vmem, size = 0x1000, scoped, tag = 'operand span for operand 3']
    #allocation6 [shape = 'u8[2048]{0}', space=vmem, size = 0x800, scoped, tag = 'packed  for operand 3']
    %5 = vsyncpa [#allocation4], 0
    %s6 = scalar_lea.sflag [#allocation4], 1
    %7 = vsyncpa %s6, 0
    loop: start=0, step=1, limit=4
    $region2: #{custom-call.22} parent=1 // loop_pre_header
      _
    $region3: #{custom-call.22} parent=1 // loop_header
      %s9 = sphi 0, %s13
      %p10 = scmp.ge.s32.totalorder %s9, 4
      %s21 = sphi 0, %s23
      %s24 = sphi 0, %s21
      %s25 = sphi 0, %s24
      %s41 = sphi 0, %s25
      %s49 = sphi 0, %s51
      %s52 = sphi 0, %s49
      %s53 = sphi 0, %s52
      %s69 = sphi 0, %s53
    $region4: #{custom-call.22} parent=1 // loop_header_branch
      %12 = sbr.rel (%p10) target = $region8
    $region5: #{custom-call.22} parent=1 // loop_body
      %s14 = ssub.s32 %s9, 1
      %s15 = ssub.s32 %s9, 2
      %s16 = sadd.s32 %s9, 1
      %s17 = sshrl.u32 %s9, 3
      %s18 = sshrl.u32 %s16, 3
      %s19 = ssub.s32 %s17, %s18
      %p20 = scmp.eq.s32.totalorder %s19, 0
      %s22 = sadd.s32 %s21, 1
      %s23 = scalar_select %p20, %s21, %s22
      %p26 = pneg %p20
      %p27 = scmp.eq.s32.totalorder %s9, 1
      %p28 = por %p26, %p27
      %p29 = scmp.ne.s32.totalorder %s21, %s24
      %p30 = scmp.eq.s32.totalorder %s9, 0
      %p31 = por %p29, %p30
      %p32 = scmp.ne.s32.totalorder %s21, %s24
      %p33 = scmp.eq.s32.totalorder %s14, 1
      %p34 = por %p32, %p33
      %p35 = scmp.ne.s32.totalorder %s24, %s25
      %p36 = scmp.eq.s32.totalorder %s14, 0
      %p37 = por %p35, %p36
      %p38 = scmp.ne.s32.totalorder %s24, %s25
      %p39 = scmp.eq.s32.totalorder %s15, 1
      %p40 = por %p38, %p39
      %p42 = scmp.ne.s32.totalorder %s25, %s41
      %p43 = scmp.eq.s32.totalorder %s15, 0
      %p44 = por %p42, %p43
      %s45 = sshrl.u32 %s9, 3
      %s46 = sshrl.u32 %s16, 3
      %s47 = ssub.s32 %s45, %s46
      %p48 = scmp.eq.s32.totalorder %s47, 0
      %s50 = sadd.s32 %s49, 1
      %s51 = scalar_select %p48, %s49, %s50
      %p54 = pneg %p48
      %p55 = scmp.eq.s32.totalorder %s9, 1
      %p56 = por %p54, %p55
      %p57 = scmp.ne.s32.totalorder %s49, %s52
      %p58 = scmp.eq.s32.totalorder %s9, 0
      %p59 = por %p57, %p58
      %p60 = scmp.ne.s32.totalorder %s49, %s52
      %p61 = scmp.eq.s32.totalorder %s14, 1
      %p62 = por %p60, %p61
      %p63 = scmp.ne.s32.totalorder %s52, %s53
      %p64 = scmp.eq.s32.totalorder %s14, 0
      %p65 = por %p63, %p64
      %p66 = scmp.ne.s32.totalorder %s52, %s53
      %p67 = scmp.eq.s32.totalorder %s15, 1
      %p68 = por %p66, %p67
      %p70 = scmp.ne.s32.totalorder %s53, %s69
      %p71 = scmp.eq.s32.totalorder %s15, 0
      %p72 = por %p70, %p71
      %p73 = scmp.le.s32.totalorder 1, %s9
      %p74 = scmp.lt.s32.totalorder %s9, 3
      %p75 = pnand %p73, %p74
      %p76 = pneg %p75
      // Predicated region
      $region9: #{custom-call.22} parent=5 // pred_check
        _
      $region10: #{custom-call.22} parent=5 // pred_check_branch
        %78 = sbr.rel (%p75) target = $region12
      $region11: #{custom-call.22} parent=5 // pred_region
        %s79 = ssub.s32 %s9, 1
      $region12: #{custom-call.22} parent=5 // pred_fallthru
        _
      %p80 = scmp.lt.s32.totalorder %s9, 2
      // Predicated region
      $region13: #{custom-call.22} parent=5 // pred_check
        %p81 = pneg %p80
      $region14: #{custom-call.22} parent=5 // pred_check_branch
        %83 = sbr.rel (%p81) target = $region16
      $region15: #{custom-call.22} parent=5 // pred_region
        %s84 = sand.u32 %s9, 1
        %s85 = sand.u32 %s9, 1
        %s86 = smul.addr %s85, 32
        %s87 = scalar_lea.vmem [#allocation0], %s86
        %s88 = smul.addr %s9, 32
        %s89 = scalar_lea.vmem %s0, %s88
        // Predicated region
        $region17: #{custom-call.22} parent=15 // pred_check
          _
        $region18: #{custom-call.22} parent=15 // pred_check_branch
          %91 = sbr.rel (0) target = $region20
        $region19: #{custom-call.22} parent=15 // pred_region
          // Predicated region
          $region21: #{custom-call.22} parent=19 // pred_check
            _
          $region22: #{custom-call.22} parent=19 // pred_check_branch
            %93 = sbr.rel (0) target = $region24
          $region23: #{custom-call.22} parent=19 // pred_region
            loop: start=0, step=1, limit=1
            $region25: #{custom-call.22} parent=23 // loop_pre_header
              _
            $region26: #{custom-call.22} parent=23 // loop_header
              %s95 = sphi 0, %s99
              %p96 = scmp.ge.s32.totalorder %s95, 1
              %s100 = sphi %s89, %s89
              %s101 = sphi %s87, %s87
            $region27: #{custom-call.22} parent=23 // loop_header_branch
              %98 = sbr.rel (%p96) target = $region31
            $region28: #{custom-call.22} parent=23 // loop_body
              %v102 = vld [vmem:[%s100] sm:$0xff]
              %103 = vst [vmem:[%s101] sm:$0xff] %v102
              %v104 = vld [vmem:[%s100 + $0x8] sm:$0xff]
              %105 = vst [vmem:[%s101 + $0x8] sm:$0xff] %v104
              %v106 = vld [vmem:[%s100 + $0x10] sm:$0xff]
              %107 = vst [vmem:[%s101 + $0x10] sm:$0xff] %v106
              %v108 = vld [vmem:[%s100 + $0x18] sm:$0xff]
              %109 = vst [vmem:[%s101 + $0x18] sm:$0xff] %v108
            $region29: #{custom-call.22} parent=23 // loop_footer
              %s99 = sadd.s32 1, %s95
            $region30: #{custom-call.22} parent=23 // loop_footer_branch
              %94 = sbr.rel target = $region26
            $region31: #{custom-call.22} parent=23 // loop_exit
              _
          $region24: #{custom-call.22} parent=19 // pred_fallthru
            _
          // Predicated region
          $region32: #{custom-call.22} parent=19 // pred_check
            _
          $region33: #{custom-call.22} parent=19 // pred_check_branch
            %111 = sbr.rel target = $region35
          $region34: #{custom-call.22} parent=19 // pred_region
            _
          $region35: #{custom-call.22} parent=19 // pred_fallthru
            _
        $region20: #{custom-call.22} parent=15 // pred_fallthru
          _
        %112 = vnop
      $region16: #{custom-call.22} parent=5 // pred_fallthru
        _
      %p113 = scmp.le.s32.totalorder 1, %s9
      %p114 = scmp.lt.s32.totalorder %s9, 3
      %p115 = pnand %p113, %p114
      %p116 = pneg %p115
      // Predicated region
      $region36: #{custom-call.22} parent=5 // pred_check
        _
      $region37: #{custom-call.22} parent=5 // pred_check_branch
        %118 = sbr.rel (%p115) target = $region39
      $region38: #{custom-call.22} parent=5 // pred_region
        #allocation7 [shape = 's32[32,128]{1,0}', space=vmem, size = 0x4000, scoped, tag = 'scratch for permutations']
        %s119 = ssub.s32 %s9, 1
        %s120 = sand.u32 %s14, 1
        %s121 = sand.u32 %s14, 1
        %s122 = smul.addr %s121, 32
        %s123 = scalar_lea.vmem [#allocation0], %s122
        %s124 = sand.u32 %s14, 1
        %s125 = sand.u32 %s14, 1
        %s126 = smul.addr %s125, 32
        %s127 = scalar_lea.vmem [#allocation0], %s126
        %s128 = sand.u32 %s14, 1
        %s129 = sand.u32 %s14, 1
        %s130 = smul.addr %s129, 32
        %s131 = scalar_lea.vmem [#allocation1], %s130
        %p132 = pneg %p37
        %p133 = pneg %p34
        %s134 = sand.u32 %s24, 1
        %s135 = scalar_lea.sflag [#allocation4], %s134
        %s136 = sand.u32 %s24, 1
        %s137 = smul.addr %s136, 2
        %s138 = scalar_lea.vmem [#allocation3], %s137
        %p139 = pneg %p65
        %p140 = pneg %p62
        %s141 = sand.u32 %s52, 1
        %s142 = sand.u32 %s52, 1
        %s143 = smul.addr %s142, 2
        %s144 = scalar_lea.vmem [#allocation6], %s143
        %s145 = sshrl.u32 %s14, 3
        %s146 = sshrl.u32 %s14, 3
        %v147 = vld [vmem:[%s123] sm:$0xff]
        %148 = vst [vmem:[%s131] sm:$0xff] %v147
        %s149 = scalar_lea.vmem %s131, 8 [#allocation1]
        %s150 = scalar_lea.vmem %s123, 8 [#allocation0]
        %v151 = vld [vmem:[%s150] sm:$0xff]
        %152 = vst [vmem:[%s149] sm:$0xff] %v151
        %s153 = scalar_lea.vmem %s131, 16 [#allocation1]
        %s154 = scalar_lea.vmem %s123, 16 [#allocation0]
        %v155 = vld [vmem:[%s154] sm:$0xff]
        %156 = vst [vmem:[%s153] sm:$0xff] %v155
        %s157 = scalar_lea.vmem %s131, 24 [#allocation1]
        %s158 = scalar_lea.vmem %s123, 24 [#allocation0]
        %v159 = vld [vmem:[%s158] sm:$0xff]
        %160 = vst [vmem:[%s157] sm:$0xff] %v159
        %s161 = sand.u32 %s14, 7
        %s162 = scalar_lea.vmem [#allocation2], %s161
        %s163 = sand.u32 %s14, 7
        %s164 = scalar_lea.vmem [#allocation5], %s163
        %165 = vst [vmem:[%s162] sm:$0x1] 0
        %v166 = vlaneseq
        %v167 = vshrl.u32 %v166, 7
        %v168 = vmov %v167
        loop: start=0, step=1, limit=4
        $region40: #{custom-call.22} parent=38 // loop_pre_header
          _
        $region41: #{custom-call.22} parent=38 // loop_header
          %s170 = sphi 0, %s174
          %p171 = scmp.ge.s32.totalorder %s170, 4
        $region42: #{custom-call.22} parent=38 // loop_header_branch
          %173 = sbr.rel (%p171) target = $region46
        $region43: #{custom-call.22} parent=38 // loop_body
          %s175 = smul.addr %s170, 8
          %s176 = scalar_lea.vmem [#allocation7], %s175
          %s177 = smul.u32 %s170, 8
          %v178 = vstv %s177
          %v179 = vadd.s32 %v168, %v178
          %180 = vst [vmem:[%s176] sm:$0xff] %v179
        $region44: #{custom-call.22} parent=38 // loop_footer
          %s174 = sadd.s32 1, %s170
        $region45: #{custom-call.22} parent=38 // loop_footer_branch
          %169 = sbr.rel target = $region41
        $region46: #{custom-call.22} parent=38 // loop_exit
          _
        loop: start=0, step=1, limit=32
        $region47: #{custom-call.22} parent=38 // loop_pre_header
          _
        $region48: #{custom-call.22} parent=38 // loop_header
          %s182 = sphi 0, %s186
          %p183 = scmp.ge.s32.totalorder %s182, 32
        $region49: #{custom-call.22} parent=38 // loop_header_branch
          %185 = sbr.rel (%p183) target = $region53
        $region50: #{custom-call.22} parent=38 // loop_body
          %v187 = vstv %s182
          %v188 = vlaneseq
          %v189 = vshrl.u32 %v188, 7
          %v190 = vmov %v189
          %v191 = vld [vmem:[%s131] sm:$0xff]
          %v192 = vand.u32 2147483647, %v191
          %v194 = vstv %s182
          %vm195 = vcmp.ge.s32.totalorder %v190, %v194
          %vm196 = vcmp.lt.s32.totalorder %v190, 32
          %vm197 = vmand %vm195, %vm196
          %vm198 = vcmp.lt.f32.partialorder -inf, %v192
          %vm199 = vmand %vm197, %vm198
          %v200 = vsel %vm199, %v190, %v187
          %v201 = vsel %vm199, %v192, -inf
          %s202 = scalar_lea.vmem %s131, 8 [#allocation1]
          %v203 = vld [vmem:[%s202] sm:$0xff]
          %v204 = vand.u32 2147483647, %v203
          %v205 = vadd.s32 %v190, 8
          %v206 = vstv %s182
          %vm207 = vcmp.ge.s32.totalorder %v205, %v206
          %vm208 = vcmp.lt.s32.totalorder %v205, 32
          %vm209 = vmand %vm207, %vm208
          %vm210 = vcmp.lt.f32.partialorder %v201, %v204
          %vm211 = vmand %vm209, %vm210
          %v212 = vsel %vm211, %v205, %v200
          %v213 = vsel %vm211, %v204, %v201
          %s214 = scalar_lea.vmem %s131, 16 [#allocation1]
          %v215 = vld [vmem:[%s214] sm:$0xff]
          %v216 = vand.u32 2147483647, %v215
          %v217 = vadd.s32 %v190, 16
          %v218 = vstv %s182
          %vm219 = vcmp.ge.s32.totalorder %v217, %v218
          %vm220 = vcmp.lt.s32.totalorder %v217, 32
          %vm221 = vmand %vm219, %vm220
          %vm222 = vcmp.lt.f32.partialorder %v213, %v216
          %vm223 = vmand %vm221, %vm222
          %v224 = vsel %vm223, %v217, %v212
          %v225 = vsel %vm223, %v216, %v213
          %s226 = scalar_lea.vmem %s131, 24 [#allocation1]
          %v227 = vld [vmem:[%s226] sm:$0xff]
          %v228 = vand.u32 2147483647, %v227
          %v229 = vadd.s32 %v190, 24
          %v230 = vstv %s182
          %vm231 = vcmp.ge.s32.totalorder %v229, %v230
          %vm232 = vcmp.lt.s32.totalorder %v229, 32
          %vm233 = vmand %vm231, %vm232
          %vm234 = vcmp.lt.f32.partialorder %v225, %v228
          %vm235 = vmand %vm233, %vm234
          %v236 = vsel %vm235, %v229, %v224
          %v237 = vsel %vm235, %v228, %v225
          %v238 = vrot.slane %v237, 1
          %v239 = vrot.slane %v236, 1
          %vm240 = vcmp.ge.f32.partialorder %v238, %v237
          %v241 = vsel %vm240, %v238, %v237
          %v242 = vsel %vm240, %v239, %v236
          %v243 = vrot.slane %v238, 1
          %v244 = vrot.slane %v239, 1
          %vm245 = vcmp.ge.f32.partialorder %v243, %v241
          %v246 = vsel %vm245, %v243, %v241
          %v247 = vsel %vm245, %v244, %v242
          %v248 = vrot.slane %v243, 1
          %v249 = vrot.slane %v244, 1
          %vm250 = vcmp.ge.f32.partialorder %v248, %v246
          %v251 = vsel %vm250, %v248, %v246
          %v252 = vsel %vm250, %v249, %v247
          %v253 = vrot.slane %v248, 1
          %v254 = vrot.slane %v249, 1
          %vm255 = vcmp.ge.f32.partialorder %v253, %v251
          %v256 = vsel %vm255, %v253, %v251
          %v257 = vsel %vm255, %v254, %v252
          %v258 = vrot.slane %v253, 1
          %v259 = vrot.slane %v254, 1
          %vm260 = vcmp.ge.f32.partialorder %v258, %v256
          %v261 = vsel %vm260, %v258, %v256
          %v262 = vsel %vm260, %v259, %v257
          %v263 = vrot.slane %v258, 1
          %v264 = vrot.slane %v259, 1
          %vm265 = vcmp.ge.f32.partialorder %v263, %v261
          %v266 = vsel %vm265, %v263, %v261
          %v267 = vsel %vm265, %v264, %v262
          %v268 = vrot.slane %v263, 1
          %v269 = vrot.slane %v264, 1
          %vm270 = vcmp.ge.f32.partialorder %v268, %v266
          %v271 = vsel %vm270, %v268, %v266
          %v272 = vsel %vm270, %v269, %v267
          %s273 = ssub.s32 128, %s182
          %274 = vrot.lane.b32.xlu0 %v272, %s273
          %v275 = vpop.permute.xlu0 %274
          %s276 = vtos %v275
          %v277 = vstv %s182
          %v278 = vlaneseq
          %v279 = vand.u32 %v278, 127
          %vm280 = vcmp.eq.s32.totalorder %v279, %v277
          %v281 = vstv %s276
          %v282 = vld [vmem:[%s162] ss:$0 sm:$0xff]
          %v283 = vsel %vm280, %v281, %v282
          %284 = vst [vmem:[%s162] sm:$0x1] %v283
          %s285 = scalar_lea.vmem %s131, %s182 [#allocation1]
          %s286 = scalar_lea.vmem %s131, %s276 [#allocation1]
          %v287 = vld [vmem:[%s285] ss:$0 sm:$0xff]
          %v288 = vld [vmem:[%s286] ss:$0 sm:$0xff]
          %289 = vst [vmem:[%s286] sm:$0x1] %v287
          %290 = vst [vmem:[%s285] sm:$0x1] %v288
          %s291 = scalar_lea.vmem [#allocation7], %s182
          %s292 = scalar_lea.vmem [#allocation7], %s276
          %v293 = vld [vmem:[%s291] ss:$0 sm:$0xff]
          %v294 = vld [vmem:[%s292] ss:$0 sm:$0xff]
          %295 = vst [vmem:[%s292] sm:$0x1] %v293
          %296 = vst [vmem:[%s291] sm:$0x1] %v294
          %vm297 = vcmp.ne.f32.partialorder %v288, 0.0
          %vm298 = vmand %vm280, %vm297
          %v299 = vsel %vm298, %v288, 1.0
          %v300 = vlaneseq
          %v301 = vand.u32 %v300, 127
          %v302 = vstv %s182
          %vm303 = vcmp.gt.s32.totalorder %v301, %v302
          %v304 = vsel %vm303, %v288, 0.0
          %v305 = vlaneseq
          %v306 = vshrl.u32 %v305, 7
          %v307 = vmov %v306
          %v308 = vld [vmem:[%s131] sm:$0xff]
          %v310 = vstv %s182
          %vm311 = vcmp.gt.s32.totalorder %v307, %v310
          %v312 = vsel %vm311, %v299, 1.0
          %v313 = vrcp.pop %v312
          %v314 = vmul.f32 %v308, %v313
          %vm315 = vmand %vm311, %vm280
          %v316 = vsel %vm315, %v314, 0.0
          %317 = vadd.xlane.f32.xlu0 %v316
          %v318 = vpop.xlane.xlu0 %317
          %v319 = vmul.f32 %v318, %v304
          %v320 = vsub.f32 %v314, %v319
          %321 = vst [vmem:[%s131] sm:$0xff] %v320
          %s322 = scalar_lea.vmem %s131, 8 [#allocation1]
          %v323 = vld [vmem:[%s322] sm:$0xff]
          %v324 = vadd.s32 %v307, 8
          %v325 = vstv %s182
          %vm326 = vcmp.gt.s32.totalorder %v324, %v325
          %v327 = vsel %vm326, %v299, 1.0
          %v328 = vrcp.pop %v327
          %v329 = vmul.f32 %v323, %v328
          %vm330 = vmand %vm326, %vm280
          %v331 = vsel %vm330, %v329, 0.0
          %332 = vadd.xlane.f32.xlu0 %v331
          %v333 = vpop.xlane.xlu0 %332
          %v334 = vmul.f32 %v333, %v304
          %v335 = vsub.f32 %v329, %v334
          %336 = vst [vmem:[%s322] sm:$0xff] %v335
          %s337 = scalar_lea.vmem %s131, 16 [#allocation1]
          %v338 = vld [vmem:[%s337] sm:$0xff]
          %v339 = vadd.s32 %v307, 16
          %v340 = vstv %s182
          %vm341 = vcmp.gt.s32.totalorder %v339, %v340
          %v342 = vsel %vm341, %v299, 1.0
          %v343 = vrcp.pop %v342
          %v344 = vmul.f32 %v338, %v343
          %vm345 = vmand %vm341, %vm280
          %v346 = vsel %vm345, %v344, 0.0
          %347 = vadd.xlane.f32.xlu0 %v346
          %v348 = vpop.xlane.xlu0 %347
          %v349 = vmul.f32 %v348, %v304
          %v350 = vsub.f32 %v344, %v349
          %351 = vst [vmem:[%s337] sm:$0xff] %v350
          %s352 = scalar_lea.vmem %s131, 24 [#allocation1]
          %v353 = vld [vmem:[%s352] sm:$0xff]
          %v354 = vadd.s32 %v307, 24
          %v355 = vstv %s182
          %vm356 = vcmp.gt.s32.totalorder %v354, %v355
          %v357 = vsel %vm356, %v299, 1.0
          %v358 = vrcp.pop %v357
          %v359 = vmul.f32 %v353, %v358
          %vm360 = vmand %vm356, %vm280
          %v361 = vsel %vm360, %v359, 0.0
          %362 = vadd.xlane.f32.xlu0 %v361
          %v363 = vpop.xlane.xlu0 %362
          %v364 = vmul.f32 %v363, %v304
          %v365 = vsub.f32 %v359, %v364
          %366 = vst [vmem:[%s352] sm:$0xff] %v365
        $region51: #{custom-call.22} parent=38 // loop_footer
          %s186 = sadd.s32 1, %s182
        $region52: #{custom-call.22} parent=38 // loop_footer_branch
          %181 = sbr.rel target = $region48
        $region53: #{custom-call.22} parent=38 // loop_exit
          _
        %v367 = vld [vmem:[#allocation7] sm:$0xff]
        %s368 = scalar_lea.vmem [#allocation7], 8
        %v369 = vld [vmem:[%s368] sm:$0xff]
        %s370 = scalar_lea.vmem [#allocation7], 16
        %v371 = vld [vmem:[%s370] sm:$0xff]
        %s372 = scalar_lea.vmem [#allocation7], 24
        %v373 = vld [vmem:[%s372] sm:$0xff]
        %s374 = scalar_lea.vmem [#allocation7], 32
        %s375 = scalar_lea.vmem [#allocation7], 40
        %s376 = scalar_lea.vmem [#allocation7], 48
        %s377 = scalar_lea.vmem [#allocation7], 56
        %s378 = scalar_lea.vmem [#allocation7], 64
        %s379 = scalar_lea.vmem [#allocation7], 72
        %s380 = scalar_lea.vmem [#allocation7], 80
        %s381 = scalar_lea.vmem [#allocation7], 88
        %s382 = scalar_lea.vmem [#allocation7], 96
        %s383 = scalar_lea.vmem [#allocation7], 104
        %s384 = scalar_lea.vmem [#allocation7], 112
        %s385 = scalar_lea.vmem [#allocation7], 120
        %386 = vxpose.xlu0.b32.start [1/16] %v367, 128
        %387 = vxpose.xlu0.b32.cont [2/16] %v369, 128
        %388 = vxpose.xlu0.b32.cont [3/16] %v371, 128
        %389 = vxpose.xlu0.b32.cont [4/16] %v373, 128
        %390 = vxpose.xlu0.b32.cont [5/16] 0, 128
        %391 = vxpose.xlu0.b32.cont [6/16] 0, 128
        %392 = vxpose.xlu0.b32.cont [7/16] 0, 128
        %393 = vxpose.xlu0.b32.cont [8/16] 0, 128
        %394 = vxpose.xlu0.b32.cont [9/16] 0, 128
        %395 = vxpose.xlu0.b32.cont [10/16] 0, 128
        %396 = vxpose.xlu0.b32.cont [11/16] 0, 128
        %397 = vxpose.xlu0.b32.cont [12/16] 0, 128
        %398 = vxpose.xlu0.b32.cont [13/16] 0, 128
        %399 = vxpose.xlu0.b32.cont [14/16] 0, 128
        %400 = vxpose.xlu0.b32.cont [15/16] 0, 128
        %401 = vxpose.xlu0.b32.end [16/16] 0, 128
        %v402 = vpop.trf.xlu0
        %v403 = vpop.trf.xlu0
        %v404 = vpop.trf.xlu0
        %v405 = vpop.trf.xlu0
        %v406 = vpop.trf.xlu0
        %v407 = vpop.trf.xlu0
        %v408 = vpop.trf.xlu0
        %v409 = vpop.trf.xlu0
        %v410 = vpop.trf.xlu0
        %v411 = vpop.trf.xlu0
        %v412 = vpop.trf.xlu0
        %v413 = vpop.trf.xlu0
        %v414 = vpop.trf.xlu0
        %v415 = vpop.trf.xlu0
        %v416 = vpop.trf.xlu0
        %v417 = vpop.trf.xlu0
        %418 = vst [vmem:[%s164] sm:$0x1] %v402
        %s420 = sshll.u32 1, 2
        %s421 = ssub.s32 %s420, 1
        %v423 = vld [vmem:[#allocation2] sm:%s421]
        %s424 = sshll.u32 1, 2
        %s425 = ssub.s32 %s424, 1
        %426 = vst [vmem:[%s138] sm:%s425] %v423
        %s428 = sshll.u32 1, 2
        %s429 = ssub.s32 %s428, 1
        %v431 = vld [vmem:[#allocation5] sm:%s429]
        %s432 = sshll.u32 1, 2
        %s433 = ssub.s32 %s432, 1
        %434 = vst [vmem:[%s144] sm:%s433] %v431
        %s435 = sand.u32 %s14, 1
        %s436 = sand.u32 %s14, 1
        %s437 = smul.addr %s436, 32
        %s438 = scalar_lea.vmem [#allocation1], %s437
        %s439 = sand.u32 %s24, 1
        %s440 = scalar_lea.sflag [#allocation4], %s439
        %s441 = sand.u32 %s24, 1
        %s442 = smul.addr %s441, 2
        %s443 = scalar_lea.vmem [#allocation3], %s442
        %s444 = sand.u32 %s52, 1
        %s445 = sand.u32 %s52, 1
        %s446 = smul.addr %s445, 2
        %s447 = scalar_lea.vmem [#allocation6], %s446
        %s448 = smul.addr %s14, 32
        %s449 = scalar_lea.vmem %s1, %s448
        // Predicated region
        $region54: #{custom-call.22} parent=38 // pred_check
          _
        $region55: #{custom-call.22} parent=38 // pred_check_branch
          %451 = sbr.rel (0) target = $region57
        $region56: #{custom-call.22} parent=38 // pred_region
          // Predicated region
          $region58: #{custom-call.22} parent=56 // pred_check
            _
          $region59: #{custom-call.22} parent=56 // pred_check_branch
            %453 = sbr.rel (0) target = $region61
          $region60: #{custom-call.22} parent=56 // pred_region
            loop: start=0, step=1, limit=1
            $region62: #{custom-call.22} parent=60 // loop_pre_header
              _
            $region63: #{custom-call.22} parent=60 // loop_header
              %s455 = sphi 0, %s459
              %p456 = scmp.ge.s32.totalorder %s455, 1
              %s460 = sphi %s438, %s438
              %s461 = sphi %s449, %s449
            $region64: #{custom-call.22} parent=60 // loop_header_branch
              %458 = sbr.rel (%p456) target = $region68
            $region65: #{custom-call.22} parent=60 // loop_body
              %v462 = vld [vmem:[%s460] sm:$0xff]
              %463 = vst [vmem:[%s461] sm:$0xff] %v462
              %v464 = vld [vmem:[%s460 + $0x8] sm:$0xff]
              %465 = vst [vmem:[%s461 + $0x8] sm:$0xff] %v464
              %v466 = vld [vmem:[%s460 + $0x10] sm:$0xff]
              %467 = vst [vmem:[%s461 + $0x10] sm:$0xff] %v466
              %v468 = vld [vmem:[%s460 + $0x18] sm:$0xff]
              %469 = vst [vmem:[%s461 + $0x18] sm:$0xff] %v468
            $region66: #{custom-call.22} parent=60 // loop_footer
              %s459 = sadd.s32 1, %s455
            $region67: #{custom-call.22} parent=60 // loop_footer_branch
              %454 = sbr.rel target = $region63
            $region68: #{custom-call.22} parent=60 // loop_exit
              _
          $region61: #{custom-call.22} parent=56 // pred_fallthru
            _
          // Predicated region
          $region69: #{custom-call.22} parent=56 // pred_check
            _
          $region70: #{custom-call.22} parent=56 // pred_check_branch
            %471 = sbr.rel target = $region72
          $region71: #{custom-call.22} parent=56 // pred_region
            _
          $region72: #{custom-call.22} parent=56 // pred_fallthru
            _
        $region57: #{custom-call.22} parent=38 // pred_fallthru
          _
        %472 = vnop
        // Predicated region
        $region73: #{custom-call.22} parent=38 // pred_check
          %p473 = pneg %p34
        $region74: #{custom-call.22} parent=38 // pred_check_branch
          %475 = sbr.rel (%p473) target = $region76
        $region75: #{custom-call.22} parent=38 // pred_region
          %s476 = sshrl.u32 %s14, 3
          %s478 = ssub.s32 32, 32
          %479 = vsyncadd %s440, %s478
          %s480 = smul.addr %s476, 32
          %s481 = scalar_lea.hbm %s2, %s480
          %s483 = sshll.u32 %s443, 4
          %s484 = int_to_ptr.vmem [resolvable:$true] %s483
          %486 = dma.vmem_to_hbm [thread:$0]  %s484, 32, %s481, %s440
        $region76: #{custom-call.22} parent=38 // pred_fallthru
          _
        // Predicated region
        $region77: #{custom-call.22} parent=38 // pred_check
          %p487 = pneg %p62
        $region78: #{custom-call.22} parent=38 // pred_check_branch
          %489 = sbr.rel (%p487) target = $region80
        $region79: #{custom-call.22} parent=38 // pred_region
          %s490 = sshrl.u32 %s14, 3
          %s491 = smul.addr %s490, 2
          %s492 = scalar_lea.vmem %s3, %s491
          // Predicated region
          $region81: #{custom-call.22} parent=79 // pred_check
            _
          $region82: #{custom-call.22} parent=79 // pred_check_branch
            %494 = sbr.rel (0) target = $region84
          $region83: #{custom-call.22} parent=79 // pred_region
            // Predicated region
            $region85: #{custom-call.22} parent=83 // pred_check
              _
            $region86: #{custom-call.22} parent=83 // pred_check_branch
              %496 = sbr.rel target = $region88
            $region87: #{custom-call.22} parent=83 // pred_region
              // Predicated region
              $region100: #{custom-call.22} parent=87 // pred_check
                _
              $region101: #{custom-call.22} parent=87 // pred_check_branch
                %512 = sbr.rel (0) target = $region103
              $region102: #{custom-call.22} parent=87 // pred_region
                %s514 = ssub.s32 4, 1
                loop: start=0, step=1, limit=1
                $region104: #{custom-call.22} parent=102 // loop_pre_header
                  _
                $region105: #{custom-call.22} parent=102 // loop_header
                  %s516 = sphi 0, %s520
                  %p517 = scmp.ge.s32.totalorder %s516, 1
                  %s521 = sphi %s447, %s447
                  %s522 = sphi %s492, %s492
                $region106: #{custom-call.22} parent=102 // loop_header_branch
                  %519 = sbr.rel (%p517) target = $region110
                $region107: #{custom-call.22} parent=102 // loop_body
                  %v523 = vld [vmem:[%s521] sm:%s514]
                  %524 = vst [vmem:[%s522] sm:%s514] %v523
                $region108: #{custom-call.22} parent=102 // loop_footer
                  %s520 = sadd.s32 1, %s516
                $region109: #{custom-call.22} parent=102 // loop_footer_branch
                  %515 = sbr.rel target = $region105
                $region110: #{custom-call.22} parent=102 // loop_exit
                  _
              $region103: #{custom-call.22} parent=87 // pred_fallthru
                _
            $region88: #{custom-call.22} parent=83 // pred_fallthru
              _
            // Predicated region
            $region89: #{custom-call.22} parent=83 // pred_check
              _
            $region90: #{custom-call.22} parent=83 // pred_check_branch
              %498 = sbr.rel (0) target = $region92
            $region91: #{custom-call.22} parent=83 // pred_region
              %s500 = ssub.s32 4, 1
              loop: start=0, step=1, limit=1
              $region93: #{custom-call.22} parent=91 // loop_pre_header
                _
              $region94: #{custom-call.22} parent=91 // loop_header
                %s502 = sphi 0, %s506
                %p503 = scmp.ge.s32.totalorder %s502, 1
                %s507 = sphi %s447, %s447
                %s508 = sphi %s492, %s492
              $region95: #{custom-call.22} parent=91 // loop_header_branch
                %505 = sbr.rel (%p503) target = $region99
              $region96: #{custom-call.22} parent=91 // loop_body
                %v509 = vld [vmem:[%s507] sm:%s500]
                %510 = vst [vmem:[%s508] sm:%s500] %v509
              $region97: #{custom-call.22} parent=91 // loop_footer
                %s506 = sadd.s32 1, %s502
              $region98: #{custom-call.22} parent=91 // loop_footer_branch
                %501 = sbr.rel target = $region94
              $region99: #{custom-call.22} parent=91 // loop_exit
                _
            $region92: #{custom-call.22} parent=83 // pred_fallthru
              _
          $region84: #{custom-call.22} parent=79 // pred_fallthru
            _
          %525 = vnop
        $region80: #{custom-call.22} parent=38 // pred_fallthru
          _
      $region39: #{custom-call.22} parent=5 // pred_fallthru
        _
      %p526 = scmp.le.s32.totalorder 2, %s9
      // Predicated region
      $region111: #{custom-call.22} parent=5 // pred_check
        %p527 = pneg %p526
      $region112: #{custom-call.22} parent=5 // pred_check_branch
        %529 = sbr.rel (%p527) target = $region114
      $region113: #{custom-call.22} parent=5 // pred_region
        %s530 = ssub.s32 %s9, 2
        %s531 = sand.u32 %s15, 1
        %s532 = sand.u32 %s15, 1
        %s533 = smul.addr %s532, 32
        %s534 = scalar_lea.vmem [#allocation1], %s533
        // Predicated region
        $region115: #{custom-call.22} parent=113 // pred_check
          %p535 = pneg %p40
        $region116: #{custom-call.22} parent=113 // pred_check_branch
          %537 = sbr.rel (%p535) target = $region118
        $region117: #{custom-call.22} parent=113 // pred_region
          %s538 = sand.u32 %s25, 1
          %s539 = scalar_lea.sflag [#allocation4], %s538
          %s540 = sand.u32 %s25, 1
          %s541 = smul.addr %s540, 2
          %s542 = scalar_lea.vmem [#allocation3], %s541
          %543 = dma.done %s539, 32
        $region118: #{custom-call.22} parent=113 // pred_fallthru
          _
        // Predicated region
        $region119: #{custom-call.22} parent=113 // pred_check
          %p544 = pneg %p68
        $region120: #{custom-call.22} parent=113 // pred_check_branch
          %546 = sbr.rel (%p544) target = $region122
        $region121: #{custom-call.22} parent=113 // pred_region
          %s547 = sand.u32 %s53, 1
          %s548 = sand.u32 %s53, 1
          %s549 = smul.addr %s548, 2
          %s550 = scalar_lea.vmem [#allocation6], %s549
        $region122: #{custom-call.22} parent=113 // pred_fallthru
          _
      $region114: #{custom-call.22} parent=5 // pred_fallthru
        _
    $region6: #{custom-call.22} parent=1 // loop_footer
      %s13 = sadd.s32 1, %s9
    $region7: #{custom-call.22} parent=1 // loop_footer_branch
      %8 = sbr.rel target = $region3
    $region8: #{custom-call.22} parent=1 // loop_exit
      _
    %551 = vsyncpa [#allocation4], 1
    %s552 = scalar_lea.sflag [#allocation4], 1
    %553 = vsyncpa %s552, 1

// kernel: custom-call.24
$region0: #{custom-call.24}
  %s0 = inlined_call_operand.vmem [shape: f32[2,1,32,32], index: 0, kind: input, shape index: {}]
  %s1 = inlined_call_operand.vmem [shape: f32[2,1,32,32], index: 1, kind: output, shape index: {}]
  $region1: #{custom-call.24} parent=0
    #allocation0 [shape = 'u8[32768]{0}', space=vmem, size = 0x8000, scoped, tag = 'operand span for operand 0']
    #allocation1 [shape = 'u8[32768]{0}', space=vmem, size = 0x8000, scoped, tag = 'operand span for operand 1']
    loop: start=0, step=1, limit=4
    $region2: #{custom-call.24} parent=1 // loop_pre_header
      _
    $region3: #{custom-call.24} parent=1 // loop_header
      %s3 = sphi 0, %s7
      %p4 = scmp.ge.s32.totalorder %s3, 4
      %s10 = sphi 0, %s36
      %s11 = sphi 0, %s32
      %s12 = sphi 0, %s28
      %s13 = sphi 0, %s24
      %s14 = sphi 0, %s10
      %s15 = sphi 0, %s11
      %s16 = sphi 0, %s12
      %s17 = sphi 0, %s13
      %s18 = sphi 0, %s14
      %s19 = sphi 0, %s15
      %s20 = sphi 0, %s16
      %s21 = sphi 0, %s17
    $region4: #{custom-call.24} parent=1 // loop_header_branch
      %6 = sbr.rel (%p4) target = $region8
    $region5: #{custom-call.24} parent=1 // loop_body
      %s8 = ssub.s32 %s3, 1
      %s9 = ssub.s32 %s3, 2
      %s22 = sadd.s32 1, %s13
      %p23 = scmp.ge.s32.totalorder %s22, 1
      %s24 = scalar_select %p23, 0, %s22
      %s25 = sadd.s32 1, %s12
      %s26 = scalar_select %p23, %s25, %s12
      %p27 = scmp.ge.s32.totalorder %s26, 1
      %s28 = scalar_select %p27, 0, %s26
      %s29 = sadd.s32 1, %s11
      %s30 = scalar_select %p27, %s29, %s11
      %p31 = scmp.ge.s32.totalorder %s30, 1
      %s32 = scalar_select %p31, 0, %s30
      %s33 = sadd.s32 1, %s10
      %s34 = scalar_select %p31, %s33, %s10
      %p35 = scmp.ge.s32.totalorder %s34, 2
      %s36 = scalar_select %p35, 0, %s34
      %p37 = scmp.le.s32.totalorder 1, %s3
      %p38 = scmp.lt.s32.totalorder %s3, 3
      %p39 = pnand %p37, %p38
      %p40 = pneg %p39
      // Predicated region
      $region9: #{custom-call.24} parent=5 // pred_check
        _
      $region10: #{custom-call.24} parent=5 // pred_check_branch
        %42 = sbr.rel (%p39) target = $region12
      $region11: #{custom-call.24} parent=5 // pred_region
        %s43 = ssub.s32 %s3, 1
      $region12: #{custom-call.24} parent=5 // pred_fallthru
        _
      %p44 = scmp.lt.s32.totalorder %s3, 2
      // Predicated region
      $region13: #{custom-call.24} parent=5 // pred_check
        %p45 = pneg %p44
      $region14: #{custom-call.24} parent=5 // pred_check_branch
        %47 = sbr.rel (%p45) target = $region16
      $region15: #{custom-call.24} parent=5 // pred_region
        %s48 = sand.u32 %s3, 1
        %s49 = sand.u32 %s3, 1
        %s50 = smul.addr %s49, 32
        %s51 = scalar_lea.vmem [#allocation0], %s50
        %s52 = sadd.s32 %s13, %s12
        %s53 = smul.addr %s11, 4
        %s54 = sadd.s32 %s52, %s53
        %s55 = smul.addr %s10, 4
        %s56 = sadd.s32 %s54, %s55
        %s57 = smul.addr %s56, 8
        %s58 = scalar_lea.vmem %s0, %s57
        // Predicated region
        $region17: #{custom-call.24} parent=15 // pred_check
          _
        $region18: #{custom-call.24} parent=15 // pred_check_branch
          %60 = sbr.rel (0) target = $region20
        $region19: #{custom-call.24} parent=15 // pred_region
          // Predicated region
          $region21: #{custom-call.24} parent=19 // pred_check
            _
          $region22: #{custom-call.24} parent=19 // pred_check_branch
            %62 = sbr.rel (0) target = $region24
          $region23: #{custom-call.24} parent=19 // pred_region
            // Predicated region
            $region36: #{custom-call.24} parent=23 // pred_check
              _
            $region37: #{custom-call.24} parent=23 // pred_check_branch
              %84 = sbr.rel (0) target = $region39
            $region38: #{custom-call.24} parent=23 // pred_region
              loop: start=0, step=1, limit=1
              $region40: #{custom-call.24} parent=38 // loop_pre_header
                _
              $region41: #{custom-call.24} parent=38 // loop_header
                %s86 = sphi 0, %s90
                %p87 = scmp.ge.s32.totalorder %s86, 1
                %s91 = sphi %s58, %s58
                %s92 = sphi %s51, %s51
              $region42: #{custom-call.24} parent=38 // loop_header_branch
                %89 = sbr.rel (%p87) target = $region46
              $region43: #{custom-call.24} parent=38 // loop_body
                %v93 = vld [vmem:[%s91] sm:$0xff]
                %94 = vst [vmem:[%s92] sm:$0xff] %v93
                %v95 = vld [vmem:[%s91 + $0x8] sm:$0xff]
                %96 = vst [vmem:[%s92 + $0x8] sm:$0xff] %v95
                %v97 = vld [vmem:[%s91 + $0x10] sm:$0xff]
                %98 = vst [vmem:[%s92 + $0x10] sm:$0xff] %v97
                %v99 = vld [vmem:[%s91 + $0x18] sm:$0xff]
                %100 = vst [vmem:[%s92 + $0x18] sm:$0xff] %v99
              $region44: #{custom-call.24} parent=38 // loop_footer
                %s90 = sadd.s32 1, %s86
              $region45: #{custom-call.24} parent=38 // loop_footer_branch
                %85 = sbr.rel target = $region41
              $region46: #{custom-call.24} parent=38 // loop_exit
                _
            $region39: #{custom-call.24} parent=23 // pred_fallthru
              _
            // Predicated region
            $region47: #{custom-call.24} parent=23 // pred_check
              _
            $region48: #{custom-call.24} parent=23 // pred_check_branch
              %102 = sbr.rel target = $region50
            $region49: #{custom-call.24} parent=23 // pred_region
              _
            $region50: #{custom-call.24} parent=23 // pred_fallthru
              _
          $region24: #{custom-call.24} parent=19 // pred_fallthru
            _
          // Predicated region
          $region25: #{custom-call.24} parent=19 // pred_check
            _
          $region26: #{custom-call.24} parent=19 // pred_check_branch
            %64 = sbr.rel target = $region28
          $region27: #{custom-call.24} parent=19 // pred_region
            %s66 = ssub.s32 256, 1
            loop: start=0, step=1, limit=1
            $region29: #{custom-call.24} parent=27 // loop_pre_header
              _
            $region30: #{custom-call.24} parent=27 // loop_header
              %s68 = sphi 0, %s72
              %p69 = scmp.ge.s32.totalorder %s68, 1
              %s73 = sphi %s58, %s58
              %s74 = sphi %s51, %s51
            $region31: #{custom-call.24} parent=27 // loop_header_branch
              %71 = sbr.rel (%p69) target = $region35
            $region32: #{custom-call.24} parent=27 // loop_body
              %v75 = vld [vmem:[%s73] sm:%s66]
              %76 = vst [vmem:[%s74] sm:%s66] %v75
              %v77 = vld [vmem:[%s73 + $0x8] sm:%s66]
              %78 = vst [vmem:[%s74 + $0x8] sm:%s66] %v77
              %v79 = vld [vmem:[%s73 + $0x10] sm:%s66]
              %80 = vst [vmem:[%s74 + $0x10] sm:%s66] %v79
              %v81 = vld [vmem:[%s73 + $0x18] sm:%s66]
              %82 = vst [vmem:[%s74 + $0x18] sm:%s66] %v81
            $region33: #{custom-call.24} parent=27 // loop_footer
              %s72 = sadd.s32 1, %s68
            $region34: #{custom-call.24} parent=27 // loop_footer_branch
              %67 = sbr.rel target = $region30
            $region35: #{custom-call.24} parent=27 // loop_exit
              _
          $region28: #{custom-call.24} parent=19 // pred_fallthru
            _
        $region20: #{custom-call.24} parent=15 // pred_fallthru
          _
        %103 = vnop
      $region16: #{custom-call.24} parent=5 // pred_fallthru
        _
      %p104 = scmp.le.s32.totalorder 1, %s3
      %p105 = scmp.lt.s32.totalorder %s3, 3
      %p106 = pnand %p104, %p105
      %p107 = pneg %p106
      // Predicated region
      $region51: #{custom-call.24} parent=5 // pred_check
        _
      $region52: #{custom-call.24} parent=5 // pred_check_branch
        %109 = sbr.rel (%p106) target = $region54
      $region53: #{custom-call.24} parent=5 // pred_region
        #allocation2 [shape = 'f32[32,32]{1,0}', space=vmem, size = 0x4000, scoped, tag = 'rescaled input a']
        %s110 = ssub.s32 %s3, 1
        %s111 = sand.u32 %s8, 1
        %s112 = sand.u32 %s8, 1
        %s113 = smul.addr %s112, 32
        %s114 = scalar_lea.vmem [#allocation0], %s113
        %s115 = sand.u32 %s8, 1
        %s116 = sand.u32 %s8, 1
        %s117 = smul.addr %s116, 32
        %s118 = scalar_lea.vmem [#allocation0], %s117
        %s119 = sand.u32 %s8, 1
        %s120 = sand.u32 %s8, 1
        %s121 = smul.addr %s120, 32
        %s122 = scalar_lea.vmem [#allocation1], %s121
        %v123 = vlaneseq
        %v124 = vand.u32 %v123, 127
        %vm125 = vcmp.lt.s32.totalorder %v124, 32
        %v126 = vlaneseq
        %v127 = vshrl.u32 %v126, 7
        %vm129 = vcmp.eq.s32.totalorder %v127, %v124
        %v130 = vld [vmem:[%s114] sm:$0xff]
        %v131 = vsel %vm129, %v130, 0.0
        %132 = vadd.xlane.f32.xlu0 %v131
        %v133 = vpop.xlane.xlu0 %132
        %vm134 = vcmp.ge.s32.totalorder %v127, %v124
        %vm135 = vmand %vm134, %vm125
        %v136 = vsel %vm135, %v130, 0.0
        %v137 = vrcp.pop %v133
        %v138 = vmul.f32 %v136, %v137
        %139 = vst [vmem:[#allocation2] sm:$0xff] %v138
        %s140 = scalar_lea.vmem %s114, 8 [#allocation0]
        %s141 = scalar_lea.vmem [#allocation2], 8
        %v142 = vlaneseq
        %v143 = vshrl.u32 %v142, 7
        %v144 = vadd.s32 %v143, 8
        %vm145 = vcmp.eq.s32.totalorder %v144, %v124
        %v146 = vld [vmem:[%s140] sm:$0xff]
        %v147 = vsel %vm145, %v146, 0.0
        %148 = vadd.xlane.f32.xlu0 %v147
        %v149 = vpop.xlane.xlu0 %148
        %vm150 = vcmp.ge.s32.totalorder %v144, %v124
        %vm151 = vmand %vm150, %vm125
        %v152 = vsel %vm151, %v146, 0.0
        %v153 = vrcp.pop %v149
        %v154 = vmul.f32 %v152, %v153
        %155 = vst [vmem:[%s141] sm:$0xff] %v154
        %s156 = scalar_lea.vmem %s114, 16 [#allocation0]
        %s157 = scalar_lea.vmem [#allocation2], 16
        %v158 = vlaneseq
        %v159 = vshrl.u32 %v158, 7
        %v160 = vadd.s32 %v159, 16
        %vm161 = vcmp.eq.s32.totalorder %v160, %v124
        %v162 = vld [vmem:[%s156] sm:$0xff]
        %v163 = vsel %vm161, %v162, 0.0
        %164 = vadd.xlane.f32.xlu0 %v163
        %v165 = vpop.xlane.xlu0 %164
        %vm166 = vcmp.ge.s32.totalorder %v160, %v124
        %vm167 = vmand %vm166, %vm125
        %v168 = vsel %vm167, %v162, 0.0
        %v169 = vrcp.pop %v165
        %v170 = vmul.f32 %v168, %v169
        %171 = vst [vmem:[%s157] sm:$0xff] %v170
        %s172 = scalar_lea.vmem %s114, 24 [#allocation0]
        %s173 = scalar_lea.vmem [#allocation2], 24
        %v174 = vlaneseq
        %v175 = vshrl.u32 %v174, 7
        %v176 = vadd.s32 %v175, 24
        %vm177 = vcmp.eq.s32.totalorder %v176, %v124
        %v178 = vld [vmem:[%s172] sm:$0xff]
        %v179 = vsel %vm177, %v178, 0.0
        %180 = vadd.xlane.f32.xlu0 %v179
        %v181 = vpop.xlane.xlu0 %180
        %vm182 = vcmp.ge.s32.totalorder %v176, %v124
        %vm183 = vmand %vm182, %vm125
        %v184 = vsel %vm183, %v178, 0.0
        %v185 = vrcp.pop %v181
        %v186 = vmul.f32 %v184, %v185
        %187 = vst [vmem:[%s173] sm:$0xff] %v186
        %v188 = vlaneseq
        %v189 = vand.u32 %v188, 127
        %v190 = vlaneseq
        %v191 = vshrl.u32 %v190, 7
        %vm193 = vcmp.eq.s32.totalorder %v189, %v191
        %v194 = vlaneseq
        %v195 = vand.u32 %v194, 127
        %vm196 = vcmp.eq.s32.totalorder %v195, 0
        %v197 = vsel %vm196, 1.0, -1.0
        %v198 = vsel %vm193, %v197, 0.0
        %v199 = vlaneseq
        %v200 = vand.u32 %v199, 127
        %v201 = vlaneseq
        %v202 = vshrl.u32 %v201, 7
        %v203 = vadd.s32 %v202, 8
        %vm204 = vcmp.eq.s32.totalorder %v200, %v203
        %v205 = vsel %vm204, -1.0, 0.0
        %v206 = vlaneseq
        %v207 = vand.u32 %v206, 127
        %v208 = vlaneseq
        %v209 = vshrl.u32 %v208, 7
        %v210 = vadd.s32 %v209, 16
        %vm211 = vcmp.eq.s32.totalorder %v207, %v210
        %v212 = vsel %vm211, -1.0, 0.0
        %v213 = vlaneseq
        %v214 = vand.u32 %v213, 127
        %v215 = vlaneseq
        %v216 = vshrl.u32 %v215, 7
        %v217 = vadd.s32 %v216, 24
        %vm218 = vcmp.eq.s32.totalorder %v214, %v217
        %v219 = vsel %vm218, -1.0, 0.0
        %s220 = scalar_lea.vmem [#allocation2], 1
        %v221 = vld [vmem:[%s220] ss:$0 sm:$0xff]
        %v222 = vxor.u32 %v221, 2147483648
        %v223 = vlaneseq
        %v224 = vand.u32 %v223, 127
        %vm225 = vcmp.eq.s32.totalorder %v224, 1
        %v226 = vmul.f32 %v222, %v198
        %227 = vadd.xlane.f32.xlu0 %v226
        %v228 = vpop.xlane.xlu0 %227
        %v229 = vsel %vm225, %v228, %v198
        %s230 = scalar_lea.vmem [#allocation2], 2
        %v231 = vld [vmem:[%s230] ss:$0 sm:$0xff]
        %v232 = vxor.u32 %v231, 2147483648
        %v233 = vlaneseq
        %v234 = vand.u32 %v233, 127
        %vm235 = vcmp.eq.s32.totalorder %v234, 2
        %v236 = vmul.f32 %v232, %v229
        %237 = vadd.xlane.f32.xlu0 %v236
        %v238 = vpop.xlane.xlu0 %237
        %v239 = vsel %vm235, %v238, %v229
        %s240 = scalar_lea.vmem [#allocation2], 3
        %v241 = vld [vmem:[%s240] ss:$0 sm:$0xff]
        %v242 = vxor.u32 %v241, 2147483648
        %v243 = vlaneseq
        %v244 = vand.u32 %v243, 127
        %vm245 = vcmp.eq.s32.totalorder %v244, 3
        %v246 = vmul.f32 %v242, %v239
        %247 = vadd.xlane.f32.xlu0 %v246
        %v248 = vpop.xlane.xlu0 %247
        %v249 = vsel %vm245, %v248, %v239
        %s250 = scalar_lea.vmem [#allocation2], 4
        %v251 = vld [vmem:[%s250] ss:$0 sm:$0xff]
        %v252 = vxor.u32 %v251, 2147483648
        %v253 = vlaneseq
        %v254 = vand.u32 %v253, 127
        %vm255 = vcmp.eq.s32.totalorder %v254, 4
        %v256 = vmul.f32 %v252, %v249
        %257 = vadd.xlane.f32.xlu0 %v256
        %v258 = vpop.xlane.xlu0 %257
        %v259 = vsel %vm255, %v258, %v249
        %s260 = scalar_lea.vmem [#allocation2], 5
        %v261 = vld [vmem:[%s260] ss:$0 sm:$0xff]
        %v262 = vxor.u32 %v261, 2147483648
        %v263 = vlaneseq
        %v264 = vand.u32 %v263, 127
        %vm265 = vcmp.eq.s32.totalorder %v264, 5
        %v266 = vmul.f32 %v262, %v259
        %267 = vadd.xlane.f32.xlu0 %v266
        %v268 = vpop.xlane.xlu0 %267
        %v269 = vsel %vm265, %v268, %v259
        %s270 = scalar_lea.vmem [#allocation2], 6
        %v271 = vld [vmem:[%s270] ss:$0 sm:$0xff]
        %v272 = vxor.u32 %v271, 2147483648
        %v273 = vlaneseq
        %v274 = vand.u32 %v273, 127
        %vm275 = vcmp.eq.s32.totalorder %v274, 6
        %v276 = vmul.f32 %v272, %v269
        %277 = vadd.xlane.f32.xlu0 %v276
        %v278 = vpop.xlane.xlu0 %277
        %v279 = vsel %vm275, %v278, %v269
        %s280 = scalar_lea.vmem [#allocation2], 7
        %v281 = vld [vmem:[%s280] ss:$0 sm:$0xff]
        %v282 = vxor.u32 %v281, 2147483648
        %v283 = vlaneseq
        %v284 = vand.u32 %v283, 127
        %vm285 = vcmp.eq.s32.totalorder %v284, 7
        %v286 = vmul.f32 %v282, %v279
        %287 = vadd.xlane.f32.xlu0 %v286
        %v288 = vpop.xlane.xlu0 %287
        %v289 = vsel %vm285, %v288, %v279
        %s290 = scalar_lea.vmem [#allocation2], 8
        %v291 = vld [vmem:[%s290] ss:$0 sm:$0xff]
        %v292 = vxor.u32 %v291, 2147483648
        %v293 = vlaneseq
        %v294 = vand.u32 %v293, 127
        %vm295 = vcmp.eq.s32.totalorder %v294, 8
        %v296 = vmul.f32 %v292, %v289
        %297 = vadd.xlane.f32.xlu0 %v296
        %v298 = vpop.xlane.xlu0 %297
        %v299 = vsel %vm295, %v298, %v289
        %v300 = vmul.f32 %v292, %v205
        %301 = vadd.xlane.f32.xlu0 %v300
        %v302 = vpop.xlane.xlu0 %301
        %v303 = vsel %vm295, %v302, %v205
        %s304 = scalar_lea.vmem [#allocation2], 9
        %v305 = vld [vmem:[%s304] ss:$0 sm:$0xff]
        %v306 = vxor.u32 %v305, 2147483648
        %v307 = vlaneseq
        %v308 = vand.u32 %v307, 127
        %vm309 = vcmp.eq.s32.totalorder %v308, 9
        %v310 = vmul.f32 %v306, %v299
        %311 = vadd.xlane.f32.xlu0 %v310
        %v312 = vpop.xlane.xlu0 %311
        %v313 = vsel %vm309, %v312, %v299
        %v314 = vmul.f32 %v306, %v303
        %315 = vadd.xlane.f32.xlu0 %v314
        %v316 = vpop.xlane.xlu0 %315
        %v317 = vsel %vm309, %v316, %v303
        %s318 = scalar_lea.vmem [#allocation2], 10
        %v319 = vld [vmem:[%s318] ss:$0 sm:$0xff]
        %v320 = vxor.u32 %v319, 2147483648
        %v321 = vlaneseq
        %v322 = vand.u32 %v321, 127
        %vm323 = vcmp.eq.s32.totalorder %v322, 10
        %v324 = vmul.f32 %v320, %v313
        %325 = vadd.xlane.f32.xlu0 %v324
        %v326 = vpop.xlane.xlu0 %325
        %v327 = vsel %vm323, %v326, %v313
        %v328 = vmul.f32 %v320, %v317
        %329 = vadd.xlane.f32.xlu0 %v328
        %v330 = vpop.xlane.xlu0 %329
        %v331 = vsel %vm323, %v330, %v317
        %s332 = scalar_lea.vmem [#allocation2], 11
        %v333 = vld [vmem:[%s332] ss:$0 sm:$0xff]
        %v334 = vxor.u32 %v333, 2147483648
        %v335 = vlaneseq
        %v336 = vand.u32 %v335, 127
        %vm337 = vcmp.eq.s32.totalorder %v336, 11
        %v338 = vmul.f32 %v334, %v327
        %339 = vadd.xlane.f32.xlu0 %v338
        %v340 = vpop.xlane.xlu0 %339
        %v341 = vsel %vm337, %v340, %v327
        %v342 = vmul.f32 %v334, %v331
        %343 = vadd.xlane.f32.xlu0 %v342
        %v344 = vpop.xlane.xlu0 %343
        %v345 = vsel %vm337, %v344, %v331
        %s346 = scalar_lea.vmem [#allocation2], 12
        %v347 = vld [vmem:[%s346] ss:$0 sm:$0xff]
        %v348 = vxor.u32 %v347, 2147483648
        %v349 = vlaneseq
        %v350 = vand.u32 %v349, 127
        %vm351 = vcmp.eq.s32.totalorder %v350, 12
        %v352 = vmul.f32 %v348, %v341
        %353 = vadd.xlane.f32.xlu0 %v352
        %v354 = vpop.xlane.xlu0 %353
        %v355 = vsel %vm351, %v354, %v341
        %v356 = vmul.f32 %v348, %v345
        %357 = vadd.xlane.f32.xlu0 %v356
        %v358 = vpop.xlane.xlu0 %357
        %v359 = vsel %vm351, %v358, %v345
        %s360 = scalar_lea.vmem [#allocation2], 13
        %v361 = vld [vmem:[%s360] ss:$0 sm:$0xff]
        %v362 = vxor.u32 %v361, 2147483648
        %v363 = vlaneseq
        %v364 = vand.u32 %v363, 127
        %vm365 = vcmp.eq.s32.totalorder %v364, 13
        %v366 = vmul.f32 %v362, %v355
        %367 = vadd.xlane.f32.xlu0 %v366
        %v368 = vpop.xlane.xlu0 %367
        %v369 = vsel %vm365, %v368, %v355
        %v370 = vmul.f32 %v362, %v359
        %371 = vadd.xlane.f32.xlu0 %v370
        %v372 = vpop.xlane.xlu0 %371
        %v373 = vsel %vm365, %v372, %v359
        %s374 = scalar_lea.vmem [#allocation2], 14
        %v375 = vld [vmem:[%s374] ss:$0 sm:$0xff]
        %v376 = vxor.u32 %v375, 2147483648
        %v377 = vlaneseq
        %v378 = vand.u32 %v377, 127
        %vm379 = vcmp.eq.s32.totalorder %v378, 14
        %v380 = vmul.f32 %v376, %v369
        %381 = vadd.xlane.f32.xlu0 %v380
        %v382 = vpop.xlane.xlu0 %381
        %v383 = vsel %vm379, %v382, %v369
        %v384 = vmul.f32 %v376, %v373
        %385 = vadd.xlane.f32.xlu0 %v384
        %v386 = vpop.xlane.xlu0 %385
        %v387 = vsel %vm379, %v386, %v373
        %s388 = scalar_lea.vmem [#allocation2], 15
        %v389 = vld [vmem:[%s388] ss:$0 sm:$0xff]
        %v390 = vxor.u32 %v389, 2147483648
        %v391 = vlaneseq
        %v392 = vand.u32 %v391, 127
        %vm393 = vcmp.eq.s32.totalorder %v392, 15
        %v394 = vmul.f32 %v390, %v383
        %395 = vadd.xlane.f32.xlu0 %v394
        %v396 = vpop.xlane.xlu0 %395
        %v397 = vsel %vm393, %v396, %v383
        %v398 = vmul.f32 %v390, %v387
        %399 = vadd.xlane.f32.xlu0 %v398
        %v400 = vpop.xlane.xlu0 %399
        %v401 = vsel %vm393, %v400, %v387
        %s402 = scalar_lea.vmem [#allocation2], 16
        %v403 = vld [vmem:[%s402] ss:$0 sm:$0xff]
        %v404 = vxor.u32 %v403, 2147483648
        %v405 = vlaneseq
        %v406 = vand.u32 %v405, 127
        %vm407 = vcmp.eq.s32.totalorder %v406, 16
        %v408 = vmul.f32 %v404, %v397
        %409 = vadd.xlane.f32.xlu0 %v408
        %v410 = vpop.xlane.xlu0 %409
        %v411 = vsel %vm407, %v410, %v397
        %v412 = vmul.f32 %v404, %v401
        %413 = vadd.xlane.f32.xlu0 %v412
        %v414 = vpop.xlane.xlu0 %413
        %v415 = vsel %vm407, %v414, %v401
        %v416 = vmul.f32 %v404, %v212
        %417 = vadd.xlane.f32.xlu0 %v416
        %v418 = vpop.xlane.xlu0 %417
        %v419 = vsel %vm407, %v418, %v212
        %s420 = scalar_lea.vmem [#allocation2], 17
        %v421 = vld [vmem:[%s420] ss:$0 sm:$0xff]
        %v422 = vxor.u32 %v421, 2147483648
        %v423 = vlaneseq
        %v424 = vand.u32 %v423, 127
        %vm425 = vcmp.eq.s32.totalorder %v424, 17
        %v426 = vmul.f32 %v422, %v411
        %427 = vadd.xlane.f32.xlu0 %v426
        %v428 = vpop.xlane.xlu0 %427
        %v429 = vsel %vm425, %v428, %v411
        %v430 = vmul.f32 %v422, %v415
        %431 = vadd.xlane.f32.xlu0 %v430
        %v432 = vpop.xlane.xlu0 %431
        %v433 = vsel %vm425, %v432, %v415
        %v434 = vmul.f32 %v422, %v419
        %435 = vadd.xlane.f32.xlu0 %v434
        %v436 = vpop.xlane.xlu0 %435
        %v437 = vsel %vm425, %v436, %v419
        %s438 = scalar_lea.vmem [#allocation2], 18
        %v439 = vld [vmem:[%s438] ss:$0 sm:$0xff]
        %v440 = vxor.u32 %v439, 2147483648
        %v441 = vlaneseq
        %v442 = vand.u32 %v441, 127
        %vm443 = vcmp.eq.s32.totalorder %v442, 18
        %v444 = vmul.f32 %v440, %v429
        %445 = vadd.xlane.f32.xlu0 %v444
        %v446 = vpop.xlane.xlu0 %445
        %v447 = vsel %vm443, %v446, %v429
        %v448 = vmul.f32 %v440, %v433
        %449 = vadd.xlane.f32.xlu0 %v448
        %v450 = vpop.xlane.xlu0 %449
        %v451 = vsel %vm443, %v450, %v433
        %v452 = vmul.f32 %v440, %v437
        %453 = vadd.xlane.f32.xlu0 %v452
        %v454 = vpop.xlane.xlu0 %453
        %v455 = vsel %vm443, %v454, %v437
        %s456 = scalar_lea.vmem [#allocation2], 19
        %v457 = vld [vmem:[%s456] ss:$0 sm:$0xff]
        %v458 = vxor.u32 %v457, 2147483648
        %v459 = vlaneseq
        %v460 = vand.u32 %v459, 127
        %vm461 = vcmp.eq.s32.totalorder %v460, 19
        %v462 = vmul.f32 %v458, %v447
        %463 = vadd.xlane.f32.xlu0 %v462
        %v464 = vpop.xlane.xlu0 %463
        %v465 = vsel %vm461, %v464, %v447
        %v466 = vmul.f32 %v458, %v451
        %467 = vadd.xlane.f32.xlu0 %v466
        %v468 = vpop.xlane.xlu0 %467
        %v469 = vsel %vm461, %v468, %v451
        %v470 = vmul.f32 %v458, %v455
        %471 = vadd.xlane.f32.xlu0 %v470
        %v472 = vpop.xlane.xlu0 %471
        %v473 = vsel %vm461, %v472, %v455
        %s474 = scalar_lea.vmem [#allocation2], 20
        %v475 = vld [vmem:[%s474] ss:$0 sm:$0xff]
        %v476 = vxor.u32 %v475, 2147483648
        %v477 = vlaneseq
        %v478 = vand.u32 %v477, 127
        %vm479 = vcmp.eq.s32.totalorder %v478, 20
        %v480 = vmul.f32 %v476, %v465
        %481 = vadd.xlane.f32.xlu0 %v480
        %v482 = vpop.xlane.xlu0 %481
        %v483 = vsel %vm479, %v482, %v465
        %v484 = vmul.f32 %v476, %v469
        %485 = vadd.xlane.f32.xlu0 %v484
        %v486 = vpop.xlane.xlu0 %485
        %v487 = vsel %vm479, %v486, %v469
        %v488 = vmul.f32 %v476, %v473
        %489 = vadd.xlane.f32.xlu0 %v488
        %v490 = vpop.xlane.xlu0 %489
        %v491 = vsel %vm479, %v490, %v473
        %s492 = scalar_lea.vmem [#allocation2], 21
        %v493 = vld [vmem:[%s492] ss:$0 sm:$0xff]
        %v494 = vxor.u32 %v493, 2147483648
        %v495 = vlaneseq
        %v496 = vand.u32 %v495, 127
        %vm497 = vcmp.eq.s32.totalorder %v496, 21
        %v498 = vmul.f32 %v494, %v483
        %499 = vadd.xlane.f32.xlu0 %v498
        %v500 = vpop.xlane.xlu0 %499
        %v501 = vsel %vm497, %v500, %v483
        %v502 = vmul.f32 %v494, %v487
        %503 = vadd.xlane.f32.xlu0 %v502
        %v504 = vpop.xlane.xlu0 %503
        %v505 = vsel %vm497, %v504, %v487
        %v506 = vmul.f32 %v494, %v491
        %507 = vadd.xlane.f32.xlu0 %v506
        %v508 = vpop.xlane.xlu0 %507
        %v509 = vsel %vm497, %v508, %v491
        %s510 = scalar_lea.vmem [#allocation2], 22
        %v511 = vld [vmem:[%s510] ss:$0 sm:$0xff]
        %v512 = vxor.u32 %v511, 2147483648
        %v513 = vlaneseq
        %v514 = vand.u32 %v513, 127
        %vm515 = vcmp.eq.s32.totalorder %v514, 22
        %v516 = vmul.f32 %v512, %v501
        %517 = vadd.xlane.f32.xlu0 %v516
        %v518 = vpop.xlane.xlu0 %517
        %v519 = vsel %vm515, %v518, %v501
        %v520 = vmul.f32 %v512, %v505
        %521 = vadd.xlane.f32.xlu0 %v520
        %v522 = vpop.xlane.xlu0 %521
        %v523 = vsel %vm515, %v522, %v505
        %v524 = vmul.f32 %v512, %v509
        %525 = vadd.xlane.f32.xlu0 %v524
        %v526 = vpop.xlane.xlu0 %525
        %v527 = vsel %vm515, %v526, %v509
        %s528 = scalar_lea.vmem [#allocation2], 23
        %v529 = vld [vmem:[%s528] ss:$0 sm:$0xff]
        %v530 = vxor.u32 %v529, 2147483648
        %v531 = vlaneseq
        %v532 = vand.u32 %v531, 127
        %vm533 = vcmp.eq.s32.totalorder %v532, 23
        %v534 = vmul.f32 %v530, %v519
        %535 = vadd.xlane.f32.xlu0 %v534
        %v536 = vpop.xlane.xlu0 %535
        %v537 = vsel %vm533, %v536, %v519
        %v538 = vmul.f32 %v530, %v523
        %539 = vadd.xlane.f32.xlu0 %v538
        %v540 = vpop.xlane.xlu0 %539
        %v541 = vsel %vm533, %v540, %v523
        %v542 = vmul.f32 %v530, %v527
        %543 = vadd.xlane.f32.xlu0 %v542
        %v544 = vpop.xlane.xlu0 %543
        %v545 = vsel %vm533, %v544, %v527
        %s546 = scalar_lea.vmem [#allocation2], 24
        %v547 = vld [vmem:[%s546] ss:$0 sm:$0xff]
        %v548 = vxor.u32 %v547, 2147483648
        %v549 = vlaneseq
        %v550 = vand.u32 %v549, 127
        %vm551 = vcmp.eq.s32.totalorder %v550, 24
        %v552 = vmul.f32 %v548, %v537
        %553 = vadd.xlane.f32.xlu0 %v552
        %v554 = vpop.xlane.xlu0 %553
        %v555 = vsel %vm551, %v554, %v537
        %v556 = vmul.f32 %v548, %v541
        %557 = vadd.xlane.f32.xlu0 %v556
        %v558 = vpop.xlane.xlu0 %557
        %v559 = vsel %vm551, %v558, %v541
        %v560 = vmul.f32 %v548, %v545
        %561 = vadd.xlane.f32.xlu0 %v560
        %v562 = vpop.xlane.xlu0 %561
        %v563 = vsel %vm551, %v562, %v545
        %v564 = vmul.f32 %v548, %v219
        %565 = vadd.xlane.f32.xlu0 %v564
        %v566 = vpop.xlane.xlu0 %565
        %v567 = vsel %vm551, %v566, %v219
        %s568 = scalar_lea.vmem [#allocation2], 25
        %v569 = vld [vmem:[%s568] ss:$0 sm:$0xff]
        %v570 = vxor.u32 %v569, 2147483648
        %v571 = vlaneseq
        %v572 = vand.u32 %v571, 127
        %vm573 = vcmp.eq.s32.totalorder %v572, 25
        %v574 = vmul.f32 %v570, %v555
        %575 = vadd.xlane.f32.xlu0 %v574
        %v576 = vpop.xlane.xlu0 %575
        %v577 = vsel %vm573, %v576, %v555
        %v578 = vmul.f32 %v570, %v559
        %579 = vadd.xlane.f32.xlu0 %v578
        %v580 = vpop.xlane.xlu0 %579
        %v581 = vsel %vm573, %v580, %v559
        %v582 = vmul.f32 %v570, %v563
        %583 = vadd.xlane.f32.xlu0 %v582
        %v584 = vpop.xlane.xlu0 %583
        %v585 = vsel %vm573, %v584, %v563
        %v586 = vmul.f32 %v570, %v567
        %587 = vadd.xlane.f32.xlu0 %v586
        %v588 = vpop.xlane.xlu0 %587
        %v589 = vsel %vm573, %v588, %v567
        %s590 = scalar_lea.vmem [#allocation2], 26
        %v591 = vld [vmem:[%s590] ss:$0 sm:$0xff]
        %v592 = vxor.u32 %v591, 2147483648
        %v593 = vlaneseq
        %v594 = vand.u32 %v593, 127
        %vm595 = vcmp.eq.s32.totalorder %v594, 26
        %v596 = vmul.f32 %v592, %v577
        %597 = vadd.xlane.f32.xlu0 %v596
        %v598 = vpop.xlane.xlu0 %597
        %v599 = vsel %vm595, %v598, %v577
        %v600 = vmul.f32 %v592, %v581
        %601 = vadd.xlane.f32.xlu0 %v600
        %v602 = vpop.xlane.xlu0 %601
        %v603 = vsel %vm595, %v602, %v581
        %v604 = vmul.f32 %v592, %v585
        %605 = vadd.xlane.f32.xlu0 %v604
        %v606 = vpop.xlane.xlu0 %605
        %v607 = vsel %vm595, %v606, %v585
        %v608 = vmul.f32 %v592, %v589
        %609 = vadd.xlane.f32.xlu0 %v608
        %v610 = vpop.xlane.xlu0 %609
        %v611 = vsel %vm595, %v610, %v589
        %s612 = scalar_lea.vmem [#allocation2], 27
        %v613 = vld [vmem:[%s612] ss:$0 sm:$0xff]
        %v614 = vxor.u32 %v613, 2147483648
        %v615 = vlaneseq
        %v616 = vand.u32 %v615, 127
        %vm617 = vcmp.eq.s32.totalorder %v616, 27
        %v618 = vmul.f32 %v614, %v599
        %619 = vadd.xlane.f32.xlu0 %v618
        %v620 = vpop.xlane.xlu0 %619
        %v621 = vsel %vm617, %v620, %v599
        %v622 = vmul.f32 %v614, %v603
        %623 = vadd.xlane.f32.xlu0 %v622
        %v624 = vpop.xlane.xlu0 %623
        %v625 = vsel %vm617, %v624, %v603
        %v626 = vmul.f32 %v614, %v607
        %627 = vadd.xlane.f32.xlu0 %v626
        %v628 = vpop.xlane.xlu0 %627
        %v629 = vsel %vm617, %v628, %v607
        %v630 = vmul.f32 %v614, %v611
        %631 = vadd.xlane.f32.xlu0 %v630
        %v632 = vpop.xlane.xlu0 %631
        %v633 = vsel %vm617, %v632, %v611
        %s634 = scalar_lea.vmem [#allocation2], 28
        %v635 = vld [vmem:[%s634] ss:$0 sm:$0xff]
        %v636 = vxor.u32 %v635, 2147483648
        %v637 = vlaneseq
        %v638 = vand.u32 %v637, 127
        %vm639 = vcmp.eq.s32.totalorder %v638, 28
        %v640 = vmul.f32 %v636, %v621
        %641 = vadd.xlane.f32.xlu0 %v640
        %v642 = vpop.xlane.xlu0 %641
        %v643 = vsel %vm639, %v642, %v621
        %v644 = vmul.f32 %v636, %v625
        %645 = vadd.xlane.f32.xlu0 %v644
        %v646 = vpop.xlane.xlu0 %645
        %v647 = vsel %vm639, %v646, %v625
        %v648 = vmul.f32 %v636, %v629
        %649 = vadd.xlane.f32.xlu0 %v648
        %v650 = vpop.xlane.xlu0 %649
        %v651 = vsel %vm639, %v650, %v629
        %v652 = vmul.f32 %v636, %v633
        %653 = vadd.xlane.f32.xlu0 %v652
        %v654 = vpop.xlane.xlu0 %653
        %v655 = vsel %vm639, %v654, %v633
        %s656 = scalar_lea.vmem [#allocation2], 29
        %v657 = vld [vmem:[%s656] ss:$0 sm:$0xff]
        %v658 = vxor.u32 %v657, 2147483648
        %v659 = vlaneseq
        %v660 = vand.u32 %v659, 127
        %vm661 = vcmp.eq.s32.totalorder %v660, 29
        %v662 = vmul.f32 %v658, %v643
        %663 = vadd.xlane.f32.xlu0 %v662
        %v664 = vpop.xlane.xlu0 %663
        %v665 = vsel %vm661, %v664, %v643
        %v666 = vmul.f32 %v658, %v647
        %667 = vadd.xlane.f32.xlu0 %v666
        %v668 = vpop.xlane.xlu0 %667
        %v669 = vsel %vm661, %v668, %v647
        %v670 = vmul.f32 %v658, %v651
        %671 = vadd.xlane.f32.xlu0 %v670
        %v672 = vpop.xlane.xlu0 %671
        %v673 = vsel %vm661, %v672, %v651
        %v674 = vmul.f32 %v658, %v655
        %675 = vadd.xlane.f32.xlu0 %v674
        %v676 = vpop.xlane.xlu0 %675
        %v677 = vsel %vm661, %v676, %v655
        %s678 = scalar_lea.vmem [#allocation2], 30
        %v679 = vld [vmem:[%s678] ss:$0 sm:$0xff]
        %v680 = vxor.u32 %v679, 2147483648
        %v681 = vlaneseq
        %v682 = vand.u32 %v681, 127
        %vm683 = vcmp.eq.s32.totalorder %v682, 30
        %v684 = vmul.f32 %v680, %v665
        %685 = vadd.xlane.f32.xlu0 %v684
        %v686 = vpop.xlane.xlu0 %685
        %v687 = vsel %vm683, %v686, %v665
        %v688 = vmul.f32 %v680, %v669
        %689 = vadd.xlane.f32.xlu0 %v688
        %v690 = vpop.xlane.xlu0 %689
        %v691 = vsel %vm683, %v690, %v669
        %v692 = vmul.f32 %v680, %v673
        %693 = vadd.xlane.f32.xlu0 %v692
        %v694 = vpop.xlane.xlu0 %693
        %v695 = vsel %vm683, %v694, %v673
        %v696 = vmul.f32 %v680, %v677
        %697 = vadd.xlane.f32.xlu0 %v696
        %v698 = vpop.xlane.xlu0 %697
        %v699 = vsel %vm683, %v698, %v677
        %s700 = scalar_lea.vmem [#allocation2], 31
        %v701 = vld [vmem:[%s700] ss:$0 sm:$0xff]
        %v702 = vxor.u32 %v701, 2147483648
        %v703 = vlaneseq
        %v704 = vand.u32 %v703, 127
        %vm705 = vcmp.eq.s32.totalorder %v704, 31
        %v706 = vmul.f32 %v702, %v687
        %707 = vadd.xlane.f32.xlu0 %v706
        %v708 = vpop.xlane.xlu0 %707
        %v709 = vsel %vm705, %v708, %v687
        %v710 = vmul.f32 %v702, %v691
        %711 = vadd.xlane.f32.xlu0 %v710
        %v712 = vpop.xlane.xlu0 %711
        %v713 = vsel %vm705, %v712, %v691
        %v714 = vmul.f32 %v702, %v695
        %715 = vadd.xlane.f32.xlu0 %v714
        %v716 = vpop.xlane.xlu0 %715
        %v717 = vsel %vm705, %v716, %v695
        %v718 = vmul.f32 %v702, %v699
        %719 = vadd.xlane.f32.xlu0 %v718
        %v720 = vpop.xlane.xlu0 %719
        %v721 = vsel %vm705, %v720, %v699
        %v722 = vrcp.pop %v133
        %v723 = vmul.f32 %v709, %v722
        %vm724 = vweird.f32 %v133
        %v725 = vsel %vm724, %v709, %v723
        %726 = vst [vmem:[%s122] sm:$0xff] %v725
        %v727 = vrcp.pop %v149
        %v728 = vmul.f32 %v713, %v727
        %vm729 = vweird.f32 %v149
        %v730 = vsel %vm729, %v713, %v728
        %s731 = scalar_lea.vmem %s122, 8 [#allocation1]
        %732 = vst [vmem:[%s731] sm:$0xff] %v730
        %v733 = vrcp.pop %v165
        %v734 = vmul.f32 %v717, %v733
        %vm735 = vweird.f32 %v165
        %v736 = vsel %vm735, %v717, %v734
        %s737 = scalar_lea.vmem %s122, 16 [#allocation1]
        %738 = vst [vmem:[%s737] sm:$0xff] %v736
        %v739 = vrcp.pop %v181
        %v740 = vmul.f32 %v721, %v739
        %vm741 = vweird.f32 %v181
        %v742 = vsel %vm741, %v721, %v740
        %s743 = scalar_lea.vmem %s122, 24 [#allocation1]
        %744 = vst [vmem:[%s743] sm:$0xff] %v742
        %s745 = sand.u32 %s8, 1
        %s746 = sand.u32 %s8, 1
        %s747 = smul.addr %s746, 32
        %s748 = scalar_lea.vmem [#allocation1], %s747
        %s749 = sadd.s32 %s17, %s16
        %s750 = smul.addr %s15, 4
        %s751 = sadd.s32 %s749, %s750
        %s752 = smul.addr %s14, 4
        %s753 = sadd.s32 %s751, %s752
        %s754 = smul.addr %s753, 8
        %s755 = scalar_lea.vmem %s1, %s754
        // Predicated region
        $region55: #{custom-call.24} parent=53 // pred_check
          _
        $region56: #{custom-call.24} parent=53 // pred_check_branch
          %757 = sbr.rel (0) target = $region58
        $region57: #{custom-call.24} parent=53 // pred_region
          // Predicated region
          $region59: #{custom-call.24} parent=57 // pred_check
            _
          $region60: #{custom-call.24} parent=57 // pred_check_branch
            %759 = sbr.rel (0) target = $region62
          $region61: #{custom-call.24} parent=57 // pred_region
            // Predicated region
            $region74: #{custom-call.24} parent=61 // pred_check
              _
            $region75: #{custom-call.24} parent=61 // pred_check_branch
              %781 = sbr.rel (0) target = $region77
            $region76: #{custom-call.24} parent=61 // pred_region
              loop: start=0, step=1, limit=1
              $region78: #{custom-call.24} parent=76 // loop_pre_header
                _
              $region79: #{custom-call.24} parent=76 // loop_header
                %s783 = sphi 0, %s787
                %p784 = scmp.ge.s32.totalorder %s783, 1
                %s788 = sphi %s748, %s748
                %s789 = sphi %s755, %s755
              $region80: #{custom-call.24} parent=76 // loop_header_branch
                %786 = sbr.rel (%p784) target = $region84
              $region81: #{custom-call.24} parent=76 // loop_body
                %v790 = vld [vmem:[%s788] sm:$0xff]
                %791 = vst [vmem:[%s789] sm:$0xff] %v790
                %v792 = vld [vmem:[%s788 + $0x8] sm:$0xff]
                %793 = vst [vmem:[%s789 + $0x8] sm:$0xff] %v792
                %v794 = vld [vmem:[%s788 + $0x10] sm:$0xff]
                %795 = vst [vmem:[%s789 + $0x10] sm:$0xff] %v794
                %v796 = vld [vmem:[%s788 + $0x18] sm:$0xff]
                %797 = vst [vmem:[%s789 + $0x18] sm:$0xff] %v796
              $region82: #{custom-call.24} parent=76 // loop_footer
                %s787 = sadd.s32 1, %s783
              $region83: #{custom-call.24} parent=76 // loop_footer_branch
                %782 = sbr.rel target = $region79
              $region84: #{custom-call.24} parent=76 // loop_exit
                _
            $region77: #{custom-call.24} parent=61 // pred_fallthru
              _
            // Predicated region
            $region85: #{custom-call.24} parent=61 // pred_check
              _
            $region86: #{custom-call.24} parent=61 // pred_check_branch
              %799 = sbr.rel target = $region88
            $region87: #{custom-call.24} parent=61 // pred_region
              _
            $region88: #{custom-call.24} parent=61 // pred_fallthru
              _
          $region62: #{custom-call.24} parent=57 // pred_fallthru
            _
          // Predicated region
          $region63: #{custom-call.24} parent=57 // pred_check
            _
          $region64: #{custom-call.24} parent=57 // pred_check_branch
            %761 = sbr.rel target = $region66
          $region65: #{custom-call.24} parent=57 // pred_region
            %s763 = ssub.s32 256, 1
            loop: start=0, step=1, limit=1
            $region67: #{custom-call.24} parent=65 // loop_pre_header
              _
            $region68: #{custom-call.24} parent=65 // loop_header
              %s765 = sphi 0, %s769
              %p766 = scmp.ge.s32.totalorder %s765, 1
              %s770 = sphi %s748, %s748
              %s771 = sphi %s755, %s755
            $region69: #{custom-call.24} parent=65 // loop_header_branch
              %768 = sbr.rel (%p766) target = $region73
            $region70: #{custom-call.24} parent=65 // loop_body
              %v772 = vld [vmem:[%s770] sm:%s763]
              %773 = vst [vmem:[%s771] sm:%s763] %v772
              %v774 = vld [vmem:[%s770 + $0x8] sm:%s763]
              %775 = vst [vmem:[%s771 + $0x8] sm:%s763] %v774
              %v776 = vld [vmem:[%s770 + $0x10] sm:%s763]
              %777 = vst [vmem:[%s771 + $0x10] sm:%s763] %v776
              %v778 = vld [vmem:[%s770 + $0x18] sm:%s763]
              %779 = vst [vmem:[%s771 + $0x18] sm:%s763] %v778
            $region71: #{custom-call.24} parent=65 // loop_footer
              %s769 = sadd.s32 1, %s765
            $region72: #{custom-call.24} parent=65 // loop_footer_branch
              %764 = sbr.rel target = $region68
            $region73: #{custom-call.24} parent=65 // loop_exit
              _
          $region66: #{custom-call.24} parent=57 // pred_fallthru
            _
        $region58: #{custom-call.24} parent=53 // pred_fallthru
          _
        %800 = vnop
      $region54: #{custom-call.24} parent=5 // pred_fallthru
        _
      %p801 = scmp.le.s32.totalorder 2, %s3
      // Predicated region
      $region89: #{custom-call.24} parent=5 // pred_check
        %p802 = pneg %p801
      $region90: #{custom-call.24} parent=5 // pred_check_branch
        %804 = sbr.rel (%p802) target = $region92
      $region91: #{custom-call.24} parent=5 // pred_region
        %s805 = ssub.s32 %s3, 2
        %s806 = sand.u32 %s9, 1
        %s807 = sand.u32 %s9, 1
        %s808 = smul.addr %s807, 32
        %s809 = scalar_lea.vmem [#allocation1], %s808
      $region92: #{custom-call.24} parent=5 // pred_fallthru
        _
    $region6: #{custom-call.24} parent=1 // loop_footer
      %s7 = sadd.s32 1, %s3
    $region7: #{custom-call.24} parent=1 // loop_footer_branch
      %2 = sbr.rel target = $region3
    $region8: #{custom-call.24} parent=1 // loop_exit
      _

// kernel: whitened_kmeans_loss.1
$region0: #{whitened_kmeans_loss.1}
  #allocation0 [shape = 'u32[]', space=smem, size = 0x4, offset = 0x4, fixed_abs, tag = 'smem constant byte address 0x4 - core index']
  #allocation1 [shape = 'u32[144,128]{1,0:T(1,128)}', space=vmem, size = 0x12000, scoped, tag = 'internal scratch']
  #allocation2 [shape = 'f32[64,128]{1,0:T(8,128)}', space=vmem, size = 0x8000, scoped, tag = 'scratch operand']
  %s0 = inlined_call_operand.vmem [shape: f32[2,64,32], index: 0, kind: input, shape index: {}]
  %s1 = inlined_call_operand.vmem [shape: f32[2,64,4], index: 1, kind: input, shape index: {}]
  %s2 = inlined_call_operand.vmem [shape: f32[2,64,1], index: 2, kind: input, shape index: {}]
  %s3 = inlined_call_operand.vmem [shape: f32[2,1,128,128], index: 3, kind: output, shape index: {}]
  %s4 = sld [smem:[#allocation0]]
  $region49: #{whitened_kmeans_loss.1} parent=0
    _
  %s6 = ssub.s32 1, %s4
  %s7 = scalar_select 0, %s6, %s4
  loop: start=0, step=1, limit=4
  $region2: #{whitened_kmeans_loss.1} parent=0 // loop_pre_header
    _
  $region3: #{whitened_kmeans_loss.1} parent=0 // loop_header
    %s9 = sphi 0, %s13
    %p10 = scmp.ge.s32.totalorder %s9, 4
    %s16 = sphi 0, %s35
    %s17 = sphi 0, %s31
    %s18 = sphi 0, %s27
    %s19 = sphi 0, %s16
    %s20 = sphi 0, %s17
    %s21 = sphi 0, %s18
    %s22 = sphi 0, %s19
    %s23 = sphi 0, %s20
    %s24 = sphi 0, %s21
    %s42 = sphi 0, %s44
    %s45 = sphi 0, %s42
    %s46 = sphi 0, %s45
    %s62 = sphi 0, %s46
    %s72 = sphi 0, %s74
    %s75 = sphi 0, %s72
    %s76 = sphi 0, %s75
    %s92 = sphi 0, %s76
    %s102 = sphi 0, %s104
    %s105 = sphi 0, %s102
    %s106 = sphi 0, %s105
    %s122 = sphi 0, %s106
    %s130 = sphi 0, %s132
    %s133 = sphi 0, %s130
    %s134 = sphi 0, %s133
    %s150 = sphi 0, %s134
  $region4: #{whitened_kmeans_loss.1} parent=0 // loop_header_branch
    %12 = sbr.rel (%p10) target = $region8
  $region5: #{whitened_kmeans_loss.1} parent=0 // loop_body
    %s14 = ssub.s32 %s9, 1
    %s15 = ssub.s32 %s9, 2
    %s25 = sadd.s32 1, %s18
    %p26 = scmp.ge.s32.totalorder %s25, 1
    %s27 = scalar_select %p26, 0, %s25
    %s28 = sadd.s32 1, %s17
    %s29 = scalar_select %p26, %s28, %s17
    %p30 = scmp.ge.s32.totalorder %s29, 1
    %s31 = scalar_select %p30, 0, %s29
    %s32 = sadd.s32 1, %s16
    %s33 = scalar_select %p30, %s32, %s16
    %p34 = scmp.ge.s32.totalorder %s33, 2
    %s35 = scalar_select %p34, 0, %s33
    %s36 = sadd.s32 %s17, %s18
    %s37 = sadd.s32 %s31, %s27
    %s38 = ssub.s32 %s16, %s35
    %s39 = ssub.s32 %s36, %s37
    %s40 = sor.u32 %s38, %s39
    %p41 = scmp.eq.s32.totalorder %s40, 0
    %s43 = sadd.s32 %s42, 1
    %s44 = scalar_select %p41, %s42, %s43
    %p47 = pneg %p41
    %p48 = scmp.eq.s32.totalorder %s9, 1
    %p49 = por %p47, %p48
    %p50 = scmp.ne.s32.totalorder %s42, %s45
    %p51 = scmp.eq.s32.totalorder %s9, 0
    %p52 = por %p50, %p51
    %p53 = scmp.ne.s32.totalorder %s42, %s45
    %p54 = scmp.eq.s32.totalorder %s14, 1
    %p55 = por %p53, %p54
    %p56 = scmp.ne.s32.totalorder %s45, %s46
    %p57 = scmp.eq.s32.totalorder %s14, 0
    %p58 = por %p56, %p57
    %p59 = scmp.ne.s32.totalorder %s45, %s46
    %p60 = scmp.eq.s32.totalorder %s15, 1
    %p61 = por %p59, %p60
    %p63 = scmp.ne.s32.totalorder %s46, %s62
    %p64 = scmp.eq.s32.totalorder %s15, 0
    %p65 = por %p63, %p64
    %s66 = sadd.s32 %s17, %s18
    %s67 = sadd.s32 %s31, %s27
    %s68 = ssub.s32 %s16, %s35
    %s69 = ssub.s32 %s66, %s67
    %s70 = sor.u32 %s68, %s69
    %p71 = scmp.eq.s32.totalorder %s70, 0
    %s73 = sadd.s32 %s72, 1
    %s74 = scalar_select %p71, %s72, %s73
    %p77 = pneg %p71
    %p78 = scmp.eq.s32.totalorder %s9, 1
    %p79 = por %p77, %p78
    %p80 = scmp.ne.s32.totalorder %s72, %s75
    %p81 = scmp.eq.s32.totalorder %s9, 0
    %p82 = por %p80, %p81
    %p83 = scmp.ne.s32.totalorder %s72, %s75
    %p84 = scmp.eq.s32.totalorder %s14, 1
    %p85 = por %p83, %p84
    %p86 = scmp.ne.s32.totalorder %s75, %s76
    %p87 = scmp.eq.s32.totalorder %s14, 0
    %p88 = por %p86, %p87
    %p89 = scmp.ne.s32.totalorder %s75, %s76
    %p90 = scmp.eq.s32.totalorder %s15, 1
    %p91 = por %p89, %p90
    %p93 = scmp.ne.s32.totalorder %s76, %s92
    %p94 = scmp.eq.s32.totalorder %s15, 0
    %p95 = por %p93, %p94
    %s96 = sadd.s32 %s17, %s18
    %s97 = sadd.s32 %s31, %s27
    %s98 = ssub.s32 %s16, %s35
    %s99 = ssub.s32 %s96, %s97
    %s100 = sor.u32 %s98, %s99
    %p101 = scmp.eq.s32.totalorder %s100, 0
    %s103 = sadd.s32 %s102, 1
    %s104 = scalar_select %p101, %s102, %s103
    %p107 = pneg %p101
    %p108 = scmp.eq.s32.totalorder %s9, 1
    %p109 = por %p107, %p108
    %p110 = scmp.ne.s32.totalorder %s102, %s105
    %p111 = scmp.eq.s32.totalorder %s9, 0
    %p112 = por %p110, %p111
    %p113 = scmp.ne.s32.totalorder %s102, %s105
    %p114 = scmp.eq.s32.totalorder %s14, 1
    %p115 = por %p113, %p114
    %p116 = scmp.ne.s32.totalorder %s105, %s106
    %p117 = scmp.eq.s32.totalorder %s14, 0
    %p118 = por %p116, %p117
    %p119 = scmp.ne.s32.totalorder %s105, %s106
    %p120 = scmp.eq.s32.totalorder %s15, 1
    %p121 = por %p119, %p120
    %p123 = scmp.ne.s32.totalorder %s106, %s122
    %p124 = scmp.eq.s32.totalorder %s15, 0
    %p125 = por %p123, %p124
    %s126 = ssub.s32 %s16, %s35
    %s127 = ssub.s32 %s17, %s31
    %s128 = sor.u32 %s126, %s127
    %p129 = scmp.eq.s32.totalorder %s128, 0
    %s131 = sadd.s32 %s130, 1
    %s132 = scalar_select %p129, %s130, %s131
    %p135 = pneg %p129
    %p136 = scmp.eq.s32.totalorder %s9, 1
    %p137 = por %p135, %p136
    %p138 = scmp.ne.s32.totalorder %s130, %s133
    %p139 = scmp.eq.s32.totalorder %s9, 0
    %p140 = por %p138, %p139
    %p141 = scmp.ne.s32.totalorder %s130, %s133
    %p142 = scmp.eq.s32.totalorder %s14, 1
    %p143 = por %p141, %p142
    %p144 = scmp.ne.s32.totalorder %s133, %s134
    %p145 = scmp.eq.s32.totalorder %s14, 0
    %p146 = por %p144, %p145
    %p147 = scmp.ne.s32.totalorder %s133, %s134
    %p148 = scmp.eq.s32.totalorder %s15, 1
    %p149 = por %p147, %p148
    %p151 = scmp.ne.s32.totalorder %s134, %s150
    %p152 = scmp.eq.s32.totalorder %s15, 0
    %p153 = por %p151, %p152
    %p154 = scmp.le.s32.totalorder 1, %s9
    %p155 = scmp.lt.s32.totalorder %s9, 3
    %p156 = pnand %p154, %p155
    %p157 = pneg %p156
    // Predicated region
    $region9: #{whitened_kmeans_loss.1} parent=5 // pred_check
      _
    $region10: #{whitened_kmeans_loss.1} parent=5 // pred_check_branch
      %159 = sbr.rel (%p156) target = $region12
    $region11: #{whitened_kmeans_loss.1} parent=5 // pred_region
      %s160 = ssub.s32 %s9, 1
    $region12: #{whitened_kmeans_loss.1} parent=5 // pred_fallthru
      _
    %p161 = scmp.lt.s32.totalorder %s9, 2
    // Predicated region
    $region13: #{whitened_kmeans_loss.1} parent=5 // pred_check
      %p162 = pneg %p161
    $region14: #{whitened_kmeans_loss.1} parent=5 // pred_check_branch
      %164 = sbr.rel (%p162) target = $region16
    $region15: #{whitened_kmeans_loss.1} parent=5 // pred_region
      // Predicated region
      $region17: #{whitened_kmeans_loss.1} parent=15 // pred_check
        %p165 = pneg %p52
      $region18: #{whitened_kmeans_loss.1} parent=15 // pred_check_branch
        %167 = sbr.rel (%p165) target = $region20
      $region19: #{whitened_kmeans_loss.1} parent=15 // pred_region
        %s168 = sadd.s32 %s17, %s18
        %s169 = smul.u32 8, %s168
        %p170 = scmp.lt.s32.totalorder %s16, 1
        %s171 = scalar_select %p170, %s16, 1
        %p172 = scmp.lt.s32.totalorder %s169, 7
        %s173 = scalar_select %p172, %s169, 7
        %s174 = smul.addr %s171, 8
        %s175 = sadd.s32 %s173, %s174
        %s176 = smul.addr %s175, 8
        %s177 = scalar_lea.vmem %s0, %s176
        %s178 = sadd.s32 %s17, %s18
        %s179 = smul.u32 8, %s178
      $region20: #{whitened_kmeans_loss.1} parent=15 // pred_fallthru
        _
      // Predicated region
      $region21: #{whitened_kmeans_loss.1} parent=15 // pred_check
        %p180 = pneg %p82
      $region22: #{whitened_kmeans_loss.1} parent=15 // pred_check_branch
        %182 = sbr.rel (%p180) target = $region24
      $region23: #{whitened_kmeans_loss.1} parent=15 // pred_region
        %s183 = sadd.s32 %s17, %s18
        %s184 = smul.u32 8, %s183
        %p185 = scmp.lt.s32.totalorder %s16, 1
        %s186 = scalar_select %p185, %s16, 1
        %p187 = scmp.lt.s32.totalorder %s184, 7
        %s188 = scalar_select %p187, %s184, 7
        %s189 = smul.addr %s186, 8
        %s190 = sadd.s32 %s188, %s189
        %s191 = smul.addr %s190, 8
        %s192 = scalar_lea.vmem %s1, %s191
        %s193 = sadd.s32 %s17, %s18
        %s194 = smul.u32 8, %s193
      $region24: #{whitened_kmeans_loss.1} parent=15 // pred_fallthru
        _
      // Predicated region
      $region25: #{whitened_kmeans_loss.1} parent=15 // pred_check
        %p195 = pneg %p112
      $region26: #{whitened_kmeans_loss.1} parent=15 // pred_check_branch
        %197 = sbr.rel (%p195) target = $region28
      $region27: #{whitened_kmeans_loss.1} parent=15 // pred_region
        %s198 = sadd.s32 %s17, %s18
        %s199 = smul.u32 8, %s198
        %p200 = scmp.lt.s32.totalorder %s16, 1
        %s201 = scalar_select %p200, %s16, 1
        %p202 = scmp.lt.s32.totalorder %s199, 7
        %s203 = scalar_select %p202, %s199, 7
        %s204 = smul.addr %s201, 8
        %s205 = sadd.s32 %s203, %s204
        %s206 = smul.addr %s205, 8
        %s207 = scalar_lea.vmem %s2, %s206
        %s208 = sadd.s32 %s17, %s18
        %s209 = smul.u32 8, %s208
      $region28: #{whitened_kmeans_loss.1} parent=15 // pred_fallthru
        _
    $region16: #{whitened_kmeans_loss.1} parent=5 // pred_fallthru
      _
    %p210 = scmp.le.s32.totalorder 1, %s9
    %p211 = scmp.lt.s32.totalorder %s9, 3
    %p212 = pnand %p210, %p211
    %p213 = pneg %p212
    // Predicated region
    $region29: #{whitened_kmeans_loss.1} parent=5 // pred_check
      _
    $region30: #{whitened_kmeans_loss.1} parent=5 // pred_check_branch
      %215 = sbr.rel (%p212) target = $region32
    $region31: #{whitened_kmeans_loss.1} parent=5 // pred_region
      %s216 = ssub.s32 %s9, 1
      %s217 = sadd.s32 %s20, %s21
      %s218 = smul.u32 8, %s217
      %p219 = scmp.lt.s32.totalorder %s19, 1
      %s220 = scalar_select %p219, %s19, 1
      %p221 = scmp.lt.s32.totalorder %s218, 7
      %s222 = scalar_select %p221, %s218, 7
      %s223 = smul.addr %s220, 8
      %s224 = sadd.s32 %s222, %s223
      %s225 = smul.addr %s224, 8
      %s226 = scalar_lea.vmem %s0, %s225
      %p227 = pneg %p58
      %p228 = pneg %p55
      %s229 = sadd.s32 %s20, %s21
      %s230 = smul.u32 8, %s229
      %p231 = scmp.lt.s32.totalorder %s19, 1
      %s232 = scalar_select %p231, %s19, 1
      %p233 = scmp.lt.s32.totalorder %s230, 7
      %s234 = scalar_select %p233, %s230, 7
      %s235 = smul.addr %s232, 8
      %s236 = sadd.s32 %s234, %s235
      %s237 = smul.addr %s236, 8
      %s238 = scalar_lea.vmem %s1, %s237
      %p239 = pneg %p88
      %p240 = pneg %p85
      %s241 = sadd.s32 %s20, %s21
      %s242 = smul.u32 8, %s241
      %p243 = scmp.lt.s32.totalorder %s19, 1
      %s244 = scalar_select %p243, %s19, 1
      %p245 = scmp.lt.s32.totalorder %s242, 7
      %s246 = scalar_select %p245, %s242, 7
      %s247 = smul.addr %s244, 8
      %s248 = sadd.s32 %s246, %s247
      %s249 = smul.addr %s248, 8
      %s250 = scalar_lea.vmem %s2, %s249
      %p251 = pneg %p118
      %p252 = pneg %p115
      %p253 = pneg %p146
      %p254 = pneg %p143
      %p255 = scmp.lt.s32.totalorder %s19, 1
      %s256 = scalar_select %p255, %s19, 1
      %p257 = scmp.lt.s32.totalorder %s20, 0
      %s258 = scalar_select %p257, %s20, 0
      %s259 = smul.addr %s258, 16
      %s260 = smul.addr %s256, 16
      %s261 = sadd.s32 %s259, %s260
      %s262 = smul.addr %s261, 8
      %s263 = scalar_lea.vmem %s3, %s262
      %s264 = sadd.s32 %s20, %s21
      %s265 = smul.u32 8, %s264
      %p266 = scmp.lt.s32.totalorder %s19, 1
      %s267 = scalar_select %p266, %s19, 1
      %p268 = scmp.lt.s32.totalorder %s265, 7
      %s269 = scalar_select %p268, %s265, 7
      %s270 = smul.addr %s267, 8
      %s271 = sadd.s32 %s269, %s270
      %s272 = smul.addr %s271, 8
      %s273 = scalar_lea.vmem %s0, %s272
      %s274 = sadd.s32 %s20, %s21
      %s275 = smul.u32 8, %s274
      %s276 = sadd.s32 %s20, %s21
      %s277 = smul.u32 8, %s276
      %p278 = scmp.lt.s32.totalorder %s19, 1
      %s279 = scalar_select %p278, %s19, 1
      %p280 = scmp.lt.s32.totalorder %s277, 7
      %s281 = scalar_select %p280, %s277, 7
      %s282 = smul.addr %s279, 8
      %s283 = sadd.s32 %s281, %s282
      %s284 = smul.addr %s283, 8
      %s285 = scalar_lea.vmem %s1, %s284
      %s286 = sadd.s32 %s20, %s21
      %s287 = smul.u32 8, %s286
      %s288 = sadd.s32 %s20, %s21
      %s289 = smul.u32 8, %s288
      %p290 = scmp.lt.s32.totalorder %s19, 1
      %s291 = scalar_select %p290, %s19, 1
      %p292 = scmp.lt.s32.totalorder %s289, 7
      %s293 = scalar_select %p292, %s289, 7
      %s294 = smul.addr %s291, 8
      %s295 = sadd.s32 %s293, %s294
      %s296 = smul.addr %s295, 8
      %s297 = scalar_lea.vmem %s2, %s296
      %s298 = sadd.s32 %s20, %s21
      %s299 = smul.u32 8, %s298
      %p300 = scmp.lt.s32.totalorder %s19, 1
      %s301 = scalar_select %p300, %s19, 1
      %p302 = scmp.lt.s32.totalorder %s20, 0
      %s303 = scalar_select %p302, %s20, 0
      %s304 = smul.addr %s303, 16
      %s305 = smul.addr %s301, 16
      %s306 = sadd.s32 %s304, %s305
      %s307 = smul.addr %s306, 8
      %s308 = scalar_lea.vmem %s3, %s307
      %p309 = scmp.eq.s32.totalorder %s21, 0
      // Predicated region
      $region33: #{whitened_kmeans_loss.1} parent=31 // pred_check
        %p310 = pneg %p309
      $region34: #{whitened_kmeans_loss.1} parent=31 // pred_check_branch
        %312 = sbr.rel (%p310) target = $region36
      $region35: #{whitened_kmeans_loss.1} parent=31 // pred_region
        %313 = vst [vmem:[%s308] sm:$0xff] 0.0
        %314 = vst [vmem:[%s308 + $0x8] sm:$0xff] 0.0
        %315 = vst [vmem:[%s308 + $0x10] sm:$0xff] 0.0
        %316 = vst [vmem:[%s308 + $0x18] sm:$0xff] 0.0
        %317 = vst [vmem:[%s308 + $0x20] sm:$0xff] 0.0
        %318 = vst [vmem:[%s308 + $0x28] sm:$0xff] 0.0
        %319 = vst [vmem:[%s308 + $0x30] sm:$0xff] 0.0
        %320 = vst [vmem:[%s308 + $0x38] sm:$0xff] 0.0
        %321 = vst [vmem:[%s308 + $0x40] sm:$0xff] 0.0
        %322 = vst [vmem:[%s308 + $0x48] sm:$0xff] 0.0
        %323 = vst [vmem:[%s308 + $0x50] sm:$0xff] 0.0
        %324 = vst [vmem:[%s308 + $0x58] sm:$0xff] 0.0
        %325 = vst [vmem:[%s308 + $0x60] sm:$0xff] 0.0
        %326 = vst [vmem:[%s308 + $0x68] sm:$0xff] 0.0
        %327 = vst [vmem:[%s308 + $0x70] sm:$0xff] 0.0
        %328 = vst [vmem:[%s308 + $0x78] sm:$0xff] 0.0
        %vm329 = vcmask 1047840
        %330 = vst.msk [vmem:[#allocation2] sm:$0xff] %vm329, 0.0
        %331 = vst.msk [vmem:[#allocation2 + $0x8] sm:$0xff] %vm329, 0.0
        %332 = vst.msk [vmem:[#allocation2 + $0x10] sm:$0xff] %vm329, 0.0
        %333 = vst.msk [vmem:[#allocation2 + $0x18] sm:$0xff] %vm329, 0.0
        %334 = vst.msk [vmem:[#allocation2 + $0x20] sm:$0xff] %vm329, 0.0
        %335 = vst.msk [vmem:[#allocation2 + $0x28] sm:$0xff] %vm329, 0.0
        %336 = vst.msk [vmem:[#allocation2 + $0x30] sm:$0xff] %vm329, 0.0
        %337 = vst.msk [vmem:[#allocation2 + $0x38] sm:$0xff] %vm329, 0.0
      $region36: #{whitened_kmeans_loss.1} parent=31 // pred_fallthru
        _
      %v338 = vld [vmem:[%s273] sm:$0xff]
      %v339 = vld [vmem:[%s273 + $0x8] sm:$0xff]
      %v340 = vld [vmem:[%s273 + $0x10] sm:$0xff]
      %v341 = vld [vmem:[%s273 + $0x18] sm:$0xff]
      %v342 = vld [vmem:[%s273 + $0x20] sm:$0xff]
      %v343 = vld [vmem:[%s273 + $0x28] sm:$0xff]
      %v344 = vld [vmem:[%s273 + $0x30] sm:$0xff]
      %v345 = vld [vmem:[%s273 + $0x38] sm:$0xff]
      %v346 = vld [vmem:[%s285] sm:$0xff]
      %v347 = vld [vmem:[%s285 + $0x8] sm:$0xff]
      %v348 = vld [vmem:[%s285 + $0x10] sm:$0xff]
      %v349 = vld [vmem:[%s285 + $0x18] sm:$0xff]
      %v350 = vld [vmem:[%s285 + $0x20] sm:$0xff]
      %v351 = vld [vmem:[%s285 + $0x28] sm:$0xff]
      %v352 = vld [vmem:[%s285 + $0x30] sm:$0xff]
      %v353 = vld [vmem:[%s285 + $0x38] sm:$0xff]
      %v354 = vld [vmem:[%s297] sm:$0xff]
      %v355 = vld [vmem:[%s297 + $0x8] sm:$0xff]
      %v356 = vld [vmem:[%s297 + $0x10] sm:$0xff]
      %v357 = vld [vmem:[%s297 + $0x18] sm:$0xff]
      %v358 = vld [vmem:[%s297 + $0x20] sm:$0xff]
      %v359 = vld [vmem:[%s297 + $0x28] sm:$0xff]
      %v360 = vld [vmem:[%s297 + $0x30] sm:$0xff]
      %v361 = vld [vmem:[%s297 + $0x38] sm:$0xff]
      %v362 = vmul.f32 %v338, %v338
      %v363 = vmul.f32 %v339, %v339
      %v364 = vmul.f32 %v340, %v340
      %v365 = vmul.f32 %v341, %v341
      %v366 = vmul.f32 %v342, %v342
      %v367 = vmul.f32 %v343, %v343
      %v368 = vmul.f32 %v344, %v344
      %v369 = vmul.f32 %v345, %v345
      %vm370 = vcmask 261120
      %v371 = vsel %vm370, %v362, 0.0
      %372 = vadd.xlane.f32.xlu0 %v371
      %v373 = vpop.xlane.xlu0 %372
      %v374 = vsel %vm370, %v363, 0.0
      %375 = vadd.xlane.f32.xlu0 %v374
      %v376 = vpop.xlane.xlu0 %375
      %v377 = vsel %vm370, %v364, 0.0
      %378 = vadd.xlane.f32.xlu0 %v377
      %v379 = vpop.xlane.xlu0 %378
      %v380 = vsel %vm370, %v365, 0.0
      %381 = vadd.xlane.f32.xlu0 %v380
      %v382 = vpop.xlane.xlu0 %381
      %v383 = vsel %vm370, %v366, 0.0
      %384 = vadd.xlane.f32.xlu0 %v383
      %v385 = vpop.xlane.xlu0 %384
      %v386 = vsel %vm370, %v367, 0.0
      %387 = vadd.xlane.f32.xlu0 %v386
      %v388 = vpop.xlane.xlu0 %387
      %v389 = vsel %vm370, %v368, 0.0
      %390 = vadd.xlane.f32.xlu0 %v389
      %v391 = vpop.xlane.xlu0 %390
      %v392 = vsel %vm370, %v369, 0.0
      %393 = vadd.xlane.f32.xlu0 %v392
      %v394 = vpop.xlane.xlu0 %393
      %v395 = vmax.f32 %v373, 1e-24
      %v396 = vmax.f32 %v376, 1e-24
      %v397 = vmax.f32 %v379, 1e-24
      %v398 = vmax.f32 %v382, 1e-24
      %v399 = vmax.f32 %v385, 1e-24
      %v400 = vmax.f32 %v388, 1e-24
      %v401 = vmax.f32 %v391, 1e-24
      %v402 = vmax.f32 %v394, 1e-24
      %v403 = vrsqrt.pop %v395
      %v404 = vrsqrt.pop %v396
      %v405 = vrsqrt.pop %v397
      %v406 = vrsqrt.pop %v398
      %v407 = vrsqrt.pop %v399
      %v408 = vrsqrt.pop %v400
      %v409 = vrsqrt.pop %v401
      %v410 = vrsqrt.pop %v402
      %v411 = vmul.f32 %v354, %v403
      %v412 = vmul.f32 %v355, %v404
      %v413 = vmul.f32 %v356, %v405
      %v414 = vmul.f32 %v357, %v406
      %v415 = vmul.f32 %v358, %v407
      %v416 = vmul.f32 %v359, %v408
      %v417 = vmul.f32 %v360, %v409
      %v418 = vmul.f32 %v361, %v410
      %v419 = vmul.f32 %v346, %v346
      %v420 = vmul.f32 %v347, %v347
      %v421 = vmul.f32 %v348, %v348
      %v422 = vmul.f32 %v349, %v349
      %v423 = vmul.f32 %v350, %v350
      %v424 = vmul.f32 %v351, %v351
      %v425 = vmul.f32 %v352, %v352
      %v426 = vmul.f32 %v353, %v353
      %vm427 = vcmask 31744
      %v428 = vsel %vm427, %v419, 0.0
      %429 = vadd.xlane.f32.xlu0 %v428
      %v430 = vpop.xlane.xlu0 %429
      %v431 = vsel %vm427, %v420, 0.0
      %432 = vadd.xlane.f32.xlu0 %v431
      %v433 = vpop.xlane.xlu0 %432
      %v434 = vsel %vm427, %v421, 0.0
      %435 = vadd.xlane.f32.xlu0 %v434
      %v436 = vpop.xlane.xlu0 %435
      %v437 = vsel %vm427, %v422, 0.0
      %438 = vadd.xlane.f32.xlu0 %v437
      %v439 = vpop.xlane.xlu0 %438
      %v440 = vsel %vm427, %v423, 0.0
      %441 = vadd.xlane.f32.xlu0 %v440
      %v442 = vpop.xlane.xlu0 %441
      %v443 = vsel %vm427, %v424, 0.0
      %444 = vadd.xlane.f32.xlu0 %v443
      %v445 = vpop.xlane.xlu0 %444
      %v446 = vsel %vm427, %v425, 0.0
      %447 = vadd.xlane.f32.xlu0 %v446
      %v448 = vpop.xlane.xlu0 %447
      %v449 = vsel %vm427, %v426, 0.0
      %450 = vadd.xlane.f32.xlu0 %v449
      %v451 = vpop.xlane.xlu0 %450
      %v452 = vmax.f32 %v430, 1e-24
      %v453 = vmax.f32 %v433, 1e-24
      %v454 = vmax.f32 %v436, 1e-24
      %v455 = vmax.f32 %v439, 1e-24
      %v456 = vmax.f32 %v442, 1e-24
      %v457 = vmax.f32 %v445, 1e-24
      %v458 = vmax.f32 %v448, 1e-24
      %v459 = vmax.f32 %v451, 1e-24
      %v460 = vrsqrt.pop %v452
      %v461 = vrsqrt.pop %v453
      %v462 = vrsqrt.pop %v454
      %v463 = vrsqrt.pop %v455
      %v464 = vrsqrt.pop %v456
      %v465 = vrsqrt.pop %v457
      %v466 = vrsqrt.pop %v458
      %v467 = vrsqrt.pop %v459
      %v468 = vmul.f32 %v354, %v460
      %v469 = vmul.f32 %v355, %v461
      %v470 = vmul.f32 %v356, %v462
      %v471 = vmul.f32 %v357, %v463
      %v472 = vmul.f32 %v358, %v464
      %v473 = vmul.f32 %v359, %v465
      %v474 = vmul.f32 %v360, %v466
      %v475 = vmul.f32 %v361, %v467
      %477 = vset.pattern.permute.xlu0 0
      %478 = vperm.xlu0 %477, %v411
      %v479 = vpop.permute.xlu0 %478
      %482 = vset.pattern.permute.xlu0 0
      %483 = vperm.xlu0 %482, %v412
      %v484 = vpop.permute.xlu0 %483
      %487 = vset.pattern.permute.xlu0 0
      %488 = vperm.xlu0 %487, %v413
      %v489 = vpop.permute.xlu0 %488
      %492 = vset.pattern.permute.xlu0 0
      %493 = vperm.xlu0 %492, %v414
      %v494 = vpop.permute.xlu0 %493
      %497 = vset.pattern.permute.xlu0 0
      %498 = vperm.xlu0 %497, %v415
      %v499 = vpop.permute.xlu0 %498
      %502 = vset.pattern.permute.xlu0 0
      %503 = vperm.xlu0 %502, %v416
      %v504 = vpop.permute.xlu0 %503
      %507 = vset.pattern.permute.xlu0 0
      %508 = vperm.xlu0 %507, %v417
      %v509 = vpop.permute.xlu0 %508
      %512 = vset.pattern.permute.xlu0 0
      %513 = vperm.xlu0 %512, %v418
      %v514 = vpop.permute.xlu0 %513
      %v516 = vmul.f32 %v338, %v479
      %v517 = vmul.f32 %v339, %v484
      %v518 = vmul.f32 %v340, %v489
      %v519 = vmul.f32 %v341, %v494
      %v520 = vmul.f32 %v342, %v499
      %v521 = vmul.f32 %v343, %v504
      %v522 = vmul.f32 %v344, %v509
      %v523 = vmul.f32 %v345, %v514
      %524 = vst.msk [vmem:[#allocation2] sm:$0xff] %vm370, %v516
      %525 = vst.msk [vmem:[#allocation2 + $0x8] sm:$0xff] %vm370, %v517
      %526 = vst.msk [vmem:[#allocation2 + $0x10] sm:$0xff] %vm370, %v518
      %527 = vst.msk [vmem:[#allocation2 + $0x18] sm:$0xff] %vm370, %v519
      %528 = vst.msk [vmem:[#allocation2 + $0x20] sm:$0xff] %vm370, %v520
      %529 = vst.msk [vmem:[#allocation2 + $0x28] sm:$0xff] %vm370, %v521
      %530 = vst.msk [vmem:[#allocation2 + $0x30] sm:$0xff] %vm370, %v522
      %531 = vst.msk [vmem:[#allocation2 + $0x38] sm:$0xff] %vm370, %v523
      %533 = vset.pattern.permute.xlu0 0
      %534 = vperm.xlu0 %533, %v468
      %v535 = vpop.permute.xlu0 %534
      %538 = vset.pattern.permute.xlu0 0
      %539 = vperm.xlu0 %538, %v469
      %v540 = vpop.permute.xlu0 %539
      %543 = vset.pattern.permute.xlu0 0
      %544 = vperm.xlu0 %543, %v470
      %v545 = vpop.permute.xlu0 %544
      %548 = vset.pattern.permute.xlu0 0
      %549 = vperm.xlu0 %548, %v471
      %v550 = vpop.permute.xlu0 %549
      %553 = vset.pattern.permute.xlu0 0
      %554 = vperm.xlu0 %553, %v472
      %v555 = vpop.permute.xlu0 %554
      %558 = vset.pattern.permute.xlu0 0
      %559 = vperm.xlu0 %558, %v473
      %v560 = vpop.permute.xlu0 %559
      %563 = vset.pattern.permute.xlu0 0
      %564 = vperm.xlu0 %563, %v474
      %v565 = vpop.permute.xlu0 %564
      %568 = vset.pattern.permute.xlu0 0
      %569 = vperm.xlu0 %568, %v475
      %v570 = vpop.permute.xlu0 %569
      %v572 = vmul.f32 %v346, %v535
      %v573 = vmul.f32 %v347, %v540
      %v574 = vmul.f32 %v348, %v545
      %v575 = vmul.f32 %v349, %v550
      %v576 = vmul.f32 %v350, %v555
      %v577 = vmul.f32 %v351, %v560
      %v578 = vmul.f32 %v352, %v565
      %v579 = vmul.f32 %v353, %v570
      %588 = vrot.lane.b32.xlu0 %v572, 32
      %v589 = vpop.permute.xlu0 %588
      %590 = vrot.lane.b32.xlu0 %v573, 32
      %v591 = vpop.permute.xlu0 %590
      %592 = vrot.lane.b32.xlu0 %v574, 32
      %v593 = vpop.permute.xlu0 %592
      %594 = vrot.lane.b32.xlu0 %v575, 32
      %v595 = vpop.permute.xlu0 %594
      %596 = vrot.lane.b32.xlu0 %v576, 32
      %v597 = vpop.permute.xlu0 %596
      %598 = vrot.lane.b32.xlu0 %v577, 32
      %v599 = vpop.permute.xlu0 %598
      %600 = vrot.lane.b32.xlu0 %v578, 32
      %v601 = vpop.permute.xlu0 %600
      %602 = vrot.lane.b32.xlu0 %v579, 32
      %v603 = vpop.permute.xlu0 %602
      %vm612 = vcmask 294144
      %613 = vst.msk [vmem:[#allocation2] sm:$0xff] %vm612, %v589
      %614 = vst.msk [vmem:[#allocation2 + $0x8] sm:$0xff] %vm612, %v591
      %615 = vst.msk [vmem:[#allocation2 + $0x10] sm:$0xff] %vm612, %v593
      %616 = vst.msk [vmem:[#allocation2 + $0x18] sm:$0xff] %vm612, %v595
      %617 = vst.msk [vmem:[#allocation2 + $0x20] sm:$0xff] %vm612, %v597
      %618 = vst.msk [vmem:[#allocation2 + $0x28] sm:$0xff] %vm612, %v599
      %619 = vst.msk [vmem:[#allocation2 + $0x30] sm:$0xff] %vm612, %v601
      %620 = vst.msk [vmem:[#allocation2 + $0x38] sm:$0xff] %vm612, %v603
      %v621 = vld [vmem:[#allocation2] sm:$0xff]
      %v622 = vld [vmem:[#allocation2 + $0x8] sm:$0xff]
      %v623 = vld [vmem:[#allocation2 + $0x10] sm:$0xff]
      %v624 = vld [vmem:[#allocation2 + $0x18] sm:$0xff]
      %v625 = vld [vmem:[#allocation2 + $0x20] sm:$0xff]
      %v626 = vld [vmem:[#allocation2 + $0x28] sm:$0xff]
      %v627 = vld [vmem:[#allocation2 + $0x30] sm:$0xff]
      %v628 = vld [vmem:[#allocation2 + $0x38] sm:$0xff]
      %v629 = vld [vmem:[%s308] sm:$0xff]
      %v630 = vld [vmem:[%s308 + $0x8] sm:$0xff]
      %v631 = vld [vmem:[%s308 + $0x10] sm:$0xff]
      %v632 = vld [vmem:[%s308 + $0x18] sm:$0xff]
      %v633 = vld [vmem:[%s308 + $0x20] sm:$0xff]
      %v634 = vld [vmem:[%s308 + $0x28] sm:$0xff]
      %v635 = vld [vmem:[%s308 + $0x30] sm:$0xff]
      %v636 = vld [vmem:[%s308 + $0x38] sm:$0xff]
      %v637 = vld [vmem:[%s308 + $0x40] sm:$0xff]
      %v638 = vld [vmem:[%s308 + $0x48] sm:$0xff]
      %v639 = vld [vmem:[%s308 + $0x50] sm:$0xff]
      %v640 = vld [vmem:[%s308 + $0x58] sm:$0xff]
      %v641 = vld [vmem:[%s308 + $0x60] sm:$0xff]
      %v642 = vld [vmem:[%s308 + $0x68] sm:$0xff]
      %v643 = vld [vmem:[%s308 + $0x70] sm:$0xff]
      %v644 = vld [vmem:[%s308 + $0x78] sm:$0xff]
      %645 = vxpose.xlu0.b32.start [1/16] %v621, 128
      %646 = vxpose.xlu0.b32.cont [2/16] %v622, 128
      %647 = vxpose.xlu0.b32.cont [3/16] %v623, 128
      %648 = vxpose.xlu0.b32.cont [4/16] %v624, 128
      %649 = vxpose.xlu0.b32.cont [5/16] %v625, 128
      %650 = vxpose.xlu0.b32.cont [6/16] %v626, 128
      %651 = vxpose.xlu0.b32.cont [7/16] %v627, 128
      %652 = vxpose.xlu0.b32.cont [8/16] %v628, 128
      %653 = vxpose.xlu0.b32.cont [9/16] 0.0, 128
      %654 = vxpose.xlu0.b32.cont [10/16] 0.0, 128
      %655 = vxpose.xlu0.b32.cont [11/16] 0.0, 128
      %656 = vxpose.xlu0.b32.cont [12/16] 0.0, 128
      %657 = vxpose.xlu0.b32.cont [13/16] 0.0, 128
      %658 = vxpose.xlu0.b32.cont [14/16] 0.0, 128
      %659 = vxpose.xlu0.b32.cont [15/16] 0.0, 128
      %660 = vxpose.xlu0.b32.end [16/16] 0.0, 128
      %v661 = vpop.trf.xlu0
      %v662 = vpop.trf.xlu0
      %v663 = vpop.trf.xlu0
      %v664 = vpop.trf.xlu0
      %v665 = vpop.trf.xlu0
      %v666 = vpop.trf.xlu0
      %v667 = vpop.trf.xlu0
      %v668 = vpop.trf.xlu0
      %v669 = vpop.trf.xlu0
      %v670 = vpop.trf.xlu0
      %v671 = vpop.trf.xlu0
      %v672 = vpop.trf.xlu0
      %v673 = vpop.trf.xlu0
      %v674 = vpop.trf.xlu0
      %v675 = vpop.trf.xlu0
      %v676 = vpop.trf.xlu0
      %vm677 = vcmask 523264
      %v679 = vsel %vm677, %v661, 0
      %v682 = vsel %vm677, %v662, 0
      %v685 = vsel %vm677, %v663, 0
      %v688 = vsel %vm677, %v664, 0
      %v691 = vsel %vm677, %v665, 0
      %v694 = vsel %vm677, %v666, 0
      %v697 = vsel %vm677, %v667, 0
      %v700 = vsel %vm677, %v668, 0
      %v703 = vsel %vm677, %v669, 0
      %v706 = vsel %vm677, %v670, 0
      %v709 = vsel %vm677, %v671, 0
      %v712 = vsel %vm677, %v672, 0
      %v715 = vsel %vm677, %v673, 0
      %v718 = vsel %vm677, %v674, 0
      %v721 = vsel %vm677, %v675, 0
      %v724 = vsel %vm677, %v676, 0
      %726 = vmatprep.subr.mxu0 0.0
      %727 = vmatpush1.msra.mxu0 0.0
      %728 = vmatprep.subr.mxu0 0.0
      %729 = vmatpush1.msra.mxu0 0.0
      %730 = vmatprep.subr.mxu0 0.0
      %731 = vmatpush1.msra.mxu0 0.0
      %732 = vmatprep.subr.mxu0 0.0
      %733 = vmatpush1.msra.mxu0 0.0
      %734 = vmatprep.subr.mxu0 0.0
      %735 = vmatpush1.msra.mxu0 0.0
      %736 = vmatprep.subr.mxu0 0.0
      %737 = vmatpush1.msra.mxu0 0.0
      %738 = vmatprep.subr.mxu0 0.0
      %739 = vmatpush1.msra.mxu0 0.0
      %740 = vmatprep.subr.mxu0 0.0
      %741 = vmatpush1.msra.mxu0 0.0
      %742 = vmatprep.subr.mxu0 0.0
      %743 = vmatpush1.msra.mxu0 %v628
      %744 = vmatprep.subr.mxu0 0.0
      %745 = vmatpush1.msra.mxu0 %v627
      %746 = vmatprep.subr.mxu0 0.0
      %747 = vmatpush1.msra.mxu0 %v626
      %748 = vmatprep.subr.mxu0 0.0
      %749 = vmatpush1.msra.mxu0 %v625
      %750 = vmatprep.subr.mxu0 0.0
      %751 = vmatpush1.msra.mxu0 %v624
      %752 = vmatprep.subr.mxu0 0.0
      %753 = vmatpush1.msra.mxu0 %v623
      %754 = vmatprep.subr.mxu0 0.0
      %755 = vmatpush1.msra.mxu0 %v622
      %756 = vmatprep.subr.mxu0 0.0
      %757 = vmatpush1.msra.mxu0 %v621
      %758 = vmatprep.subr.mxu0 0.0
      %759 = vmatpush2.msra.mxu0 0.0
      %760 = vmatprep.subr.mxu0 0.0
      %761 = vmatpush2.msra.mxu0 0.0
      %762 = vmatprep.subr.mxu0 0.0
      %763 = vmatpush2.msra.mxu0 0.0
      %764 = vmatprep.subr.mxu0 0.0
      %765 = vmatpush2.msra.mxu0 0.0
      %766 = vmatprep.subr.mxu0 0.0
      %767 = vmatpush2.msra.mxu0 0.0
      %768 = vmatprep.subr.mxu0 0.0
      %769 = vmatpush2.msra.mxu0 0.0
      %770 = vmatprep.subr.mxu0 0.0
      %771 = vmatpush2.msra.mxu0 0.0
      %772 = vmatprep.subr.mxu0 0.0
      %773 = vmatpush2.msra.mxu0 0.0
      %774 = vmatprep.subr.mxu0 0.0
      %775 = vmatpush2.msra.mxu0 0.0
      %776 = vmatprep.subr.mxu0 0.0
      %777 = vmatpush2.msra.mxu0 0.0
      %778 = vmatprep.subr.mxu0 0.0
      %779 = vmatpush2.msra.mxu0 0.0
      %780 = vmatprep.subr.mxu0 0.0
      %781 = vmatpush2.msra.mxu0 0.0
      %782 = vmatprep.subr.mxu0 0.0
      %783 = vmatpush2.msra.mxu0 0.0
      %784 = vmatprep.subr.mxu0 0.0
      %785 = vmatpush2.msra.mxu0 0.0
      %786 = vmatprep.subr.mxu0 0.0
      %787 = vmatpush2.msra.mxu0 0.0
      %788 = vmatprep.subr.mxu0 0.0
      %789 = vmatpush2.msra.mxu0 0.0
      %790 = vmatprep.mubr.f32.mxu0 0.0
      %791 = vmatmul.mubr.f32.gmra.mxu0 %v679
      %v792 = vpop.f32.mrf.mxu0
      %v793 = vadd.f32 0.0, %v792
      %v794 = vpop.f32.mrf.mxu0
      %795 = vmatprep.mubr.f32.mxu0 0.0
      %796 = vmatmul.mubr.f32.gmra.mxu0 %v682
      %v797 = vpop.f32.mrf.mxu0
      %v798 = vadd.f32 0.0, %v797
      %v799 = vpop.f32.mrf.mxu0
      %800 = vmatprep.mubr.f32.mxu0 0.0
      %801 = vmatmul.mubr.f32.gmra.mxu0 %v685
      %v802 = vpop.f32.mrf.mxu0
      %v803 = vadd.f32 0.0, %v802
      %v804 = vpop.f32.mrf.mxu0
      %805 = vmatprep.mubr.f32.mxu0 0.0
      %806 = vmatmul.mubr.f32.gmra.mxu0 %v688
      %v807 = vpop.f32.mrf.mxu0
      %v808 = vadd.f32 0.0, %v807
      %v809 = vpop.f32.mrf.mxu0
      %810 = vmatprep.mubr.f32.mxu0 0.0
      %811 = vmatmul.mubr.f32.gmra.mxu0 %v691
      %v812 = vpop.f32.mrf.mxu0
      %v813 = vadd.f32 0.0, %v812
      %v814 = vpop.f32.mrf.mxu0
      %815 = vmatprep.mubr.f32.mxu0 0.0
      %816 = vmatmul.mubr.f32.gmra.mxu0 %v694
      %v817 = vpop.f32.mrf.mxu0
      %v818 = vadd.f32 0.0, %v817
      %v819 = vpop.f32.mrf.mxu0
      %820 = vmatprep.mubr.f32.mxu0 0.0
      %821 = vmatmul.mubr.f32.gmra.mxu0 %v697
      %v822 = vpop.f32.mrf.mxu0
      %v823 = vadd.f32 0.0, %v822
      %v824 = vpop.f32.mrf.mxu0
      %825 = vmatprep.mubr.f32.mxu0 0.0
      %826 = vmatmul.mubr.f32.gmra.mxu0 %v700
      %v827 = vpop.f32.mrf.mxu0
      %v828 = vadd.f32 0.0, %v827
      %v829 = vpop.f32.mrf.mxu0
      %830 = vmatprep.mubr.f32.mxu0 0.0
      %831 = vmatmul.mubr.f32.gmra.mxu0 %v703
      %v832 = vpop.f32.mrf.mxu0
      %v833 = vadd.f32 0.0, %v832
      %v834 = vpop.f32.mrf.mxu0
      %835 = vmatprep.mubr.f32.mxu0 0.0
      %836 = vmatmul.mubr.f32.gmra.mxu0 %v706
      %v837 = vpop.f32.mrf.mxu0
      %v838 = vadd.f32 0.0, %v837
      %v839 = vpop.f32.mrf.mxu0
      %840 = vmatprep.mubr.f32.mxu0 0.0
      %841 = vmatmul.mubr.f32.gmra.mxu0 %v709
      %v842 = vpop.f32.mrf.mxu0
      %v843 = vadd.f32 0.0, %v842
      %v844 = vpop.f32.mrf.mxu0
      %845 = vmatprep.mubr.f32.mxu0 0.0
      %846 = vmatmul.mubr.f32.gmra.mxu0 %v712
      %v847 = vpop.f32.mrf.mxu0
      %v848 = vadd.f32 0.0, %v847
      %v849 = vpop.f32.mrf.mxu0
      %850 = vmatprep.mubr.f32.mxu0 0.0
      %851 = vmatmul.mubr.f32.gmra.mxu0 %v715
      %v852 = vpop.f32.mrf.mxu0
      %v853 = vadd.f32 0.0, %v852
      %v854 = vpop.f32.mrf.mxu0
      %855 = vmatprep.mubr.f32.mxu0 0.0
      %856 = vmatmul.mubr.f32.gmra.mxu0 %v718
      %v857 = vpop.f32.mrf.mxu0
      %v858 = vadd.f32 0.0, %v857
      %v859 = vpop.f32.mrf.mxu0
      %860 = vmatprep.mubr.f32.mxu0 0.0
      %861 = vmatmul.mubr.f32.gmra.mxu0 %v721
      %v862 = vpop.f32.mrf.mxu0
      %v863 = vadd.f32 0.0, %v862
      %v864 = vpop.f32.mrf.mxu0
      %865 = vmatprep.mubr.f32.mxu0 0.0
      %866 = vmatmul.mubr.f32.gmra.mxu0 %v724
      %v867 = vpop.f32.mrf.mxu0
      %v868 = vadd.f32 0.0, %v867
      %v869 = vpop.f32.mrf.mxu0
      %870 = vdwg.mxu0
      %v871 = vadd.f32 %v629, %v793
      %v872 = vadd.f32 %v630, %v798
      %v873 = vadd.f32 %v631, %v803
      %v874 = vadd.f32 %v632, %v808
      %v875 = vadd.f32 %v633, %v813
      %v876 = vadd.f32 %v634, %v818
      %v877 = vadd.f32 %v635, %v823
      %v878 = vadd.f32 %v636, %v828
      %v879 = vadd.f32 %v637, %v833
      %v880 = vadd.f32 %v638, %v838
      %v881 = vadd.f32 %v639, %v843
      %v882 = vadd.f32 %v640, %v848
      %v883 = vadd.f32 %v641, %v853
      %v884 = vadd.f32 %v642, %v858
      %v885 = vadd.f32 %v643, %v863
      %v886 = vadd.f32 %v644, %v868
      %887 = vst [vmem:[%s308] sm:$0xff] %v871
      %888 = vst [vmem:[%s308 + $0x8] sm:$0xff] %v872
      %889 = vst [vmem:[%s308 + $0x10] sm:$0xff] %v873
      %890 = vst [vmem:[%s308 + $0x18] sm:$0xff] %v874
      %891 = vst [vmem:[%s308 + $0x20] sm:$0xff] %v875
      %892 = vst [vmem:[%s308 + $0x28] sm:$0xff] %v876
      %893 = vst [vmem:[%s308 + $0x30] sm:$0xff] %v877
      %894 = vst [vmem:[%s308 + $0x38] sm:$0xff] %v878
      %895 = vst [vmem:[%s308 + $0x40] sm:$0xff] %v879
      %896 = vst [vmem:[%s308 + $0x48] sm:$0xff] %v880
      %897 = vst [vmem:[%s308 + $0x50] sm:$0xff] %v881
      %898 = vst [vmem:[%s308 + $0x58] sm:$0xff] %v882
      %899 = vst [vmem:[%s308 + $0x60] sm:$0xff] %v883
      %900 = vst [vmem:[%s308 + $0x68] sm:$0xff] %v884
      %901 = vst [vmem:[%s308 + $0x70] sm:$0xff] %v885
      %902 = vst [vmem:[%s308 + $0x78] sm:$0xff] %v886
      %p903 = scmp.lt.s32.totalorder %s19, 1
      %s904 = scalar_select %p903, %s19, 1
      %p905 = scmp.lt.s32.totalorder %s20, 0
      %s906 = scalar_select %p905, %s20, 0
      %s907 = smul.addr %s906, 16
      %s908 = smul.addr %s904, 16
      %s909 = sadd.s32 %s907, %s908
      %s910 = smul.addr %s909, 8
      %s911 = scalar_lea.vmem %s3, %s910
      // Predicated region
      $region37: #{whitened_kmeans_loss.1} parent=31 // pred_check
        %p912 = pneg %p143
      $region38: #{whitened_kmeans_loss.1} parent=31 // pred_check_branch
        %914 = sbr.rel (%p912) target = $region40
      $region39: #{whitened_kmeans_loss.1} parent=31 // pred_region
        _
      $region40: #{whitened_kmeans_loss.1} parent=31 // pred_fallthru
        _
    $region32: #{whitened_kmeans_loss.1} parent=5 // pred_fallthru
      _
    %p915 = scmp.le.s32.totalorder 2, %s9
    // Predicated region
    $region41: #{whitened_kmeans_loss.1} parent=5 // pred_check
      %p916 = pneg %p915
    $region42: #{whitened_kmeans_loss.1} parent=5 // pred_check_branch
      %918 = sbr.rel (%p916) target = $region44
    $region43: #{whitened_kmeans_loss.1} parent=5 // pred_region
      %s919 = ssub.s32 %s9, 2
      // Predicated region
      $region45: #{whitened_kmeans_loss.1} parent=43 // pred_check
        %p920 = pneg %p149
      $region46: #{whitened_kmeans_loss.1} parent=43 // pred_check_branch
        %922 = sbr.rel (%p920) target = $region48
      $region47: #{whitened_kmeans_loss.1} parent=43 // pred_region
        %p923 = scmp.lt.s32.totalorder %s22, 1
        %s924 = scalar_select %p923, %s22, 1
        %p925 = scmp.lt.s32.totalorder %s23, 0
        %s926 = scalar_select %p925, %s23, 0
        %s927 = smul.addr %s926, 16
        %s928 = smul.addr %s924, 16
        %s929 = sadd.s32 %s927, %s928
        %s930 = smul.addr %s929, 8
        %s931 = scalar_lea.vmem %s3, %s930
      $region48: #{whitened_kmeans_loss.1} parent=43 // pred_fallthru
        _
    $region44: #{whitened_kmeans_loss.1} parent=5 // pred_fallthru
      _
  $region6: #{whitened_kmeans_loss.1} parent=0 // loop_footer
    %s13 = sadd.s32 1, %s9
  $region7: #{whitened_kmeans_loss.1} parent=0 // loop_footer_branch
    %8 = sbr.rel target = $region3
  $region8: #{whitened_kmeans_loss.1} parent=0 // loop_exit
    _

// kernel: custom-call.23
$region0: #{custom-call.23}
  %s0 = inlined_call_operand.vmem [shape: f32[2,1,32,32], index: 0, kind: input, shape index: {}]
  %s1 = inlined_call_operand.vmem [shape: f32[2,1,32,32], index: 1, kind: output, shape index: {}]
  $region1: #{custom-call.23} parent=0
    #allocation0 [shape = 'u8[32768]{0}', space=vmem, size = 0x8000, scoped, tag = 'operand span for operand 0']
    #allocation1 [shape = 'u8[32768]{0}', space=vmem, size = 0x8000, scoped, tag = 'operand span for operand 1']
    loop: start=0, step=1, limit=4
    $region2: #{custom-call.23} parent=1 // loop_pre_header
      _
    $region3: #{custom-call.23} parent=1 // loop_header
      %s3 = sphi 0, %s7
      %p4 = scmp.ge.s32.totalorder %s3, 4
      %s10 = sphi 0, %s36
      %s11 = sphi 0, %s32
      %s12 = sphi 0, %s28
      %s13 = sphi 0, %s24
      %s14 = sphi 0, %s10
      %s15 = sphi 0, %s11
      %s16 = sphi 0, %s12
      %s17 = sphi 0, %s13
      %s18 = sphi 0, %s14
      %s19 = sphi 0, %s15
      %s20 = sphi 0, %s16
      %s21 = sphi 0, %s17
    $region4: #{custom-call.23} parent=1 // loop_header_branch
      %6 = sbr.rel (%p4) target = $region8
    $region5: #{custom-call.23} parent=1 // loop_body
      %s8 = ssub.s32 %s3, 1
      %s9 = ssub.s32 %s3, 2
      %s22 = sadd.s32 1, %s13
      %p23 = scmp.ge.s32.totalorder %s22, 1
      %s24 = scalar_select %p23, 0, %s22
      %s25 = sadd.s32 1, %s12
      %s26 = scalar_select %p23, %s25, %s12
      %p27 = scmp.ge.s32.totalorder %s26, 1
      %s28 = scalar_select %p27, 0, %s26
      %s29 = sadd.s32 1, %s11
      %s30 = scalar_select %p27, %s29, %s11
      %p31 = scmp.ge.s32.totalorder %s30, 1
      %s32 = scalar_select %p31, 0, %s30
      %s33 = sadd.s32 1, %s10
      %s34 = scalar_select %p31, %s33, %s10
      %p35 = scmp.ge.s32.totalorder %s34, 2
      %s36 = scalar_select %p35, 0, %s34
      %p37 = scmp.le.s32.totalorder 1, %s3
      %p38 = scmp.lt.s32.totalorder %s3, 3
      %p39 = pnand %p37, %p38
      %p40 = pneg %p39
      // Predicated region
      $region9: #{custom-call.23} parent=5 // pred_check
        _
      $region10: #{custom-call.23} parent=5 // pred_check_branch
        %42 = sbr.rel (%p39) target = $region12
      $region11: #{custom-call.23} parent=5 // pred_region
        %s43 = ssub.s32 %s3, 1
      $region12: #{custom-call.23} parent=5 // pred_fallthru
        _
      %p44 = scmp.lt.s32.totalorder %s3, 2
      // Predicated region
      $region13: #{custom-call.23} parent=5 // pred_check
        %p45 = pneg %p44
      $region14: #{custom-call.23} parent=5 // pred_check_branch
        %47 = sbr.rel (%p45) target = $region16
      $region15: #{custom-call.23} parent=5 // pred_region
        %s48 = sand.u32 %s3, 1
        %s49 = sand.u32 %s3, 1
        %s50 = smul.addr %s49, 32
        %s51 = scalar_lea.vmem [#allocation0], %s50
        %s52 = sadd.s32 %s13, %s12
        %s53 = smul.addr %s11, 4
        %s54 = sadd.s32 %s52, %s53
        %s55 = smul.addr %s10, 4
        %s56 = sadd.s32 %s54, %s55
        %s57 = smul.addr %s56, 8
        %s58 = scalar_lea.vmem %s0, %s57
        // Predicated region
        $region17: #{custom-call.23} parent=15 // pred_check
          _
        $region18: #{custom-call.23} parent=15 // pred_check_branch
          %60 = sbr.rel (0) target = $region20
        $region19: #{custom-call.23} parent=15 // pred_region
          // Predicated region
          $region21: #{custom-call.23} parent=19 // pred_check
            _
          $region22: #{custom-call.23} parent=19 // pred_check_branch
            %62 = sbr.rel (0) target = $region24
          $region23: #{custom-call.23} parent=19 // pred_region
            // Predicated region
            $region36: #{custom-call.23} parent=23 // pred_check
              _
            $region37: #{custom-call.23} parent=23 // pred_check_branch
              %84 = sbr.rel (0) target = $region39
            $region38: #{custom-call.23} parent=23 // pred_region
              loop: start=0, step=1, limit=1
              $region40: #{custom-call.23} parent=38 // loop_pre_header
                _
              $region41: #{custom-call.23} parent=38 // loop_header
                %s86 = sphi 0, %s90
                %p87 = scmp.ge.s32.totalorder %s86, 1
                %s91 = sphi %s58, %s58
                %s92 = sphi %s51, %s51
              $region42: #{custom-call.23} parent=38 // loop_header_branch
                %89 = sbr.rel (%p87) target = $region46
              $region43: #{custom-call.23} parent=38 // loop_body
                %v93 = vld [vmem:[%s91] sm:$0xff]
                %94 = vst [vmem:[%s92] sm:$0xff] %v93
                %v95 = vld [vmem:[%s91 + $0x8] sm:$0xff]
                %96 = vst [vmem:[%s92 + $0x8] sm:$0xff] %v95
                %v97 = vld [vmem:[%s91 + $0x10] sm:$0xff]
                %98 = vst [vmem:[%s92 + $0x10] sm:$0xff] %v97
                %v99 = vld [vmem:[%s91 + $0x18] sm:$0xff]
                %100 = vst [vmem:[%s92 + $0x18] sm:$0xff] %v99
              $region44: #{custom-call.23} parent=38 // loop_footer
                %s90 = sadd.s32 1, %s86
              $region45: #{custom-call.23} parent=38 // loop_footer_branch
                %85 = sbr.rel target = $region41
              $region46: #{custom-call.23} parent=38 // loop_exit
                _
            $region39: #{custom-call.23} parent=23 // pred_fallthru
              _
            // Predicated region
            $region47: #{custom-call.23} parent=23 // pred_check
              _
            $region48: #{custom-call.23} parent=23 // pred_check_branch
              %102 = sbr.rel target = $region50
            $region49: #{custom-call.23} parent=23 // pred_region
              _
            $region50: #{custom-call.23} parent=23 // pred_fallthru
              _
          $region24: #{custom-call.23} parent=19 // pred_fallthru
            _
          // Predicated region
          $region25: #{custom-call.23} parent=19 // pred_check
            _
          $region26: #{custom-call.23} parent=19 // pred_check_branch
            %64 = sbr.rel target = $region28
          $region27: #{custom-call.23} parent=19 // pred_region
            %s66 = ssub.s32 256, 1
            loop: start=0, step=1, limit=1
            $region29: #{custom-call.23} parent=27 // loop_pre_header
              _
            $region30: #{custom-call.23} parent=27 // loop_header
              %s68 = sphi 0, %s72
              %p69 = scmp.ge.s32.totalorder %s68, 1
              %s73 = sphi %s58, %s58
              %s74 = sphi %s51, %s51
            $region31: #{custom-call.23} parent=27 // loop_header_branch
              %71 = sbr.rel (%p69) target = $region35
            $region32: #{custom-call.23} parent=27 // loop_body
              %v75 = vld [vmem:[%s73] sm:%s66]
              %76 = vst [vmem:[%s74] sm:%s66] %v75
              %v77 = vld [vmem:[%s73 + $0x8] sm:%s66]
              %78 = vst [vmem:[%s74 + $0x8] sm:%s66] %v77
              %v79 = vld [vmem:[%s73 + $0x10] sm:%s66]
              %80 = vst [vmem:[%s74 + $0x10] sm:%s66] %v79
              %v81 = vld [vmem:[%s73 + $0x18] sm:%s66]
              %82 = vst [vmem:[%s74 + $0x18] sm:%s66] %v81
            $region33: #{custom-call.23} parent=27 // loop_footer
              %s72 = sadd.s32 1, %s68
            $region34: #{custom-call.23} parent=27 // loop_footer_branch
              %67 = sbr.rel target = $region30
            $region35: #{custom-call.23} parent=27 // loop_exit
              _
          $region28: #{custom-call.23} parent=19 // pred_fallthru
            _
        $region20: #{custom-call.23} parent=15 // pred_fallthru
          _
        %103 = vnop
      $region16: #{custom-call.23} parent=5 // pred_fallthru
        _
      %p104 = scmp.le.s32.totalorder 1, %s3
      %p105 = scmp.lt.s32.totalorder %s3, 3
      %p106 = pnand %p104, %p105
      %p107 = pneg %p106
      // Predicated region
      $region51: #{custom-call.23} parent=5 // pred_check
        _
      $region52: #{custom-call.23} parent=5 // pred_check_branch
        %109 = sbr.rel (%p106) target = $region54
      $region53: #{custom-call.23} parent=5 // pred_region
        #allocation2 [shape = 'f32[32,32]{1,0}', space=vmem, size = 0x4000, scoped, tag = 'rescaled input a']
        %s110 = ssub.s32 %s3, 1
        %s111 = sand.u32 %s8, 1
        %s112 = sand.u32 %s8, 1
        %s113 = smul.addr %s112, 32
        %s114 = scalar_lea.vmem [#allocation0], %s113
        %s115 = sand.u32 %s8, 1
        %s116 = sand.u32 %s8, 1
        %s117 = smul.addr %s116, 32
        %s118 = scalar_lea.vmem [#allocation0], %s117
        %s119 = sand.u32 %s8, 1
        %s120 = sand.u32 %s8, 1
        %s121 = smul.addr %s120, 32
        %s122 = scalar_lea.vmem [#allocation1], %s121
        %v123 = vlaneseq
        %v124 = vand.u32 %v123, 127
        %vm125 = vcmp.lt.s32.totalorder %v124, 32
        %v126 = vlaneseq
        %v127 = vshrl.u32 %v126, 7
        %vm129 = vcmp.eq.s32.totalorder %v127, %v124
        %v130 = vld [vmem:[%s114] sm:$0xff]
        %v131 = vsel %vm129, %v130, 0.0
        %132 = vadd.xlane.f32.xlu0 %v131
        %v133 = vpop.xlane.xlu0 %132
        %vm134 = vcmp.le.s32.totalorder %v127, %v124
        %vm135 = vmand %vm134, %vm125
        %v136 = vsel %vm135, %v130, 0.0
        %v137 = vrcp.pop %v133
        %v138 = vmul.f32 %v136, %v137
        %139 = vst [vmem:[#allocation2] sm:$0xff] %v138
        %s140 = scalar_lea.vmem %s114, 8 [#allocation0]
        %s141 = scalar_lea.vmem [#allocation2], 8
        %v142 = vlaneseq
        %v143 = vshrl.u32 %v142, 7
        %v144 = vadd.s32 %v143, 8
        %vm145 = vcmp.eq.s32.totalorder %v144, %v124
        %v146 = vld [vmem:[%s140] sm:$0xff]
        %v147 = vsel %vm145, %v146, 0.0
        %148 = vadd.xlane.f32.xlu0 %v147
        %v149 = vpop.xlane.xlu0 %148
        %vm150 = vcmp.le.s32.totalorder %v144, %v124
        %vm151 = vmand %vm150, %vm125
        %v152 = vsel %vm151, %v146, 0.0
        %v153 = vrcp.pop %v149
        %v154 = vmul.f32 %v152, %v153
        %155 = vst [vmem:[%s141] sm:$0xff] %v154
        %s156 = scalar_lea.vmem %s114, 16 [#allocation0]
        %s157 = scalar_lea.vmem [#allocation2], 16
        %v158 = vlaneseq
        %v159 = vshrl.u32 %v158, 7
        %v160 = vadd.s32 %v159, 16
        %vm161 = vcmp.eq.s32.totalorder %v160, %v124
        %v162 = vld [vmem:[%s156] sm:$0xff]
        %v163 = vsel %vm161, %v162, 0.0
        %164 = vadd.xlane.f32.xlu0 %v163
        %v165 = vpop.xlane.xlu0 %164
        %vm166 = vcmp.le.s32.totalorder %v160, %v124
        %vm167 = vmand %vm166, %vm125
        %v168 = vsel %vm167, %v162, 0.0
        %v169 = vrcp.pop %v165
        %v170 = vmul.f32 %v168, %v169
        %171 = vst [vmem:[%s157] sm:$0xff] %v170
        %s172 = scalar_lea.vmem %s114, 24 [#allocation0]
        %s173 = scalar_lea.vmem [#allocation2], 24
        %v174 = vlaneseq
        %v175 = vshrl.u32 %v174, 7
        %v176 = vadd.s32 %v175, 24
        %vm177 = vcmp.eq.s32.totalorder %v176, %v124
        %v178 = vld [vmem:[%s172] sm:$0xff]
        %v179 = vsel %vm177, %v178, 0.0
        %180 = vadd.xlane.f32.xlu0 %v179
        %v181 = vpop.xlane.xlu0 %180
        %vm182 = vcmp.le.s32.totalorder %v176, %v124
        %vm183 = vmand %vm182, %vm125
        %v184 = vsel %vm183, %v178, 0.0
        %v185 = vrcp.pop %v181
        %v186 = vmul.f32 %v184, %v185
        %187 = vst [vmem:[%s173] sm:$0xff] %v186
        %v188 = vlaneseq
        %v189 = vand.u32 %v188, 127
        %v190 = vlaneseq
        %v191 = vshrl.u32 %v190, 7
        %vm193 = vcmp.eq.s32.totalorder %v189, %v191
        %v194 = vsel %vm193, -1.0, 0.0
        %v195 = vlaneseq
        %v196 = vand.u32 %v195, 127
        %v197 = vlaneseq
        %v198 = vshrl.u32 %v197, 7
        %v199 = vadd.s32 %v198, 8
        %vm200 = vcmp.eq.s32.totalorder %v196, %v199
        %v201 = vsel %vm200, -1.0, 0.0
        %v202 = vlaneseq
        %v203 = vand.u32 %v202, 127
        %v204 = vlaneseq
        %v205 = vshrl.u32 %v204, 7
        %v206 = vadd.s32 %v205, 16
        %vm207 = vcmp.eq.s32.totalorder %v203, %v206
        %v208 = vsel %vm207, -1.0, 0.0
        %v209 = vlaneseq
        %v210 = vand.u32 %v209, 127
        %v211 = vlaneseq
        %v212 = vshrl.u32 %v211, 7
        %v213 = vadd.s32 %v212, 24
        %vm214 = vcmp.eq.s32.totalorder %v210, %v213
        %v215 = vlaneseq
        %v216 = vand.u32 %v215, 127
        %vm217 = vcmp.eq.s32.totalorder %v216, 31
        %v218 = vsel %vm217, 1.0, -1.0
        %v219 = vsel %vm214, %v218, 0.0
        %s220 = scalar_lea.vmem [#allocation2], 30
        %v221 = vld [vmem:[%s220] ss:$0 sm:$0xff]
        %v222 = vxor.u32 %v221, 2147483648
        %v223 = vlaneseq
        %v224 = vand.u32 %v223, 127
        %vm225 = vcmp.eq.s32.totalorder %v224, 30
        %v226 = vmul.f32 %v222, %v219
        %227 = vadd.xlane.f32.xlu0 %v226
        %v228 = vpop.xlane.xlu0 %227
        %v229 = vsel %vm225, %v228, %v219
        %s230 = scalar_lea.vmem [#allocation2], 29
        %v231 = vld [vmem:[%s230] ss:$0 sm:$0xff]
        %v232 = vxor.u32 %v231, 2147483648
        %v233 = vlaneseq
        %v234 = vand.u32 %v233, 127
        %vm235 = vcmp.eq.s32.totalorder %v234, 29
        %v236 = vmul.f32 %v232, %v229
        %237 = vadd.xlane.f32.xlu0 %v236
        %v238 = vpop.xlane.xlu0 %237
        %v239 = vsel %vm235, %v238, %v229
        %s240 = scalar_lea.vmem [#allocation2], 28
        %v241 = vld [vmem:[%s240] ss:$0 sm:$0xff]
        %v242 = vxor.u32 %v241, 2147483648
        %v243 = vlaneseq
        %v244 = vand.u32 %v243, 127
        %vm245 = vcmp.eq.s32.totalorder %v244, 28
        %v246 = vmul.f32 %v242, %v239
        %247 = vadd.xlane.f32.xlu0 %v246
        %v248 = vpop.xlane.xlu0 %247
        %v249 = vsel %vm245, %v248, %v239
        %s250 = scalar_lea.vmem [#allocation2], 27
        %v251 = vld [vmem:[%s250] ss:$0 sm:$0xff]
        %v252 = vxor.u32 %v251, 2147483648
        %v253 = vlaneseq
        %v254 = vand.u32 %v253, 127
        %vm255 = vcmp.eq.s32.totalorder %v254, 27
        %v256 = vmul.f32 %v252, %v249
        %257 = vadd.xlane.f32.xlu0 %v256
        %v258 = vpop.xlane.xlu0 %257
        %v259 = vsel %vm255, %v258, %v249
        %s260 = scalar_lea.vmem [#allocation2], 26
        %v261 = vld [vmem:[%s260] ss:$0 sm:$0xff]
        %v262 = vxor.u32 %v261, 2147483648
        %v263 = vlaneseq
        %v264 = vand.u32 %v263, 127
        %vm265 = vcmp.eq.s32.totalorder %v264, 26
        %v266 = vmul.f32 %v262, %v259
        %267 = vadd.xlane.f32.xlu0 %v266
        %v268 = vpop.xlane.xlu0 %267
        %v269 = vsel %vm265, %v268, %v259
        %s270 = scalar_lea.vmem [#allocation2], 25
        %v271 = vld [vmem:[%s270] ss:$0 sm:$0xff]
        %v272 = vxor.u32 %v271, 2147483648
        %v273 = vlaneseq
        %v274 = vand.u32 %v273, 127
        %vm275 = vcmp.eq.s32.totalorder %v274, 25
        %v276 = vmul.f32 %v272, %v269
        %277 = vadd.xlane.f32.xlu0 %v276
        %v278 = vpop.xlane.xlu0 %277
        %v279 = vsel %vm275, %v278, %v269
        %s280 = scalar_lea.vmem [#allocation2], 24
        %v281 = vld [vmem:[%s280] ss:$0 sm:$0xff]
        %v282 = vxor.u32 %v281, 2147483648
        %v283 = vlaneseq
        %v284 = vand.u32 %v283, 127
        %vm285 = vcmp.eq.s32.totalorder %v284, 24
        %v286 = vmul.f32 %v282, %v279
        %287 = vadd.xlane.f32.xlu0 %v286
        %v288 = vpop.xlane.xlu0 %287
        %v289 = vsel %vm285, %v288, %v279
        %s290 = scalar_lea.vmem [#allocation2], 23
        %v291 = vld [vmem:[%s290] ss:$0 sm:$0xff]
        %v292 = vxor.u32 %v291, 2147483648
        %v293 = vlaneseq
        %v294 = vand.u32 %v293, 127
        %vm295 = vcmp.eq.s32.totalorder %v294, 23
        %v296 = vmul.f32 %v292, %v208
        %297 = vadd.xlane.f32.xlu0 %v296
        %v298 = vpop.xlane.xlu0 %297
        %v299 = vsel %vm295, %v298, %v208
        %v300 = vmul.f32 %v292, %v289
        %301 = vadd.xlane.f32.xlu0 %v300
        %v302 = vpop.xlane.xlu0 %301
        %v303 = vsel %vm295, %v302, %v289
        %s304 = scalar_lea.vmem [#allocation2], 22
        %v305 = vld [vmem:[%s304] ss:$0 sm:$0xff]
        %v306 = vxor.u32 %v305, 2147483648
        %v307 = vlaneseq
        %v308 = vand.u32 %v307, 127
        %vm309 = vcmp.eq.s32.totalorder %v308, 22
        %v310 = vmul.f32 %v306, %v299
        %311 = vadd.xlane.f32.xlu0 %v310
        %v312 = vpop.xlane.xlu0 %311
        %v313 = vsel %vm309, %v312, %v299
        %v314 = vmul.f32 %v306, %v303
        %315 = vadd.xlane.f32.xlu0 %v314
        %v316 = vpop.xlane.xlu0 %315
        %v317 = vsel %vm309, %v316, %v303
        %s318 = scalar_lea.vmem [#allocation2], 21
        %v319 = vld [vmem:[%s318] ss:$0 sm:$0xff]
        %v320 = vxor.u32 %v319, 2147483648
        %v321 = vlaneseq
        %v322 = vand.u32 %v321, 127
        %vm323 = vcmp.eq.s32.totalorder %v322, 21
        %v324 = vmul.f32 %v320, %v313
        %325 = vadd.xlane.f32.xlu0 %v324
        %v326 = vpop.xlane.xlu0 %325
        %v327 = vsel %vm323, %v326, %v313
        %v328 = vmul.f32 %v320, %v317
        %329 = vadd.xlane.f32.xlu0 %v328
        %v330 = vpop.xlane.xlu0 %329
        %v331 = vsel %vm323, %v330, %v317
        %s332 = scalar_lea.vmem [#allocation2], 20
        %v333 = vld [vmem:[%s332] ss:$0 sm:$0xff]
        %v334 = vxor.u32 %v333, 2147483648
        %v335 = vlaneseq
        %v336 = vand.u32 %v335, 127
        %vm337 = vcmp.eq.s32.totalorder %v336, 20
        %v338 = vmul.f32 %v334, %v327
        %339 = vadd.xlane.f32.xlu0 %v338
        %v340 = vpop.xlane.xlu0 %339
        %v341 = vsel %vm337, %v340, %v327
        %v342 = vmul.f32 %v334, %v331
        %343 = vadd.xlane.f32.xlu0 %v342
        %v344 = vpop.xlane.xlu0 %343
        %v345 = vsel %vm337, %v344, %v331
        %s346 = scalar_lea.vmem [#allocation2], 19
        %v347 = vld [vmem:[%s346] ss:$0 sm:$0xff]
        %v348 = vxor.u32 %v347, 2147483648
        %v349 = vlaneseq
        %v350 = vand.u32 %v349, 127
        %vm351 = vcmp.eq.s32.totalorder %v350, 19
        %v352 = vmul.f32 %v348, %v341
        %353 = vadd.xlane.f32.xlu0 %v352
        %v354 = vpop.xlane.xlu0 %353
        %v355 = vsel %vm351, %v354, %v341
        %v356 = vmul.f32 %v348, %v345
        %357 = vadd.xlane.f32.xlu0 %v356
        %v358 = vpop.xlane.xlu0 %357
        %v359 = vsel %vm351, %v358, %v345
        %s360 = scalar_lea.vmem [#allocation2], 18
        %v361 = vld [vmem:[%s360] ss:$0 sm:$0xff]
        %v362 = vxor.u32 %v361, 2147483648
        %v363 = vlaneseq
        %v364 = vand.u32 %v363, 127
        %vm365 = vcmp.eq.s32.totalorder %v364, 18
        %v366 = vmul.f32 %v362, %v355
        %367 = vadd.xlane.f32.xlu0 %v366
        %v368 = vpop.xlane.xlu0 %367
        %v369 = vsel %vm365, %v368, %v355
        %v370 = vmul.f32 %v362, %v359
        %371 = vadd.xlane.f32.xlu0 %v370
        %v372 = vpop.xlane.xlu0 %371
        %v373 = vsel %vm365, %v372, %v359
        %s374 = scalar_lea.vmem [#allocation2], 17
        %v375 = vld [vmem:[%s374] ss:$0 sm:$0xff]
        %v376 = vxor.u32 %v375, 2147483648
        %v377 = vlaneseq
        %v378 = vand.u32 %v377, 127
        %vm379 = vcmp.eq.s32.totalorder %v378, 17
        %v380 = vmul.f32 %v376, %v369
        %381 = vadd.xlane.f32.xlu0 %v380
        %v382 = vpop.xlane.xlu0 %381
        %v383 = vsel %vm379, %v382, %v369
        %v384 = vmul.f32 %v376, %v373
        %385 = vadd.xlane.f32.xlu0 %v384
        %v386 = vpop.xlane.xlu0 %385
        %v387 = vsel %vm379, %v386, %v373
        %s388 = scalar_lea.vmem [#allocation2], 16
        %v389 = vld [vmem:[%s388] ss:$0 sm:$0xff]
        %v390 = vxor.u32 %v389, 2147483648
        %v391 = vlaneseq
        %v392 = vand.u32 %v391, 127
        %vm393 = vcmp.eq.s32.totalorder %v392, 16
        %v394 = vmul.f32 %v390, %v383
        %395 = vadd.xlane.f32.xlu0 %v394
        %v396 = vpop.xlane.xlu0 %395
        %v397 = vsel %vm393, %v396, %v383
        %v398 = vmul.f32 %v390, %v387
        %399 = vadd.xlane.f32.xlu0 %v398
        %v400 = vpop.xlane.xlu0 %399
        %v401 = vsel %vm393, %v400, %v387
        %s402 = scalar_lea.vmem [#allocation2], 15
        %v403 = vld [vmem:[%s402] ss:$0 sm:$0xff]
        %v404 = vxor.u32 %v403, 2147483648
        %v405 = vlaneseq
        %v406 = vand.u32 %v405, 127
        %vm407 = vcmp.eq.s32.totalorder %v406, 15
        %v408 = vmul.f32 %v404, %v201
        %409 = vadd.xlane.f32.xlu0 %v408
        %v410 = vpop.xlane.xlu0 %409
        %v411 = vsel %vm407, %v410, %v201
        %v412 = vmul.f32 %v404, %v397
        %413 = vadd.xlane.f32.xlu0 %v412
        %v414 = vpop.xlane.xlu0 %413
        %v415 = vsel %vm407, %v414, %v397
        %v416 = vmul.f32 %v404, %v401
        %417 = vadd.xlane.f32.xlu0 %v416
        %v418 = vpop.xlane.xlu0 %417
        %v419 = vsel %vm407, %v418, %v401
        %s420 = scalar_lea.vmem [#allocation2], 14
        %v421 = vld [vmem:[%s420] ss:$0 sm:$0xff]
        %v422 = vxor.u32 %v421, 2147483648
        %v423 = vlaneseq
        %v424 = vand.u32 %v423, 127
        %vm425 = vcmp.eq.s32.totalorder %v424, 14
        %v426 = vmul.f32 %v422, %v411
        %427 = vadd.xlane.f32.xlu0 %v426
        %v428 = vpop.xlane.xlu0 %427
        %v429 = vsel %vm425, %v428, %v411
        %v430 = vmul.f32 %v422, %v415
        %431 = vadd.xlane.f32.xlu0 %v430
        %v432 = vpop.xlane.xlu0 %431
        %v433 = vsel %vm425, %v432, %v415
        %v434 = vmul.f32 %v422, %v419
        %435 = vadd.xlane.f32.xlu0 %v434
        %v436 = vpop.xlane.xlu0 %435
        %v437 = vsel %vm425, %v436, %v419
        %s438 = scalar_lea.vmem [#allocation2], 13
        %v439 = vld [vmem:[%s438] ss:$0 sm:$0xff]
        %v440 = vxor.u32 %v439, 2147483648
        %v441 = vlaneseq
        %v442 = vand.u32 %v441, 127
        %vm443 = vcmp.eq.s32.totalorder %v442, 13
        %v444 = vmul.f32 %v440, %v429
        %445 = vadd.xlane.f32.xlu0 %v444
        %v446 = vpop.xlane.xlu0 %445
        %v447 = vsel %vm443, %v446, %v429
        %v448 = vmul.f32 %v440, %v433
        %449 = vadd.xlane.f32.xlu0 %v448
        %v450 = vpop.xlane.xlu0 %449
        %v451 = vsel %vm443, %v450, %v433
        %v452 = vmul.f32 %v440, %v437
        %453 = vadd.xlane.f32.xlu0 %v452
        %v454 = vpop.xlane.xlu0 %453
        %v455 = vsel %vm443, %v454, %v437
        %s456 = scalar_lea.vmem [#allocation2], 12
        %v457 = vld [vmem:[%s456] ss:$0 sm:$0xff]
        %v458 = vxor.u32 %v457, 2147483648
        %v459 = vlaneseq
        %v460 = vand.u32 %v459, 127
        %vm461 = vcmp.eq.s32.totalorder %v460, 12
        %v462 = vmul.f32 %v458, %v447
        %463 = vadd.xlane.f32.xlu0 %v462
        %v464 = vpop.xlane.xlu0 %463
        %v465 = vsel %vm461, %v464, %v447
        %v466 = vmul.f32 %v458, %v451
        %467 = vadd.xlane.f32.xlu0 %v466
        %v468 = vpop.xlane.xlu0 %467
        %v469 = vsel %vm461, %v468, %v451
        %v470 = vmul.f32 %v458, %v455
        %471 = vadd.xlane.f32.xlu0 %v470
        %v472 = vpop.xlane.xlu0 %471
        %v473 = vsel %vm461, %v472, %v455
        %s474 = scalar_lea.vmem [#allocation2], 11
        %v475 = vld [vmem:[%s474] ss:$0 sm:$0xff]
        %v476 = vxor.u32 %v475, 2147483648
        %v477 = vlaneseq
        %v478 = vand.u32 %v477, 127
        %vm479 = vcmp.eq.s32.totalorder %v478, 11
        %v480 = vmul.f32 %v476, %v465
        %481 = vadd.xlane.f32.xlu0 %v480
        %v482 = vpop.xlane.xlu0 %481
        %v483 = vsel %vm479, %v482, %v465
        %v484 = vmul.f32 %v476, %v469
        %485 = vadd.xlane.f32.xlu0 %v484
        %v486 = vpop.xlane.xlu0 %485
        %v487 = vsel %vm479, %v486, %v469
        %v488 = vmul.f32 %v476, %v473
        %489 = vadd.xlane.f32.xlu0 %v488
        %v490 = vpop.xlane.xlu0 %489
        %v491 = vsel %vm479, %v490, %v473
        %s492 = scalar_lea.vmem [#allocation2], 10
        %v493 = vld [vmem:[%s492] ss:$0 sm:$0xff]
        %v494 = vxor.u32 %v493, 2147483648
        %v495 = vlaneseq
        %v496 = vand.u32 %v495, 127
        %vm497 = vcmp.eq.s32.totalorder %v496, 10
        %v498 = vmul.f32 %v494, %v483
        %499 = vadd.xlane.f32.xlu0 %v498
        %v500 = vpop.xlane.xlu0 %499
        %v501 = vsel %vm497, %v500, %v483
        %v502 = vmul.f32 %v494, %v487
        %503 = vadd.xlane.f32.xlu0 %v502
        %v504 = vpop.xlane.xlu0 %503
        %v505 = vsel %vm497, %v504, %v487
        %v506 = vmul.f32 %v494, %v491
        %507 = vadd.xlane.f32.xlu0 %v506
        %v508 = vpop.xlane.xlu0 %507
        %v509 = vsel %vm497, %v508, %v491
        %s510 = scalar_lea.vmem [#allocation2], 9
        %v511 = vld [vmem:[%s510] ss:$0 sm:$0xff]
        %v512 = vxor.u32 %v511, 2147483648
        %v513 = vlaneseq
        %v514 = vand.u32 %v513, 127
        %vm515 = vcmp.eq.s32.totalorder %v514, 9
        %v516 = vmul.f32 %v512, %v501
        %517 = vadd.xlane.f32.xlu0 %v516
        %v518 = vpop.xlane.xlu0 %517
        %v519 = vsel %vm515, %v518, %v501
        %v520 = vmul.f32 %v512, %v505
        %521 = vadd.xlane.f32.xlu0 %v520
        %v522 = vpop.xlane.xlu0 %521
        %v523 = vsel %vm515, %v522, %v505
        %v524 = vmul.f32 %v512, %v509
        %525 = vadd.xlane.f32.xlu0 %v524
        %v526 = vpop.xlane.xlu0 %525
        %v527 = vsel %vm515, %v526, %v509
        %s528 = scalar_lea.vmem [#allocation2], 8
        %v529 = vld [vmem:[%s528] ss:$0 sm:$0xff]
        %v530 = vxor.u32 %v529, 2147483648
        %v531 = vlaneseq
        %v532 = vand.u32 %v531, 127
        %vm533 = vcmp.eq.s32.totalorder %v532, 8
        %v534 = vmul.f32 %v530, %v519
        %535 = vadd.xlane.f32.xlu0 %v534
        %v536 = vpop.xlane.xlu0 %535
        %v537 = vsel %vm533, %v536, %v519
        %v538 = vmul.f32 %v530, %v523
        %539 = vadd.xlane.f32.xlu0 %v538
        %v540 = vpop.xlane.xlu0 %539
        %v541 = vsel %vm533, %v540, %v523
        %v542 = vmul.f32 %v530, %v527
        %543 = vadd.xlane.f32.xlu0 %v542
        %v544 = vpop.xlane.xlu0 %543
        %v545 = vsel %vm533, %v544, %v527
        %s546 = scalar_lea.vmem [#allocation2], 7
        %v547 = vld [vmem:[%s546] ss:$0 sm:$0xff]
        %v548 = vxor.u32 %v547, 2147483648
        %v549 = vlaneseq
        %v550 = vand.u32 %v549, 127
        %vm551 = vcmp.eq.s32.totalorder %v550, 7
        %v552 = vmul.f32 %v548, %v194
        %553 = vadd.xlane.f32.xlu0 %v552
        %v554 = vpop.xlane.xlu0 %553
        %v555 = vsel %vm551, %v554, %v194
        %v556 = vmul.f32 %v548, %v537
        %557 = vadd.xlane.f32.xlu0 %v556
        %v558 = vpop.xlane.xlu0 %557
        %v559 = vsel %vm551, %v558, %v537
        %v560 = vmul.f32 %v548, %v541
        %561 = vadd.xlane.f32.xlu0 %v560
        %v562 = vpop.xlane.xlu0 %561
        %v563 = vsel %vm551, %v562, %v541
        %v564 = vmul.f32 %v548, %v545
        %565 = vadd.xlane.f32.xlu0 %v564
        %v566 = vpop.xlane.xlu0 %565
        %v567 = vsel %vm551, %v566, %v545
        %s568 = scalar_lea.vmem [#allocation2], 6
        %v569 = vld [vmem:[%s568] ss:$0 sm:$0xff]
        %v570 = vxor.u32 %v569, 2147483648
        %v571 = vlaneseq
        %v572 = vand.u32 %v571, 127
        %vm573 = vcmp.eq.s32.totalorder %v572, 6
        %v574 = vmul.f32 %v570, %v555
        %575 = vadd.xlane.f32.xlu0 %v574
        %v576 = vpop.xlane.xlu0 %575
        %v577 = vsel %vm573, %v576, %v555
        %v578 = vmul.f32 %v570, %v559
        %579 = vadd.xlane.f32.xlu0 %v578
        %v580 = vpop.xlane.xlu0 %579
        %v581 = vsel %vm573, %v580, %v559
        %v582 = vmul.f32 %v570, %v563
        %583 = vadd.xlane.f32.xlu0 %v582
        %v584 = vpop.xlane.xlu0 %583
        %v585 = vsel %vm573, %v584, %v563
        %v586 = vmul.f32 %v570, %v567
        %587 = vadd.xlane.f32.xlu0 %v586
        %v588 = vpop.xlane.xlu0 %587
        %v589 = vsel %vm573, %v588, %v567
        %s590 = scalar_lea.vmem [#allocation2], 5
        %v591 = vld [vmem:[%s590] ss:$0 sm:$0xff]
        %v592 = vxor.u32 %v591, 2147483648
        %v593 = vlaneseq
        %v594 = vand.u32 %v593, 127
        %vm595 = vcmp.eq.s32.totalorder %v594, 5
        %v596 = vmul.f32 %v592, %v577
        %597 = vadd.xlane.f32.xlu0 %v596
        %v598 = vpop.xlane.xlu0 %597
        %v599 = vsel %vm595, %v598, %v577
        %v600 = vmul.f32 %v592, %v581
        %601 = vadd.xlane.f32.xlu0 %v600
        %v602 = vpop.xlane.xlu0 %601
        %v603 = vsel %vm595, %v602, %v581
        %v604 = vmul.f32 %v592, %v585
        %605 = vadd.xlane.f32.xlu0 %v604
        %v606 = vpop.xlane.xlu0 %605
        %v607 = vsel %vm595, %v606, %v585
        %v608 = vmul.f32 %v592, %v589
        %609 = vadd.xlane.f32.xlu0 %v608
        %v610 = vpop.xlane.xlu0 %609
        %v611 = vsel %vm595, %v610, %v589
        %s612 = scalar_lea.vmem [#allocation2], 4
        %v613 = vld [vmem:[%s612] ss:$0 sm:$0xff]
        %v614 = vxor.u32 %v613, 2147483648
        %v615 = vlaneseq
        %v616 = vand.u32 %v615, 127
        %vm617 = vcmp.eq.s32.totalorder %v616, 4
        %v618 = vmul.f32 %v614, %v599
        %619 = vadd.xlane.f32.xlu0 %v618
        %v620 = vpop.xlane.xlu0 %619
        %v621 = vsel %vm617, %v620, %v599
        %v622 = vmul.f32 %v614, %v603
        %623 = vadd.xlane.f32.xlu0 %v622
        %v624 = vpop.xlane.xlu0 %623
        %v625 = vsel %vm617, %v624, %v603
        %v626 = vmul.f32 %v614, %v607
        %627 = vadd.xlane.f32.xlu0 %v626
        %v628 = vpop.xlane.xlu0 %627
        %v629 = vsel %vm617, %v628, %v607
        %v630 = vmul.f32 %v614, %v611
        %631 = vadd.xlane.f32.xlu0 %v630
        %v632 = vpop.xlane.xlu0 %631
        %v633 = vsel %vm617, %v632, %v611
        %s634 = scalar_lea.vmem [#allocation2], 3
        %v635 = vld [vmem:[%s634] ss:$0 sm:$0xff]
        %v636 = vxor.u32 %v635, 2147483648
        %v637 = vlaneseq
        %v638 = vand.u32 %v637, 127
        %vm639 = vcmp.eq.s32.totalorder %v638, 3
        %v640 = vmul.f32 %v636, %v621
        %641 = vadd.xlane.f32.xlu0 %v640
        %v642 = vpop.xlane.xlu0 %641
        %v643 = vsel %vm639, %v642, %v621
        %v644 = vmul.f32 %v636, %v625
        %645 = vadd.xlane.f32.xlu0 %v644
        %v646 = vpop.xlane.xlu0 %645
        %v647 = vsel %vm639, %v646, %v625
        %v648 = vmul.f32 %v636, %v629
        %649 = vadd.xlane.f32.xlu0 %v648
        %v650 = vpop.xlane.xlu0 %649
        %v651 = vsel %vm639, %v650, %v629
        %v652 = vmul.f32 %v636, %v633
        %653 = vadd.xlane.f32.xlu0 %v652
        %v654 = vpop.xlane.xlu0 %653
        %v655 = vsel %vm639, %v654, %v633
        %s656 = scalar_lea.vmem [#allocation2], 2
        %v657 = vld [vmem:[%s656] ss:$0 sm:$0xff]
        %v658 = vxor.u32 %v657, 2147483648
        %v659 = vlaneseq
        %v660 = vand.u32 %v659, 127
        %vm661 = vcmp.eq.s32.totalorder %v660, 2
        %v662 = vmul.f32 %v658, %v643
        %663 = vadd.xlane.f32.xlu0 %v662
        %v664 = vpop.xlane.xlu0 %663
        %v665 = vsel %vm661, %v664, %v643
        %v666 = vmul.f32 %v658, %v647
        %667 = vadd.xlane.f32.xlu0 %v666
        %v668 = vpop.xlane.xlu0 %667
        %v669 = vsel %vm661, %v668, %v647
        %v670 = vmul.f32 %v658, %v651
        %671 = vadd.xlane.f32.xlu0 %v670
        %v672 = vpop.xlane.xlu0 %671
        %v673 = vsel %vm661, %v672, %v651
        %v674 = vmul.f32 %v658, %v655
        %675 = vadd.xlane.f32.xlu0 %v674
        %v676 = vpop.xlane.xlu0 %675
        %v677 = vsel %vm661, %v676, %v655
        %s678 = scalar_lea.vmem [#allocation2], 1
        %v679 = vld [vmem:[%s678] ss:$0 sm:$0xff]
        %v680 = vxor.u32 %v679, 2147483648
        %v681 = vlaneseq
        %v682 = vand.u32 %v681, 127
        %vm683 = vcmp.eq.s32.totalorder %v682, 1
        %v684 = vmul.f32 %v680, %v665
        %685 = vadd.xlane.f32.xlu0 %v684
        %v686 = vpop.xlane.xlu0 %685
        %v687 = vsel %vm683, %v686, %v665
        %v688 = vmul.f32 %v680, %v669
        %689 = vadd.xlane.f32.xlu0 %v688
        %v690 = vpop.xlane.xlu0 %689
        %v691 = vsel %vm683, %v690, %v669
        %v692 = vmul.f32 %v680, %v673
        %693 = vadd.xlane.f32.xlu0 %v692
        %v694 = vpop.xlane.xlu0 %693
        %v695 = vsel %vm683, %v694, %v673
        %v696 = vmul.f32 %v680, %v677
        %697 = vadd.xlane.f32.xlu0 %v696
        %v698 = vpop.xlane.xlu0 %697
        %v699 = vsel %vm683, %v698, %v677
        %v700 = vld [vmem:[#allocation2] ss:$0 sm:$0xff]
        %v701 = vxor.u32 %v700, 2147483648
        %v702 = vlaneseq
        %v703 = vand.u32 %v702, 127
        %vm704 = vcmp.eq.s32.totalorder %v703, 0
        %v705 = vmul.f32 %v701, %v687
        %706 = vadd.xlane.f32.xlu0 %v705
        %v707 = vpop.xlane.xlu0 %706
        %v708 = vsel %vm704, %v707, %v687
        %v709 = vmul.f32 %v701, %v691
        %710 = vadd.xlane.f32.xlu0 %v709
        %v711 = vpop.xlane.xlu0 %710
        %v712 = vsel %vm704, %v711, %v691
        %v713 = vmul.f32 %v701, %v695
        %714 = vadd.xlane.f32.xlu0 %v713
        %v715 = vpop.xlane.xlu0 %714
        %v716 = vsel %vm704, %v715, %v695
        %v717 = vmul.f32 %v701, %v699
        %718 = vadd.xlane.f32.xlu0 %v717
        %v719 = vpop.xlane.xlu0 %718
        %v720 = vsel %vm704, %v719, %v699
        %v721 = vrcp.pop %v133
        %v722 = vmul.f32 %v708, %v721
        %vm723 = vweird.f32 %v133
        %v724 = vsel %vm723, %v708, %v722
        %725 = vst [vmem:[%s122] sm:$0xff] %v724
        %v726 = vrcp.pop %v149
        %v727 = vmul.f32 %v712, %v726
        %vm728 = vweird.f32 %v149
        %v729 = vsel %vm728, %v712, %v727
        %s730 = scalar_lea.vmem %s122, 8 [#allocation1]
        %731 = vst [vmem:[%s730] sm:$0xff] %v729
        %v732 = vrcp.pop %v165
        %v733 = vmul.f32 %v716, %v732
        %vm734 = vweird.f32 %v165
        %v735 = vsel %vm734, %v716, %v733
        %s736 = scalar_lea.vmem %s122, 16 [#allocation1]
        %737 = vst [vmem:[%s736] sm:$0xff] %v735
        %v738 = vrcp.pop %v181
        %v739 = vmul.f32 %v720, %v738
        %vm740 = vweird.f32 %v181
        %v741 = vsel %vm740, %v720, %v739
        %s742 = scalar_lea.vmem %s122, 24 [#allocation1]
        %743 = vst [vmem:[%s742] sm:$0xff] %v741
        %s744 = sand.u32 %s8, 1
        %s745 = sand.u32 %s8, 1
        %s746 = smul.addr %s745, 32
        %s747 = scalar_lea.vmem [#allocation1], %s746
        %s748 = sadd.s32 %s17, %s16
        %s749 = smul.addr %s15, 4
        %s750 = sadd.s32 %s748, %s749
        %s751 = smul.addr %s14, 4
        %s752 = sadd.s32 %s750, %s751
        %s753 = smul.addr %s752, 8
        %s754 = scalar_lea.vmem %s1, %s753
        // Predicated region
        $region55: #{custom-call.23} parent=53 // pred_check
          _
        $region56: #{custom-call.23} parent=53 // pred_check_branch
          %756 = sbr.rel (0) target = $region58
        $region57: #{custom-call.23} parent=53 // pred_region
          // Predicated region
          $region59: #{custom-call.23} parent=57 // pred_check
            _
          $region60: #{custom-call.23} parent=57 // pred_check_branch
            %758 = sbr.rel (0) target = $region62
          $region61: #{custom-call.23} parent=57 // pred_region
            // Predicated region
            $region74: #{custom-call.23} parent=61 // pred_check
              _
            $region75: #{custom-call.23} parent=61 // pred_check_branch
              %780 = sbr.rel (0) target = $region77
            $region76: #{custom-call.23} parent=61 // pred_region
              loop: start=0, step=1, limit=1
              $region78: #{custom-call.23} parent=76 // loop_pre_header
                _
              $region79: #{custom-call.23} parent=76 // loop_header
                %s782 = sphi 0, %s786
                %p783 = scmp.ge.s32.totalorder %s782, 1
                %s787 = sphi %s747, %s747
                %s788 = sphi %s754, %s754
              $region80: #{custom-call.23} parent=76 // loop_header_branch
                %785 = sbr.rel (%p783) target = $region84
              $region81: #{custom-call.23} parent=76 // loop_body
                %v789 = vld [vmem:[%s787] sm:$0xff]
                %790 = vst [vmem:[%s788] sm:$0xff] %v789
                %v791 = vld [vmem:[%s787 + $0x8] sm:$0xff]
                %792 = vst [vmem:[%s788 + $0x8] sm:$0xff] %v791
                %v793 = vld [vmem:[%s787 + $0x10] sm:$0xff]
                %794 = vst [vmem:[%s788 + $0x10] sm:$0xff] %v793
                %v795 = vld [vmem:[%s787 + $0x18] sm:$0xff]
                %796 = vst [vmem:[%s788 + $0x18] sm:$0xff] %v795
              $region82: #{custom-call.23} parent=76 // loop_footer
                %s786 = sadd.s32 1, %s782
              $region83: #{custom-call.23} parent=76 // loop_footer_branch
                %781 = sbr.rel target = $region79
              $region84: #{custom-call.23} parent=76 // loop_exit
                _
            $region77: #{custom-call.23} parent=61 // pred_fallthru
              _
            // Predicated region
            $region85: #{custom-call.23} parent=61 // pred_check
              _
            $region86: #{custom-call.23} parent=61 // pred_check_branch
              %798 = sbr.rel target = $region88
            $region87: #{custom-call.23} parent=61 // pred_region
              _
            $region88: #{custom-call.23} parent=61 // pred_fallthru
              _
          $region62: #{custom-call.23} parent=57 // pred_fallthru
            _
          // Predicated region
          $region63: #{custom-call.23} parent=57 // pred_check
            _
          $region64: #{custom-call.23} parent=57 // pred_check_branch
            %760 = sbr.rel target = $region66
          $region65: #{custom-call.23} parent=57 // pred_region
            %s762 = ssub.s32 256, 1
            loop: start=0, step=1, limit=1
            $region67: #{custom-call.23} parent=65 // loop_pre_header
              _
            $region68: #{custom-call.23} parent=65 // loop_header
              %s764 = sphi 0, %s768
              %p765 = scmp.ge.s32.totalorder %s764, 1
              %s769 = sphi %s747, %s747
              %s770 = sphi %s754, %s754
            $region69: #{custom-call.23} parent=65 // loop_header_branch
              %767 = sbr.rel (%p765) target = $region73
            $region70: #{custom-call.23} parent=65 // loop_body
              %v771 = vld [vmem:[%s769] sm:%s762]
              %772 = vst [vmem:[%s770] sm:%s762] %v771
              %v773 = vld [vmem:[%s769 + $0x8] sm:%s762]
              %774 = vst [vmem:[%s770 + $0x8] sm:%s762] %v773
              %v775 = vld [vmem:[%s769 + $0x10] sm:%s762]
              %776 = vst [vmem:[%s770 + $0x10] sm:%s762] %v775
              %v777 = vld [vmem:[%s769 + $0x18] sm:%s762]
              %778 = vst [vmem:[%s770 + $0x18] sm:%s762] %v777
            $region71: #{custom-call.23} parent=65 // loop_footer
              %s768 = sadd.s32 1, %s764
            $region72: #{custom-call.23} parent=65 // loop_footer_branch
              %763 = sbr.rel target = $region68
            $region73: #{custom-call.23} parent=65 // loop_exit
              _
          $region66: #{custom-call.23} parent=57 // pred_fallthru
            _
        $region58: #{custom-call.23} parent=53 // pred_fallthru
          _
        %799 = vnop
      $region54: #{custom-call.23} parent=5 // pred_fallthru
        _
      %p800 = scmp.le.s32.totalorder 2, %s3
      // Predicated region
      $region89: #{custom-call.23} parent=5 // pred_check
        %p801 = pneg %p800
      $region90: #{custom-call.23} parent=5 // pred_check_branch
        %803 = sbr.rel (%p801) target = $region92
      $region91: #{custom-call.23} parent=5 // pred_region
        %s804 = ssub.s32 %s3, 2
        %s805 = sand.u32 %s9, 1
        %s806 = sand.u32 %s9, 1
        %s807 = smul.addr %s806, 32
        %s808 = scalar_lea.vmem [#allocation1], %s807
      $region92: #{custom-call.23} parent=5 // pred_fallthru
        _
    $region6: #{custom-call.23} parent=1 // loop_footer
      %s7 = sadd.s32 1, %s3
    $region7: #{custom-call.23} parent=1 // loop_footer_branch
      %2 = sbr.rel target = $region3
    $region8: #{custom-call.23} parent=1 // loop_exit
      _

// kernel: custom-call.25
$region0: #{custom-call.25}
  %s0 = inlined_call_operand.vmem [shape: f32[2,4,4], index: 0, kind: input, shape index: {}]
  %s1 = inlined_call_operand.vmem [shape: f32[2,4,4], index: 1, kind: output, shape index: {0}]
  %s2 = inlined_call_operand.hbm [shape: s32[2,4], index: 2, kind: output, shape index: {1}]
  %s3 = inlined_call_operand.vmem [shape: s32[2,4], index: 3, kind: output, shape index: {2}]
  %4 = xla_tuple %s1, %s2, %s3
  $region1: #{custom-call.25} parent=0
    #allocation0 [shape = 'u8[4096]{0}', space=vmem, size = 0x1000, scoped, tag = 'operand span for operand 0']
    #allocation1 [shape = 'u8[4096]{0}', space=vmem, size = 0x1000, scoped, tag = 'packed  for operand 0']
    #allocation2 [shape = 'u8[4096]{0}', space=vmem, size = 0x1000, scoped, tag = 'operand span for operand 1']
    #allocation3 [shape = 'u8[4096]{0}', space=vmem, size = 0x1000, scoped, tag = 'packed  for operand 1']
    #allocation4 [shape = 'u8[4096]{0}', space=vmem, size = 0x1000, scoped, tag = 'operand span for operand 2']
    #allocation5 [shape = 'u8[2048]{0}', space=vmem, size = 0x800, scoped, tag = 'packed  for operand 2']
    #allocation6 [shape = 's32[2]{0}', space=sflag, size = 0x8, scoped, tag = 'scoped memory for custom-call.25']
    #allocation7 [shape = 'u8[4096]{0}', space=vmem, size = 0x1000, scoped, tag = 'operand span for operand 3']
    #allocation8 [shape = 'u8[2048]{0}', space=vmem, size = 0x800, scoped, tag = 'packed  for operand 3']
    %5 = vsyncpa [#allocation6], 0
    %s6 = scalar_lea.sflag [#allocation6], 1
    %7 = vsyncpa %s6, 0
    loop: start=0, step=1, limit=4
    $region2: #{custom-call.25} parent=1 // loop_pre_header
      _
    $region3: #{custom-call.25} parent=1 // loop_header
      %s9 = sphi 0, %s13
      %p10 = scmp.ge.s32.totalorder %s9, 4
      %s21 = sphi 0, %s23
      %s24 = sphi 0, %s21
      %s25 = sphi 0, %s24
      %s41 = sphi 0, %s25
      %s49 = sphi 0, %s51
      %s52 = sphi 0, %s49
      %s53 = sphi 0, %s52
      %s69 = sphi 0, %s53
    $region4: #{custom-call.25} parent=1 // loop_header_branch
      %12 = sbr.rel (%p10) target = $region8
    $region5: #{custom-call.25} parent=1 // loop_body
      %s14 = ssub.s32 %s9, 1
      %s15 = ssub.s32 %s9, 2
      %s16 = sadd.s32 %s9, 1
      %s17 = sshrl.u32 %s9, 3
      %s18 = sshrl.u32 %s16, 3
      %s19 = ssub.s32 %s17, %s18
      %p20 = scmp.eq.s32.totalorder %s19, 0
      %s22 = sadd.s32 %s21, 1
      %s23 = scalar_select %p20, %s21, %s22
      %p26 = pneg %p20
      %p27 = scmp.eq.s32.totalorder %s9, 1
      %p28 = por %p26, %p27
      %p29 = scmp.ne.s32.totalorder %s21, %s24
      %p30 = scmp.eq.s32.totalorder %s9, 0
      %p31 = por %p29, %p30
      %p32 = scmp.ne.s32.totalorder %s21, %s24
      %p33 = scmp.eq.s32.totalorder %s14, 1
      %p34 = por %p32, %p33
      %p35 = scmp.ne.s32.totalorder %s24, %s25
      %p36 = scmp.eq.s32.totalorder %s14, 0
      %p37 = por %p35, %p36
      %p38 = scmp.ne.s32.totalorder %s24, %s25
      %p39 = scmp.eq.s32.totalorder %s15, 1
      %p40 = por %p38, %p39
      %p42 = scmp.ne.s32.totalorder %s25, %s41
      %p43 = scmp.eq.s32.totalorder %s15, 0
      %p44 = por %p42, %p43
      %s45 = sshrl.u32 %s9, 3
      %s46 = sshrl.u32 %s16, 3
      %s47 = ssub.s32 %s45, %s46
      %p48 = scmp.eq.s32.totalorder %s47, 0
      %s50 = sadd.s32 %s49, 1
      %s51 = scalar_select %p48, %s49, %s50
      %p54 = pneg %p48
      %p55 = scmp.eq.s32.totalorder %s9, 1
      %p56 = por %p54, %p55
      %p57 = scmp.ne.s32.totalorder %s49, %s52
      %p58 = scmp.eq.s32.totalorder %s9, 0
      %p59 = por %p57, %p58
      %p60 = scmp.ne.s32.totalorder %s49, %s52
      %p61 = scmp.eq.s32.totalorder %s14, 1
      %p62 = por %p60, %p61
      %p63 = scmp.ne.s32.totalorder %s52, %s53
      %p64 = scmp.eq.s32.totalorder %s14, 0
      %p65 = por %p63, %p64
      %p66 = scmp.ne.s32.totalorder %s52, %s53
      %p67 = scmp.eq.s32.totalorder %s15, 1
      %p68 = por %p66, %p67
      %p70 = scmp.ne.s32.totalorder %s53, %s69
      %p71 = scmp.eq.s32.totalorder %s15, 0
      %p72 = por %p70, %p71
      %p73 = scmp.le.s32.totalorder 1, %s9
      %p74 = scmp.lt.s32.totalorder %s9, 3
      %p75 = pnand %p73, %p74
      %p76 = pneg %p75
      // Predicated region
      $region9: #{custom-call.25} parent=5 // pred_check
        _
      $region10: #{custom-call.25} parent=5 // pred_check_branch
        %78 = sbr.rel (%p75) target = $region12
      $region11: #{custom-call.25} parent=5 // pred_region
        %s79 = ssub.s32 %s9, 1
      $region12: #{custom-call.25} parent=5 // pred_fallthru
        _
      %p80 = scmp.lt.s32.totalorder %s9, 2
      // Predicated region
      $region13: #{custom-call.25} parent=5 // pred_check
        %p81 = pneg %p80
      $region14: #{custom-call.25} parent=5 // pred_check_branch
        %83 = sbr.rel (%p81) target = $region16
      $region15: #{custom-call.25} parent=5 // pred_region
        %s84 = sand.u32 %s9, 1
        %s85 = sand.u32 %s9, 1
        %s86 = smul.addr %s85, 4
        %s87 = scalar_lea.vmem [#allocation1], %s86
        %s88 = smul.addr %s9, 4
        %s89 = scalar_lea.vmem %s0, %s88
        // Predicated region
        $region17: #{custom-call.25} parent=15 // pred_check
          _
        $region18: #{custom-call.25} parent=15 // pred_check_branch
          %91 = sbr.rel (0) target = $region20
        $region19: #{custom-call.25} parent=15 // pred_region
          // Predicated region
          $region21: #{custom-call.25} parent=19 // pred_check
            _
          $region22: #{custom-call.25} parent=19 // pred_check_branch
            %93 = sbr.rel target = $region24
          $region23: #{custom-call.25} parent=19 // pred_region
            // Predicated region
            $region36: #{custom-call.25} parent=23 // pred_check
              _
            $region37: #{custom-call.25} parent=23 // pred_check_branch
              %109 = sbr.rel (0) target = $region39
            $region38: #{custom-call.25} parent=23 // pred_region
              %s111 = ssub.s32 16, 1
              loop: start=0, step=1, limit=1
              $region40: #{custom-call.25} parent=38 // loop_pre_header
                _
              $region41: #{custom-call.25} parent=38 // loop_header
                %s113 = sphi 0, %s117
                %p114 = scmp.ge.s32.totalorder %s113, 1
                %s118 = sphi %s89, %s89
                %s119 = sphi %s87, %s87
              $region42: #{custom-call.25} parent=38 // loop_header_branch
                %116 = sbr.rel (%p114) target = $region46
              $region43: #{custom-call.25} parent=38 // loop_body
                %v120 = vld [vmem:[%s118] sm:%s111]
                %121 = vst [vmem:[%s119] sm:%s111] %v120
              $region44: #{custom-call.25} parent=38 // loop_footer
                %s117 = sadd.s32 1, %s113
              $region45: #{custom-call.25} parent=38 // loop_footer_branch
                %112 = sbr.rel target = $region41
              $region46: #{custom-call.25} parent=38 // loop_exit
                _
            $region39: #{custom-call.25} parent=23 // pred_fallthru
              _
          $region24: #{custom-call.25} parent=19 // pred_fallthru
            _
          // Predicated region
          $region25: #{custom-call.25} parent=19 // pred_check
            _
          $region26: #{custom-call.25} parent=19 // pred_check_branch
            %95 = sbr.rel (0) target = $region28
          $region27: #{custom-call.25} parent=19 // pred_region
            %s97 = ssub.s32 16, 1
            loop: start=0, step=1, limit=1
            $region29: #{custom-call.25} parent=27 // loop_pre_header
              _
            $region30: #{custom-call.25} parent=27 // loop_header
              %s99 = sphi 0, %s103
              %p100 = scmp.ge.s32.totalorder %s99, 1
              %s104 = sphi %s89, %s89
              %s105 = sphi %s87, %s87
            $region31: #{custom-call.25} parent=27 // loop_header_branch
              %102 = sbr.rel (%p100) target = $region35
            $region32: #{custom-call.25} parent=27 // loop_body
              %v106 = vld [vmem:[%s104] sm:%s97]
              %107 = vst [vmem:[%s105] sm:%s97] %v106
            $region33: #{custom-call.25} parent=27 // loop_footer
              %s103 = sadd.s32 1, %s99
            $region34: #{custom-call.25} parent=27 // loop_footer_branch
              %98 = sbr.rel target = $region30
            $region35: #{custom-call.25} parent=27 // loop_exit
              _
          $region28: #{custom-call.25} parent=19 // pred_fallthru
            _
        $region20: #{custom-call.25} parent=15 // pred_fallthru
          _
        %122 = vnop
      $region16: #{custom-call.25} parent=5 // pred_fallthru
        _
      %p123 = scmp.le.s32.totalorder 1, %s9
      %p124 = scmp.lt.s32.totalorder %s9, 3
      %p125 = pnand %p123, %p124
      %p126 = pneg %p125
      // Predicated region
      $region47: #{custom-call.25} parent=5 // pred_check
        _
      $region48: #{custom-call.25} parent=5 // pred_check_branch
        %128 = sbr.rel (%p125) target = $region50
      $region49: #{custom-call.25} parent=5 // pred_region
        #allocation9 [shape = 's32[4,128]{1,0}', space=vmem, size = 0x1000, scoped, tag = 'scratch for permutations']
        %s129 = ssub.s32 %s9, 1
        %s130 = sand.u32 %s14, 1
        %s131 = sand.u32 %s14, 1
        %s132 = smul.addr %s131, 4
        %s133 = scalar_lea.vmem [#allocation1], %s132
        %s134 = sand.u32 %s14, 1
        %s135 = sand.u32 %s14, 1
        %s136 = smul.addr %s135, 4
        %s137 = scalar_lea.vmem [#allocation1], %s136
        %s138 = sand.u32 %s14, 1
        %s139 = sand.u32 %s14, 1
        %s140 = smul.addr %s139, 4
        %s141 = scalar_lea.vmem [#allocation3], %s140
        %p142 = pneg %p37
        %p143 = pneg %p34
        %s144 = sand.u32 %s24, 1
        %s145 = scalar_lea.sflag [#allocation6], %s144
        %s146 = sand.u32 %s24, 1
        %s147 = smul.addr %s146, 2
        %s148 = scalar_lea.vmem [#allocation5], %s147
        %p149 = pneg %p65
        %p150 = pneg %p62
        %s151 = sand.u32 %s52, 1
        %s152 = sand.u32 %s52, 1
        %s153 = smul.addr %s152, 2
        %s154 = scalar_lea.vmem [#allocation8], %s153
        %s156 = sshll.u32 1, 4
        %s157 = ssub.s32 %s156, 1
        %v158 = vld [vmem:[%s137] sm:%s157]
        %159 = vst [vmem:[#allocation0] sm:%s157] %v158
        %s160 = sshrl.u32 %s14, 3
        %s161 = sshrl.u32 %s14, 3
        %v162 = vld [vmem:[#allocation0] sm:$0xff]
        %163 = vst [vmem:[#allocation2] sm:$0xff] %v162
        %s164 = sand.u32 %s14, 7
        %s165 = scalar_lea.vmem [#allocation4], %s164
        %s166 = sand.u32 %s14, 7
        %s167 = scalar_lea.vmem [#allocation7], %s166
        %168 = vst [vmem:[%s165] sm:$0x1] 0
        %v169 = vlaneseq
        %v170 = vshrl.u32 %v169, 7
        %v171 = vmov %v170
        %173 = vst [vmem:[#allocation9] sm:$0xff] %v171
        loop: start=0, step=1, limit=4
        $region52: #{custom-call.25} parent=49 // loop_pre_header
          _
        $region53: #{custom-call.25} parent=49 // loop_header
          %s175 = sphi 0, %s179
          %p176 = scmp.ge.s32.totalorder %s175, 4
        $region54: #{custom-call.25} parent=49 // loop_header_branch
          %178 = sbr.rel (%p176) target = $region58
        $region55: #{custom-call.25} parent=49 // loop_body
          %v180 = vstv %s175
          %v181 = vlaneseq
          %v182 = vshrl.u32 %v181, 7
          %v183 = vmov %v182
          %v184 = vld [vmem:[#allocation2] sm:$0xff]
          %v185 = vand.u32 2147483647, %v184
          %v187 = vstv %s175
          %vm188 = vcmp.ge.s32.totalorder %v183, %v187
          %vm189 = vcmp.lt.s32.totalorder %v183, 4
          %vm190 = vmand %vm188, %vm189
          %vm191 = vcmp.lt.f32.partialorder -inf, %v185
          %vm192 = vmand %vm190, %vm191
          %v193 = vsel %vm192, %v183, %v180
          %v194 = vsel %vm192, %v185, -inf
          %v195 = vrot.slane %v194, 1
          %v196 = vrot.slane %v193, 1
          %vm197 = vcmp.ge.f32.partialorder %v195, %v194
          %v198 = vsel %vm197, %v195, %v194
          %v199 = vsel %vm197, %v196, %v193
          %v200 = vrot.slane %v195, 1
          %v201 = vrot.slane %v196, 1
          %vm202 = vcmp.ge.f32.partialorder %v200, %v198
          %v203 = vsel %vm202, %v200, %v198
          %v204 = vsel %vm202, %v201, %v199
          %v205 = vrot.slane %v200, 1
          %v206 = vrot.slane %v201, 1
          %vm207 = vcmp.ge.f32.partialorder %v205, %v203
          %v208 = vsel %vm207, %v205, %v203
          %v209 = vsel %vm207, %v206, %v204
          %v210 = vrot.slane %v205, 1
          %v211 = vrot.slane %v206, 1
          %vm212 = vcmp.ge.f32.partialorder %v210, %v208
          %v213 = vsel %vm212, %v210, %v208
          %v214 = vsel %vm212, %v211, %v209
          %v215 = vrot.slane %v210, 1
          %v216 = vrot.slane %v211, 1
          %vm217 = vcmp.ge.f32.partialorder %v215, %v213
          %v218 = vsel %vm217, %v215, %v213
          %v219 = vsel %vm217, %v216, %v214
          %v220 = vrot.slane %v215, 1
          %v221 = vrot.slane %v216, 1
          %vm222 = vcmp.ge.f32.partialorder %v220, %v218
          %v223 = vsel %vm222, %v220, %v218
          %v224 = vsel %vm222, %v221, %v219
          %v225 = vrot.slane %v220, 1
          %v226 = vrot.slane %v221, 1
          %vm227 = vcmp.ge.f32.partialorder %v225, %v223
          %v228 = vsel %vm227, %v225, %v223
          %v229 = vsel %vm227, %v226, %v224
          %s230 = ssub.s32 128, %s175
          %231 = vrot.lane.b32.xlu0 %v229, %s230
          %v232 = vpop.permute.xlu0 %231
          %s233 = vtos %v232
          %v234 = vstv %s175
          %v235 = vlaneseq
          %v236 = vand.u32 %v235, 127
          %vm237 = vcmp.eq.s32.totalorder %v236, %v234
          %v238 = vstv %s233
          %v239 = vld [vmem:[%s165] ss:$0 sm:$0xff]
          %v240 = vsel %vm237, %v238, %v239
          %241 = vst [vmem:[%s165] sm:$0x1] %v240
          %s242 = scalar_lea.vmem [#allocation2], %s175
          %s243 = scalar_lea.vmem [#allocation2], %s233
          %v244 = vld [vmem:[%s242] ss:$0 sm:$0xff]
          %v245 = vld [vmem:[%s243] ss:$0 sm:$0xff]
          %246 = vst [vmem:[%s243] sm:$0x1] %v244
          %247 = vst [vmem:[%s242] sm:$0x1] %v245
          %s248 = scalar_lea.vmem [#allocation9], %s175
          %s249 = scalar_lea.vmem [#allocation9], %s233
          %v250 = vld [vmem:[%s248] ss:$0 sm:$0xff]
          %v251 = vld [vmem:[%s249] ss:$0 sm:$0xff]
          %252 = vst [vmem:[%s249] sm:$0x1] %v250
          %253 = vst [vmem:[%s248] sm:$0x1] %v251
          %vm254 = vcmp.ne.f32.partialorder %v245, 0.0
          %vm255 = vmand %vm237, %vm254
          %v256 = vsel %vm255, %v245, 1.0
          %v257 = vlaneseq
          %v258 = vand.u32 %v257, 127
          %v259 = vstv %s175
          %vm260 = vcmp.gt.s32.totalorder %v258, %v259
          %v261 = vsel %vm260, %v245, 0.0
          %v262 = vlaneseq
          %v263 = vshrl.u32 %v262, 7
          %v264 = vmov %v263
          %v265 = vld [vmem:[#allocation2] sm:$0xff]
          %v267 = vstv %s175
          %vm268 = vcmp.gt.s32.totalorder %v264, %v267
          %v269 = vsel %vm268, %v256, 1.0
          %v270 = vrcp.pop %v269
          %v271 = vmul.f32 %v265, %v270
          %vm272 = vmand %vm268, %vm237
          %v273 = vsel %vm272, %v271, 0.0
          %274 = vadd.xlane.f32.xlu0 %v273
          %v275 = vpop.xlane.xlu0 %274
          %v276 = vmul.f32 %v275, %v261
          %v277 = vsub.f32 %v271, %v276
          %278 = vst [vmem:[#allocation2] sm:$0xff] %v277
        $region56: #{custom-call.25} parent=49 // loop_footer
          %s179 = sadd.s32 1, %s175
        $region57: #{custom-call.25} parent=49 // loop_footer_branch
          %174 = sbr.rel target = $region53
        $region58: #{custom-call.25} parent=49 // loop_exit
          _
        %v279 = vld [vmem:[#allocation9] sm:$0xff]
        %s280 = scalar_lea.vmem [#allocation9], 8
        %s281 = scalar_lea.vmem [#allocation9], 16
        %s282 = scalar_lea.vmem [#allocation9], 24
        %s283 = scalar_lea.vmem [#allocation9], 32
        %s284 = scalar_lea.vmem [#allocation9], 40
        %s285 = scalar_lea.vmem [#allocation9], 48
        %s286 = scalar_lea.vmem [#allocation9], 56
        %s287 = scalar_lea.vmem [#allocation9], 64
        %s288 = scalar_lea.vmem [#allocation9], 72
        %s289 = scalar_lea.vmem [#allocation9], 80
        %s290 = scalar_lea.vmem [#allocation9], 88
        %s291 = scalar_lea.vmem [#allocation9], 96
        %s292 = scalar_lea.vmem [#allocation9], 104
        %s293 = scalar_lea.vmem [#allocation9], 112
        %s294 = scalar_lea.vmem [#allocation9], 120
        %295 = vxpose.xlu0.b32.start [1/16] %v279, 128
        %296 = vxpose.xlu0.b32.cont [2/16] 0, 128
        %297 = vxpose.xlu0.b32.cont [3/16] 0, 128
        %298 = vxpose.xlu0.b32.cont [4/16] 0, 128
        %299 = vxpose.xlu0.b32.cont [5/16] 0, 128
        %300 = vxpose.xlu0.b32.cont [6/16] 0, 128
        %301 = vxpose.xlu0.b32.cont [7/16] 0, 128
        %302 = vxpose.xlu0.b32.cont [8/16] 0, 128
        %303 = vxpose.xlu0.b32.cont [9/16] 0, 128
        %304 = vxpose.xlu0.b32.cont [10/16] 0, 128
        %305 = vxpose.xlu0.b32.cont [11/16] 0, 128
        %306 = vxpose.xlu0.b32.cont [12/16] 0, 128
        %307 = vxpose.xlu0.b32.cont [13/16] 0, 128
        %308 = vxpose.xlu0.b32.cont [14/16] 0, 128
        %309 = vxpose.xlu0.b32.cont [15/16] 0, 128
        %310 = vxpose.xlu0.b32.end [16/16] 0, 128
        %v311 = vpop.trf.xlu0
        %v312 = vpop.trf.xlu0
        %v313 = vpop.trf.xlu0
        %v314 = vpop.trf.xlu0
        %v315 = vpop.trf.xlu0
        %v316 = vpop.trf.xlu0
        %v317 = vpop.trf.xlu0
        %v318 = vpop.trf.xlu0
        %v319 = vpop.trf.xlu0
        %v320 = vpop.trf.xlu0
        %v321 = vpop.trf.xlu0
        %v322 = vpop.trf.xlu0
        %v323 = vpop.trf.xlu0
        %v324 = vpop.trf.xlu0
        %v325 = vpop.trf.xlu0
        %v326 = vpop.trf.xlu0
        %327 = vst [vmem:[%s167] sm:$0x1] %v311
        %s329 = sshll.u32 1, 4
        %s330 = ssub.s32 %s329, 1
        %v332 = vld [vmem:[#allocation2] sm:%s330]
        %s333 = sshll.u32 1, 4
        %s334 = ssub.s32 %s333, 1
        %335 = vst [vmem:[%s141] sm:%s334] %v332
        %s337 = sshll.u32 1, 2
        %s338 = ssub.s32 %s337, 1
        %v340 = vld [vmem:[#allocation4] sm:%s338]
        %s341 = sshll.u32 1, 2
        %s342 = ssub.s32 %s341, 1
        %343 = vst [vmem:[%s148] sm:%s342] %v340
        %s345 = sshll.u32 1, 2
        %s346 = ssub.s32 %s345, 1
        %v348 = vld [vmem:[#allocation7] sm:%s346]
        %s349 = sshll.u32 1, 2
        %s350 = ssub.s32 %s349, 1
        %351 = vst [vmem:[%s154] sm:%s350] %v348
        %s352 = sand.u32 %s14, 1
        %s353 = sand.u32 %s14, 1
        %s354 = smul.addr %s353, 4
        %s355 = scalar_lea.vmem [#allocation3], %s354
        %s356 = sand.u32 %s24, 1
        %s357 = scalar_lea.sflag [#allocation6], %s356
        %s358 = sand.u32 %s24, 1
        %s359 = smul.addr %s358, 2
        %s360 = scalar_lea.vmem [#allocation5], %s359
        %s361 = sand.u32 %s52, 1
        %s362 = sand.u32 %s52, 1
        %s363 = smul.addr %s362, 2
        %s364 = scalar_lea.vmem [#allocation8], %s363
        %s365 = smul.addr %s14, 4
        %s366 = scalar_lea.vmem %s1, %s365
        // Predicated region
        $region59: #{custom-call.25} parent=49 // pred_check
          _
        $region60: #{custom-call.25} parent=49 // pred_check_branch
          %368 = sbr.rel (0) target = $region62
        $region61: #{custom-call.25} parent=49 // pred_region
          // Predicated region
          $region63: #{custom-call.25} parent=61 // pred_check
            _
          $region64: #{custom-call.25} parent=61 // pred_check_branch
            %370 = sbr.rel target = $region66
          $region65: #{custom-call.25} parent=61 // pred_region
            // Predicated region
            $region78: #{custom-call.25} parent=65 // pred_check
              _
            $region79: #{custom-call.25} parent=65 // pred_check_branch
              %386 = sbr.rel (0) target = $region81
            $region80: #{custom-call.25} parent=65 // pred_region
              %s388 = ssub.s32 16, 1
              loop: start=0, step=1, limit=1
              $region82: #{custom-call.25} parent=80 // loop_pre_header
                _
              $region83: #{custom-call.25} parent=80 // loop_header
                %s390 = sphi 0, %s394
                %p391 = scmp.ge.s32.totalorder %s390, 1
                %s395 = sphi %s355, %s355
                %s396 = sphi %s366, %s366
              $region84: #{custom-call.25} parent=80 // loop_header_branch
                %393 = sbr.rel (%p391) target = $region88
              $region85: #{custom-call.25} parent=80 // loop_body
                %v397 = vld [vmem:[%s395] sm:%s388]
                %398 = vst [vmem:[%s396] sm:%s388] %v397
              $region86: #{custom-call.25} parent=80 // loop_footer
                %s394 = sadd.s32 1, %s390
              $region87: #{custom-call.25} parent=80 // loop_footer_branch
                %389 = sbr.rel target = $region83
              $region88: #{custom-call.25} parent=80 // loop_exit
                _
            $region81: #{custom-call.25} parent=65 // pred_fallthru
              _
          $region66: #{custom-call.25} parent=61 // pred_fallthru
            _
          // Predicated region
          $region67: #{custom-call.25} parent=61 // pred_check
            _
          $region68: #{custom-call.25} parent=61 // pred_check_branch
            %372 = sbr.rel (0) target = $region70
          $region69: #{custom-call.25} parent=61 // pred_region
            %s374 = ssub.s32 16, 1
            loop: start=0, step=1, limit=1
            $region71: #{custom-call.25} parent=69 // loop_pre_header
              _
            $region72: #{custom-call.25} parent=69 // loop_header
              %s376 = sphi 0, %s380
              %p377 = scmp.ge.s32.totalorder %s376, 1
              %s381 = sphi %s355, %s355
              %s382 = sphi %s366, %s366
            $region73: #{custom-call.25} parent=69 // loop_header_branch
              %379 = sbr.rel (%p377) target = $region77
            $region74: #{custom-call.25} parent=69 // loop_body
              %v383 = vld [vmem:[%s381] sm:%s374]
              %384 = vst [vmem:[%s382] sm:%s374] %v383
            $region75: #{custom-call.25} parent=69 // loop_footer
              %s380 = sadd.s32 1, %s376
            $region76: #{custom-call.25} parent=69 // loop_footer_branch
              %375 = sbr.rel target = $region72
            $region77: #{custom-call.25} parent=69 // loop_exit
              _
          $region70: #{custom-call.25} parent=61 // pred_fallthru
            _
        $region62: #{custom-call.25} parent=49 // pred_fallthru
          _
        %399 = vnop
        // Predicated region
        $region89: #{custom-call.25} parent=49 // pred_check
          %p400 = pneg %p34
        $region90: #{custom-call.25} parent=49 // pred_check_branch
          %402 = sbr.rel (%p400) target = $region92
        $region91: #{custom-call.25} parent=49 // pred_region
          %s403 = sshrl.u32 %s14, 3
          %s405 = ssub.s32 32, 32
          %406 = vsyncadd %s357, %s405
          %s407 = smul.addr %s403, 32
          %s408 = scalar_lea.hbm %s2, %s407
          %s410 = sshll.u32 %s360, 4
          %s411 = int_to_ptr.vmem [resolvable:$true] %s410
          %413 = dma.vmem_to_hbm [thread:$0]  %s411, 32, %s408, %s357
        $region92: #{custom-call.25} parent=49 // pred_fallthru
          _
        // Predicated region
        $region93: #{custom-call.25} parent=49 // pred_check
          %p414 = pneg %p62
        $region94: #{custom-call.25} parent=49 // pred_check_branch
          %416 = sbr.rel (%p414) target = $region96
        $region95: #{custom-call.25} parent=49 // pred_region
          %s417 = sshrl.u32 %s14, 3
          %s418 = smul.addr %s417, 2
          %s419 = scalar_lea.vmem %s3, %s418
          // Predicated region
          $region97: #{custom-call.25} parent=95 // pred_check
            _
          $region98: #{custom-call.25} parent=95 // pred_check_branch
            %421 = sbr.rel (0) target = $region100
          $region99: #{custom-call.25} parent=95 // pred_region
            // Predicated region
            $region101: #{custom-call.25} parent=99 // pred_check
              _
            $region102: #{custom-call.25} parent=99 // pred_check_branch
              %423 = sbr.rel target = $region104
            $region103: #{custom-call.25} parent=99 // pred_region
              // Predicated region
              $region116: #{custom-call.25} parent=103 // pred_check
                _
              $region117: #{custom-call.25} parent=103 // pred_check_branch
                %439 = sbr.rel (0) target = $region119
              $region118: #{custom-call.25} parent=103 // pred_region
                %s441 = ssub.s32 4, 1
                loop: start=0, step=1, limit=1
                $region120: #{custom-call.25} parent=118 // loop_pre_header
                  _
                $region121: #{custom-call.25} parent=118 // loop_header
                  %s443 = sphi 0, %s447
                  %p444 = scmp.ge.s32.totalorder %s443, 1
                  %s448 = sphi %s364, %s364
                  %s449 = sphi %s419, %s419
                $region122: #{custom-call.25} parent=118 // loop_header_branch
                  %446 = sbr.rel (%p444) target = $region126
                $region123: #{custom-call.25} parent=118 // loop_body
                  %v450 = vld [vmem:[%s448] sm:%s441]
                  %451 = vst [vmem:[%s449] sm:%s441] %v450
                $region124: #{custom-call.25} parent=118 // loop_footer
                  %s447 = sadd.s32 1, %s443
                $region125: #{custom-call.25} parent=118 // loop_footer_branch
                  %442 = sbr.rel target = $region121
                $region126: #{custom-call.25} parent=118 // loop_exit
                  _
              $region119: #{custom-call.25} parent=103 // pred_fallthru
                _
            $region104: #{custom-call.25} parent=99 // pred_fallthru
              _
            // Predicated region
            $region105: #{custom-call.25} parent=99 // pred_check
              _
            $region106: #{custom-call.25} parent=99 // pred_check_branch
              %425 = sbr.rel (0) target = $region108
            $region107: #{custom-call.25} parent=99 // pred_region
              %s427 = ssub.s32 4, 1
              loop: start=0, step=1, limit=1
              $region109: #{custom-call.25} parent=107 // loop_pre_header
                _
              $region110: #{custom-call.25} parent=107 // loop_header
                %s429 = sphi 0, %s433
                %p430 = scmp.ge.s32.totalorder %s429, 1
                %s434 = sphi %s364, %s364
                %s435 = sphi %s419, %s419
              $region111: #{custom-call.25} parent=107 // loop_header_branch
                %432 = sbr.rel (%p430) target = $region115
              $region112: #{custom-call.25} parent=107 // loop_body
                %v436 = vld [vmem:[%s434] sm:%s427]
                %437 = vst [vmem:[%s435] sm:%s427] %v436
              $region113: #{custom-call.25} parent=107 // loop_footer
                %s433 = sadd.s32 1, %s429
              $region114: #{custom-call.25} parent=107 // loop_footer_branch
                %428 = sbr.rel target = $region110
              $region115: #{custom-call.25} parent=107 // loop_exit
                _
            $region108: #{custom-call.25} parent=99 // pred_fallthru
              _
          $region100: #{custom-call.25} parent=95 // pred_fallthru
            _
          %452 = vnop
        $region96: #{custom-call.25} parent=49 // pred_fallthru
          _
      $region50: #{custom-call.25} parent=5 // pred_fallthru
        _
      %p453 = scmp.le.s32.totalorder 2, %s9
      // Predicated region
      $region127: #{custom-call.25} parent=5 // pred_check
        %p454 = pneg %p453
      $region128: #{custom-call.25} parent=5 // pred_check_branch
        %456 = sbr.rel (%p454) target = $region130
      $region129: #{custom-call.25} parent=5 // pred_region
        %s457 = ssub.s32 %s9, 2
        %s458 = sand.u32 %s15, 1
        %s459 = sand.u32 %s15, 1
        %s460 = smul.addr %s459, 4
        %s461 = scalar_lea.vmem [#allocation3], %s460
        // Predicated region
        $region131: #{custom-call.25} parent=129 // pred_check
          %p462 = pneg %p40
        $region132: #{custom-call.25} parent=129 // pred_check_branch
          %464 = sbr.rel (%p462) target = $region134
        $region133: #{custom-call.25} parent=129 // pred_region
          %s465 = sand.u32 %s25, 1
          %s466 = scalar_lea.sflag [#allocation6], %s465
          %s467 = sand.u32 %s25, 1
          %s468 = smul.addr %s467, 2
          %s469 = scalar_lea.vmem [#allocation5], %s468
          %470 = dma.done %s466, 32
        $region134: #{custom-call.25} parent=129 // pred_fallthru
          _
        // Predicated region
        $region135: #{custom-call.25} parent=129 // pred_check
          %p471 = pneg %p68
        $region136: #{custom-call.25} parent=129 // pred_check_branch
          %473 = sbr.rel (%p471) target = $region138
        $region137: #{custom-call.25} parent=129 // pred_region
          %s474 = sand.u32 %s53, 1
          %s475 = sand.u32 %s53, 1
          %s476 = smul.addr %s475, 2
          %s477 = scalar_lea.vmem [#allocation8], %s476
        $region138: #{custom-call.25} parent=129 // pred_fallthru
          _
      $region130: #{custom-call.25} parent=5 // pred_fallthru
        _
    $region6: #{custom-call.25} parent=1 // loop_footer
      %s13 = sadd.s32 1, %s9
    $region7: #{custom-call.25} parent=1 // loop_footer_branch
      %8 = sbr.rel target = $region3
    $region8: #{custom-call.25} parent=1 // loop_exit
      _
    %478 = vsyncpa [#allocation6], 1
    %s479 = scalar_lea.sflag [#allocation6], 1
    %480 = vsyncpa %s479, 1

// kernel: custom-call.27
$region0: #{custom-call.27}
  %s0 = inlined_call_operand.vmem [shape: f32[2,1,4,4], index: 0, kind: input, shape index: {}]
  %s1 = inlined_call_operand.vmem [shape: f32[2,1,4,4], index: 1, kind: output, shape index: {}]
  $region1: #{custom-call.27} parent=0
    #allocation0 [shape = 'u8[4096]{0}', space=vmem, size = 0x1000, scoped, tag = 'operand span for operand 0']
    #allocation1 [shape = 'u8[4096]{0}', space=vmem, size = 0x1000, scoped, tag = 'packed  for operand 0']
    #allocation2 [shape = 'u8[4096]{0}', space=vmem, size = 0x1000, scoped, tag = 'operand span for operand 1']
    #allocation3 [shape = 'u8[4096]{0}', space=vmem, size = 0x1000, scoped, tag = 'packed  for operand 1']
    loop: start=0, step=1, limit=4
    $region2: #{custom-call.27} parent=1 // loop_pre_header
      _
    $region3: #{custom-call.27} parent=1 // loop_header
      %s3 = sphi 0, %s7
      %p4 = scmp.ge.s32.totalorder %s3, 4
      %s10 = sphi 0, %s36
      %s11 = sphi 0, %s32
      %s12 = sphi 0, %s28
      %s13 = sphi 0, %s24
      %s14 = sphi 0, %s10
      %s15 = sphi 0, %s11
      %s16 = sphi 0, %s12
      %s17 = sphi 0, %s13
      %s18 = sphi 0, %s14
      %s19 = sphi 0, %s15
      %s20 = sphi 0, %s16
      %s21 = sphi 0, %s17
    $region4: #{custom-call.27} parent=1 // loop_header_branch
      %6 = sbr.rel (%p4) target = $region8
    $region5: #{custom-call.27} parent=1 // loop_body
      %s8 = ssub.s32 %s3, 1
      %s9 = ssub.s32 %s3, 2
      %s22 = sadd.s32 1, %s13
      %p23 = scmp.ge.s32.totalorder %s22, 1
      %s24 = scalar_select %p23, 0, %s22
      %s25 = sadd.s32 1, %s12
      %s26 = scalar_select %p23, %s25, %s12
      %p27 = scmp.ge.s32.totalorder %s26, 1
      %s28 = scalar_select %p27, 0, %s26
      %s29 = sadd.s32 1, %s11
      %s30 = scalar_select %p27, %s29, %s11
      %p31 = scmp.ge.s32.totalorder %s30, 1
      %s32 = scalar_select %p31, 0, %s30
      %s33 = sadd.s32 1, %s10
      %s34 = scalar_select %p31, %s33, %s10
      %p35 = scmp.ge.s32.totalorder %s34, 2
      %s36 = scalar_select %p35, 0, %s34
      %p37 = scmp.le.s32.totalorder 1, %s3
      %p38 = scmp.lt.s32.totalorder %s3, 3
      %p39 = pnand %p37, %p38
      %p40 = pneg %p39
      // Predicated region
      $region9: #{custom-call.27} parent=5 // pred_check
        _
      $region10: #{custom-call.27} parent=5 // pred_check_branch
        %42 = sbr.rel (%p39) target = $region12
      $region11: #{custom-call.27} parent=5 // pred_region
        %s43 = ssub.s32 %s3, 1
      $region12: #{custom-call.27} parent=5 // pred_fallthru
        _
      %p44 = scmp.lt.s32.totalorder %s3, 2
      // Predicated region
      $region13: #{custom-call.27} parent=5 // pred_check
        %p45 = pneg %p44
      $region14: #{custom-call.27} parent=5 // pred_check_branch
        %47 = sbr.rel (%p45) target = $region16
      $region15: #{custom-call.27} parent=5 // pred_region
        %s48 = sand.u32 %s3, 1
        %s49 = sand.u32 %s3, 1
        %s50 = smul.addr %s49, 4
        %s51 = scalar_lea.vmem [#allocation1], %s50
        %s52 = sadd.s32 %s13, %s12
        %s53 = sadd.s32 %s52, %s11
        %s54 = sadd.s32 %s53, %s10
        %s55 = smul.addr %s54, 4
        %s56 = scalar_lea.vmem %s0, %s55
        // Predicated region
        $region17: #{custom-call.27} parent=15 // pred_check
          _
        $region18: #{custom-call.27} parent=15 // pred_check_branch
          %58 = sbr.rel (0) target = $region20
        $region19: #{custom-call.27} parent=15 // pred_region
          // Predicated region
          $region21: #{custom-call.27} parent=19 // pred_check
            _
          $region22: #{custom-call.27} parent=19 // pred_check_branch
            %60 = sbr.rel target = $region24
          $region23: #{custom-call.27} parent=19 // pred_region
            // Predicated region
            $region36: #{custom-call.27} parent=23 // pred_check
              _
            $region37: #{custom-call.27} parent=23 // pred_check_branch
              %76 = sbr.rel (0) target = $region39
            $region38: #{custom-call.27} parent=23 // pred_region
              %s78 = ssub.s32 16, 1
              loop: start=0, step=1, limit=1
              $region40: #{custom-call.27} parent=38 // loop_pre_header
                _
              $region41: #{custom-call.27} parent=38 // loop_header
                %s80 = sphi 0, %s84
                %p81 = scmp.ge.s32.totalorder %s80, 1
                %s85 = sphi %s56, %s56
                %s86 = sphi %s51, %s51
              $region42: #{custom-call.27} parent=38 // loop_header_branch
                %83 = sbr.rel (%p81) target = $region46
              $region43: #{custom-call.27} parent=38 // loop_body
                %v87 = vld [vmem:[%s85] sm:%s78]
                %88 = vst [vmem:[%s86] sm:%s78] %v87
              $region44: #{custom-call.27} parent=38 // loop_footer
                %s84 = sadd.s32 1, %s80
              $region45: #{custom-call.27} parent=38 // loop_footer_branch
                %79 = sbr.rel target = $region41
              $region46: #{custom-call.27} parent=38 // loop_exit
                _
            $region39: #{custom-call.27} parent=23 // pred_fallthru
              _
          $region24: #{custom-call.27} parent=19 // pred_fallthru
            _
          // Predicated region
          $region25: #{custom-call.27} parent=19 // pred_check
            _
          $region26: #{custom-call.27} parent=19 // pred_check_branch
            %62 = sbr.rel (0) target = $region28
          $region27: #{custom-call.27} parent=19 // pred_region
            %s64 = ssub.s32 16, 1
            loop: start=0, step=1, limit=1
            $region29: #{custom-call.27} parent=27 // loop_pre_header
              _
            $region30: #{custom-call.27} parent=27 // loop_header
              %s66 = sphi 0, %s70
              %p67 = scmp.ge.s32.totalorder %s66, 1
              %s71 = sphi %s56, %s56
              %s72 = sphi %s51, %s51
            $region31: #{custom-call.27} parent=27 // loop_header_branch
              %69 = sbr.rel (%p67) target = $region35
            $region32: #{custom-call.27} parent=27 // loop_body
              %v73 = vld [vmem:[%s71] sm:%s64]
              %74 = vst [vmem:[%s72] sm:%s64] %v73
            $region33: #{custom-call.27} parent=27 // loop_footer
              %s70 = sadd.s32 1, %s66
            $region34: #{custom-call.27} parent=27 // loop_footer_branch
              %65 = sbr.rel target = $region30
            $region35: #{custom-call.27} parent=27 // loop_exit
              _
          $region28: #{custom-call.27} parent=19 // pred_fallthru
            _
        $region20: #{custom-call.27} parent=15 // pred_fallthru
          _
        %89 = vnop
      $region16: #{custom-call.27} parent=5 // pred_fallthru
        _
      %p90 = scmp.le.s32.totalorder 1, %s3
      %p91 = scmp.lt.s32.totalorder %s3, 3
      %p92 = pnand %p90, %p91
      %p93 = pneg %p92
      // Predicated region
      $region47: #{custom-call.27} parent=5 // pred_check
        _
      $region48: #{custom-call.27} parent=5 // pred_check_branch
        %95 = sbr.rel (%p92) target = $region50
      $region49: #{custom-call.27} parent=5 // pred_region
        #allocation4 [shape = 'f32[4,4]{1,0}', space=vmem, size = 0x1000, scoped, tag = 'rescaled input a']
        %s96 = ssub.s32 %s3, 1
        %s97 = sand.u32 %s8, 1
        %s98 = sand.u32 %s8, 1
        %s99 = smul.addr %s98, 4
        %s100 = scalar_lea.vmem [#allocation1], %s99
        %s101 = sand.u32 %s8, 1
        %s102 = sand.u32 %s8, 1
        %s103 = smul.addr %s102, 4
        %s104 = scalar_lea.vmem [#allocation1], %s103
        %s105 = sand.u32 %s8, 1
        %s106 = sand.u32 %s8, 1
        %s107 = smul.addr %s106, 4
        %s108 = scalar_lea.vmem [#allocation3], %s107
        %s110 = sshll.u32 1, 4
        %s111 = ssub.s32 %s110, 1
        %v112 = vld [vmem:[%s104] sm:%s111]
        %113 = vst [vmem:[#allocation0] sm:%s111] %v112
        %v114 = vlaneseq
        %v115 = vand.u32 %v114, 127
        %vm116 = vcmp.lt.s32.totalorder %v115, 4
        %v117 = vlaneseq
        %v118 = vshrl.u32 %v117, 7
        %vm120 = vcmp.eq.s32.totalorder %v118, %v115
        %v121 = vld [vmem:[#allocation0] sm:$0xff]
        %v122 = vsel %vm120, %v121, 0.0
        %123 = vadd.xlane.f32.xlu0 %v122
        %v124 = vpop.xlane.xlu0 %123
        %vm125 = vcmp.ge.s32.totalorder %v118, %v115
        %vm126 = vmand %vm125, %vm116
        %v127 = vsel %vm126, %v121, 0.0
        %v128 = vrcp.pop %v124
        %v129 = vmul.f32 %v127, %v128
        %130 = vst [vmem:[#allocation4] sm:$0xff] %v129
        %v131 = vlaneseq
        %v132 = vand.u32 %v131, 127
        %v133 = vlaneseq
        %v134 = vshrl.u32 %v133, 7
        %vm136 = vcmp.eq.s32.totalorder %v132, %v134
        %v137 = vlaneseq
        %v138 = vand.u32 %v137, 127
        %vm139 = vcmp.eq.s32.totalorder %v138, 0
        %v140 = vsel %vm139, 1.0, -1.0
        %v141 = vsel %vm136, %v140, 0.0
        %s142 = scalar_lea.vmem [#allocation4], 1
        %v143 = vld [vmem:[%s142] ss:$0 sm:$0xff]
        %v144 = vxor.u32 %v143, 2147483648
        %v145 = vlaneseq
        %v146 = vand.u32 %v145, 127
        %vm147 = vcmp.eq.s32.totalorder %v146, 1
        %v148 = vmul.f32 %v144, %v141
        %149 = vadd.xlane.f32.xlu0 %v148
        %v150 = vpop.xlane.xlu0 %149
        %v151 = vsel %vm147, %v150, %v141
        %s152 = scalar_lea.vmem [#allocation4], 2
        %v153 = vld [vmem:[%s152] ss:$0 sm:$0xff]
        %v154 = vxor.u32 %v153, 2147483648
        %v155 = vlaneseq
        %v156 = vand.u32 %v155, 127
        %vm157 = vcmp.eq.s32.totalorder %v156, 2
        %v158 = vmul.f32 %v154, %v151
        %159 = vadd.xlane.f32.xlu0 %v158
        %v160 = vpop.xlane.xlu0 %159
        %v161 = vsel %vm157, %v160, %v151
        %s162 = scalar_lea.vmem [#allocation4], 3
        %v163 = vld [vmem:[%s162] ss:$0 sm:$0xff]
        %v164 = vxor.u32 %v163, 2147483648
        %v165 = vlaneseq
        %v166 = vand.u32 %v165, 127
        %vm167 = vcmp.eq.s32.totalorder %v166, 3
        %v168 = vmul.f32 %v164, %v161
        %169 = vadd.xlane.f32.xlu0 %v168
        %v170 = vpop.xlane.xlu0 %169
        %v171 = vsel %vm167, %v170, %v161
        %v172 = vrcp.pop %v124
        %v173 = vmul.f32 %v171, %v172
        %vm174 = vweird.f32 %v124
        %v175 = vsel %vm174, %v171, %v173
        %176 = vst [vmem:[#allocation2] sm:$0xff] %v175
        %s178 = sshll.u32 1, 4
        %s179 = ssub.s32 %s178, 1
        %v181 = vld [vmem:[#allocation2] sm:%s179]
        %s182 = sshll.u32 1, 4
        %s183 = ssub.s32 %s182, 1
        %184 = vst [vmem:[%s108] sm:%s183] %v181
        %s185 = sand.u32 %s8, 1
        %s186 = sand.u32 %s8, 1
        %s187 = smul.addr %s186, 4
        %s188 = scalar_lea.vmem [#allocation3], %s187
        %s189 = sadd.s32 %s17, %s16
        %s190 = sadd.s32 %s189, %s15
        %s191 = sadd.s32 %s190, %s14
        %s192 = smul.addr %s191, 4
        %s193 = scalar_lea.vmem %s1, %s192
        // Predicated region
        $region51: #{custom-call.27} parent=49 // pred_check
          _
        $region52: #{custom-call.27} parent=49 // pred_check_branch
          %195 = sbr.rel (0) target = $region54
        $region53: #{custom-call.27} parent=49 // pred_region
          // Predicated region
          $region55: #{custom-call.27} parent=53 // pred_check
            _
          $region56: #{custom-call.27} parent=53 // pred_check_branch
            %197 = sbr.rel target = $region58
          $region57: #{custom-call.27} parent=53 // pred_region
            // Predicated region
            $region70: #{custom-call.27} parent=57 // pred_check
              _
            $region71: #{custom-call.27} parent=57 // pred_check_branch
              %213 = sbr.rel (0) target = $region73
            $region72: #{custom-call.27} parent=57 // pred_region
              %s215 = ssub.s32 16, 1
              loop: start=0, step=1, limit=1
              $region74: #{custom-call.27} parent=72 // loop_pre_header
                _
              $region75: #{custom-call.27} parent=72 // loop_header
                %s217 = sphi 0, %s221
                %p218 = scmp.ge.s32.totalorder %s217, 1
                %s222 = sphi %s188, %s188
                %s223 = sphi %s193, %s193
              $region76: #{custom-call.27} parent=72 // loop_header_branch
                %220 = sbr.rel (%p218) target = $region80
              $region77: #{custom-call.27} parent=72 // loop_body
                %v224 = vld [vmem:[%s222] sm:%s215]
                %225 = vst [vmem:[%s223] sm:%s215] %v224
              $region78: #{custom-call.27} parent=72 // loop_footer
                %s221 = sadd.s32 1, %s217
              $region79: #{custom-call.27} parent=72 // loop_footer_branch
                %216 = sbr.rel target = $region75
              $region80: #{custom-call.27} parent=72 // loop_exit
                _
            $region73: #{custom-call.27} parent=57 // pred_fallthru
              _
          $region58: #{custom-call.27} parent=53 // pred_fallthru
            _
          // Predicated region
          $region59: #{custom-call.27} parent=53 // pred_check
            _
          $region60: #{custom-call.27} parent=53 // pred_check_branch
            %199 = sbr.rel (0) target = $region62
          $region61: #{custom-call.27} parent=53 // pred_region
            %s201 = ssub.s32 16, 1
            loop: start=0, step=1, limit=1
            $region63: #{custom-call.27} parent=61 // loop_pre_header
              _
            $region64: #{custom-call.27} parent=61 // loop_header
              %s203 = sphi 0, %s207
              %p204 = scmp.ge.s32.totalorder %s203, 1
              %s208 = sphi %s188, %s188
              %s209 = sphi %s193, %s193
            $region65: #{custom-call.27} parent=61 // loop_header_branch
              %206 = sbr.rel (%p204) target = $region69
            $region66: #{custom-call.27} parent=61 // loop_body
              %v210 = vld [vmem:[%s208] sm:%s201]
              %211 = vst [vmem:[%s209] sm:%s201] %v210
            $region67: #{custom-call.27} parent=61 // loop_footer
              %s207 = sadd.s32 1, %s203
            $region68: #{custom-call.27} parent=61 // loop_footer_branch
              %202 = sbr.rel target = $region64
            $region69: #{custom-call.27} parent=61 // loop_exit
              _
          $region62: #{custom-call.27} parent=53 // pred_fallthru
            _
        $region54: #{custom-call.27} parent=49 // pred_fallthru
          _
        %226 = vnop
      $region50: #{custom-call.27} parent=5 // pred_fallthru
        _
      %p227 = scmp.le.s32.totalorder 2, %s3
      // Predicated region
      $region81: #{custom-call.27} parent=5 // pred_check
        %p228 = pneg %p227
      $region82: #{custom-call.27} parent=5 // pred_check_branch
        %230 = sbr.rel (%p228) target = $region84
      $region83: #{custom-call.27} parent=5 // pred_region
        %s231 = ssub.s32 %s3, 2
        %s232 = sand.u32 %s9, 1
        %s233 = sand.u32 %s9, 1
        %s234 = smul.addr %s233, 4
        %s235 = scalar_lea.vmem [#allocation3], %s234
      $region84: #{custom-call.27} parent=5 // pred_fallthru
        _
    $region6: #{custom-call.27} parent=1 // loop_footer
      %s7 = sadd.s32 1, %s3
    $region7: #{custom-call.27} parent=1 // loop_footer_branch
      %2 = sbr.rel target = $region3
    $region8: #{custom-call.27} parent=1 // loop_exit
      _

// kernel: custom-call.26
$region0: #{custom-call.26}
  %s0 = inlined_call_operand.vmem [shape: f32[2,1,4,4], index: 0, kind: input, shape index: {}]
  %s1 = inlined_call_operand.vmem [shape: f32[2,1,4,4], index: 1, kind: output, shape index: {}]
  $region1: #{custom-call.26} parent=0
    #allocation0 [shape = 'u8[4096]{0}', space=vmem, size = 0x1000, scoped, tag = 'operand span for operand 0']
    #allocation1 [shape = 'u8[4096]{0}', space=vmem, size = 0x1000, scoped, tag = 'packed  for operand 0']
    #allocation2 [shape = 'u8[4096]{0}', space=vmem, size = 0x1000, scoped, tag = 'operand span for operand 1']
    #allocation3 [shape = 'u8[4096]{0}', space=vmem, size = 0x1000, scoped, tag = 'packed  for operand 1']
    loop: start=0, step=1, limit=4
    $region2: #{custom-call.26} parent=1 // loop_pre_header
      _
    $region3: #{custom-call.26} parent=1 // loop_header
      %s3 = sphi 0, %s7
      %p4 = scmp.ge.s32.totalorder %s3, 4
      %s10 = sphi 0, %s36
      %s11 = sphi 0, %s32
      %s12 = sphi 0, %s28
      %s13 = sphi 0, %s24
      %s14 = sphi 0, %s10
      %s15 = sphi 0, %s11
      %s16 = sphi 0, %s12
      %s17 = sphi 0, %s13
      %s18 = sphi 0, %s14
      %s19 = sphi 0, %s15
      %s20 = sphi 0, %s16
      %s21 = sphi 0, %s17
    $region4: #{custom-call.26} parent=1 // loop_header_branch
      %6 = sbr.rel (%p4) target = $region8
    $region5: #{custom-call.26} parent=1 // loop_body
      %s8 = ssub.s32 %s3, 1
      %s9 = ssub.s32 %s3, 2
      %s22 = sadd.s32 1, %s13
      %p23 = scmp.ge.s32.totalorder %s22, 1
      %s24 = scalar_select %p23, 0, %s22
      %s25 = sadd.s32 1, %s12
      %s26 = scalar_select %p23, %s25, %s12
      %p27 = scmp.ge.s32.totalorder %s26, 1
      %s28 = scalar_select %p27, 0, %s26
      %s29 = sadd.s32 1, %s11
      %s30 = scalar_select %p27, %s29, %s11
      %p31 = scmp.ge.s32.totalorder %s30, 1
      %s32 = scalar_select %p31, 0, %s30
      %s33 = sadd.s32 1, %s10
      %s34 = scalar_select %p31, %s33, %s10
      %p35 = scmp.ge.s32.totalorder %s34, 2
      %s36 = scalar_select %p35, 0, %s34
      %p37 = scmp.le.s32.totalorder 1, %s3
      %p38 = scmp.lt.s32.totalorder %s3, 3
      %p39 = pnand %p37, %p38
      %p40 = pneg %p39
      // Predicated region
      $region9: #{custom-call.26} parent=5 // pred_check
        _
      $region10: #{custom-call.26} parent=5 // pred_check_branch
        %42 = sbr.rel (%p39) target = $region12
      $region11: #{custom-call.26} parent=5 // pred_region
        %s43 = ssub.s32 %s3, 1
      $region12: #{custom-call.26} parent=5 // pred_fallthru
        _
      %p44 = scmp.lt.s32.totalorder %s3, 2
      // Predicated region
      $region13: #{custom-call.26} parent=5 // pred_check
        %p45 = pneg %p44
      $region14: #{custom-call.26} parent=5 // pred_check_branch
        %47 = sbr.rel (%p45) target = $region16
      $region15: #{custom-call.26} parent=5 // pred_region
        %s48 = sand.u32 %s3, 1
        %s49 = sand.u32 %s3, 1
        %s50 = smul.addr %s49, 4
        %s51 = scalar_lea.vmem [#allocation1], %s50
        %s52 = sadd.s32 %s13, %s12
        %s53 = sadd.s32 %s52, %s11
        %s54 = sadd.s32 %s53, %s10
        %s55 = smul.addr %s54, 4
        %s56 = scalar_lea.vmem %s0, %s55
        // Predicated region
        $region17: #{custom-call.26} parent=15 // pred_check
          _
        $region18: #{custom-call.26} parent=15 // pred_check_branch
          %58 = sbr.rel (0) target = $region20
        $region19: #{custom-call.26} parent=15 // pred_region
          // Predicated region
          $region21: #{custom-call.26} parent=19 // pred_check
            _
          $region22: #{custom-call.26} parent=19 // pred_check_branch
            %60 = sbr.rel target = $region24
          $region23: #{custom-call.26} parent=19 // pred_region
            // Predicated region
            $region36: #{custom-call.26} parent=23 // pred_check
              _
            $region37: #{custom-call.26} parent=23 // pred_check_branch
              %76 = sbr.rel (0) target = $region39
            $region38: #{custom-call.26} parent=23 // pred_region
              %s78 = ssub.s32 16, 1
              loop: start=0, step=1, limit=1
              $region40: #{custom-call.26} parent=38 // loop_pre_header
                _
              $region41: #{custom-call.26} parent=38 // loop_header
                %s80 = sphi 0, %s84
                %p81 = scmp.ge.s32.totalorder %s80, 1
                %s85 = sphi %s56, %s56
                %s86 = sphi %s51, %s51
              $region42: #{custom-call.26} parent=38 // loop_header_branch
                %83 = sbr.rel (%p81) target = $region46
              $region43: #{custom-call.26} parent=38 // loop_body
                %v87 = vld [vmem:[%s85] sm:%s78]
                %88 = vst [vmem:[%s86] sm:%s78] %v87
              $region44: #{custom-call.26} parent=38 // loop_footer
                %s84 = sadd.s32 1, %s80
              $region45: #{custom-call.26} parent=38 // loop_footer_branch
                %79 = sbr.rel target = $region41
              $region46: #{custom-call.26} parent=38 // loop_exit
                _
            $region39: #{custom-call.26} parent=23 // pred_fallthru
              _
          $region24: #{custom-call.26} parent=19 // pred_fallthru
            _
          // Predicated region
          $region25: #{custom-call.26} parent=19 // pred_check
            _
          $region26: #{custom-call.26} parent=19 // pred_check_branch
            %62 = sbr.rel (0) target = $region28
          $region27: #{custom-call.26} parent=19 // pred_region
            %s64 = ssub.s32 16, 1
            loop: start=0, step=1, limit=1
            $region29: #{custom-call.26} parent=27 // loop_pre_header
              _
            $region30: #{custom-call.26} parent=27 // loop_header
              %s66 = sphi 0, %s70
              %p67 = scmp.ge.s32.totalorder %s66, 1
              %s71 = sphi %s56, %s56
              %s72 = sphi %s51, %s51
            $region31: #{custom-call.26} parent=27 // loop_header_branch
              %69 = sbr.rel (%p67) target = $region35
            $region32: #{custom-call.26} parent=27 // loop_body
              %v73 = vld [vmem:[%s71] sm:%s64]
              %74 = vst [vmem:[%s72] sm:%s64] %v73
            $region33: #{custom-call.26} parent=27 // loop_footer
              %s70 = sadd.s32 1, %s66
            $region34: #{custom-call.26} parent=27 // loop_footer_branch
              %65 = sbr.rel target = $region30
            $region35: #{custom-call.26} parent=27 // loop_exit
              _
          $region28: #{custom-call.26} parent=19 // pred_fallthru
            _
        $region20: #{custom-call.26} parent=15 // pred_fallthru
          _
        %89 = vnop
      $region16: #{custom-call.26} parent=5 // pred_fallthru
        _
      %p90 = scmp.le.s32.totalorder 1, %s3
      %p91 = scmp.lt.s32.totalorder %s3, 3
      %p92 = pnand %p90, %p91
      %p93 = pneg %p92
      // Predicated region
      $region47: #{custom-call.26} parent=5 // pred_check
        _
      $region48: #{custom-call.26} parent=5 // pred_check_branch
        %95 = sbr.rel (%p92) target = $region50
      $region49: #{custom-call.26} parent=5 // pred_region
        #allocation4 [shape = 'f32[4,4]{1,0}', space=vmem, size = 0x1000, scoped, tag = 'rescaled input a']
        %s96 = ssub.s32 %s3, 1
        %s97 = sand.u32 %s8, 1
        %s98 = sand.u32 %s8, 1
        %s99 = smul.addr %s98, 4
        %s100 = scalar_lea.vmem [#allocation1], %s99
        %s101 = sand.u32 %s8, 1
        %s102 = sand.u32 %s8, 1
        %s103 = smul.addr %s102, 4
        %s104 = scalar_lea.vmem [#allocation1], %s103
        %s105 = sand.u32 %s8, 1
        %s106 = sand.u32 %s8, 1
        %s107 = smul.addr %s106, 4
        %s108 = scalar_lea.vmem [#allocation3], %s107
        %s110 = sshll.u32 1, 4
        %s111 = ssub.s32 %s110, 1
        %v112 = vld [vmem:[%s104] sm:%s111]
        %113 = vst [vmem:[#allocation0] sm:%s111] %v112
        %v114 = vlaneseq
        %v115 = vand.u32 %v114, 127
        %vm116 = vcmp.lt.s32.totalorder %v115, 4
        %v117 = vlaneseq
        %v118 = vshrl.u32 %v117, 7
        %vm120 = vcmp.eq.s32.totalorder %v118, %v115
        %v121 = vld [vmem:[#allocation0] sm:$0xff]
        %v122 = vsel %vm120, %v121, 0.0
        %123 = vadd.xlane.f32.xlu0 %v122
        %v124 = vpop.xlane.xlu0 %123
        %vm125 = vcmp.le.s32.totalorder %v118, %v115
        %vm126 = vmand %vm125, %vm116
        %v127 = vsel %vm126, %v121, 0.0
        %v128 = vrcp.pop %v124
        %v129 = vmul.f32 %v127, %v128
        %130 = vst [vmem:[#allocation4] sm:$0xff] %v129
        %v131 = vlaneseq
        %v132 = vand.u32 %v131, 127
        %v133 = vlaneseq
        %v134 = vshrl.u32 %v133, 7
        %vm136 = vcmp.eq.s32.totalorder %v132, %v134
        %v137 = vlaneseq
        %v138 = vand.u32 %v137, 127
        %vm139 = vcmp.eq.s32.totalorder %v138, 3
        %v140 = vsel %vm139, 1.0, -1.0
        %v141 = vsel %vm136, %v140, 0.0
        %s142 = scalar_lea.vmem [#allocation4], 2
        %v143 = vld [vmem:[%s142] ss:$0 sm:$0xff]
        %v144 = vxor.u32 %v143, 2147483648
        %v145 = vlaneseq
        %v146 = vand.u32 %v145, 127
        %vm147 = vcmp.eq.s32.totalorder %v146, 2
        %v148 = vmul.f32 %v144, %v141
        %149 = vadd.xlane.f32.xlu0 %v148
        %v150 = vpop.xlane.xlu0 %149
        %v151 = vsel %vm147, %v150, %v141
        %s152 = scalar_lea.vmem [#allocation4], 1
        %v153 = vld [vmem:[%s152] ss:$0 sm:$0xff]
        %v154 = vxor.u32 %v153, 2147483648
        %v155 = vlaneseq
        %v156 = vand.u32 %v155, 127
        %vm157 = vcmp.eq.s32.totalorder %v156, 1
        %v158 = vmul.f32 %v154, %v151
        %159 = vadd.xlane.f32.xlu0 %v158
        %v160 = vpop.xlane.xlu0 %159
        %v161 = vsel %vm157, %v160, %v151
        %v162 = vld [vmem:[#allocation4] ss:$0 sm:$0xff]
        %v163 = vxor.u32 %v162, 2147483648
        %v164 = vlaneseq
        %v165 = vand.u32 %v164, 127
        %vm166 = vcmp.eq.s32.totalorder %v165, 0
        %v167 = vmul.f32 %v163, %v161
        %168 = vadd.xlane.f32.xlu0 %v167
        %v169 = vpop.xlane.xlu0 %168
        %v170 = vsel %vm166, %v169, %v161
        %v171 = vrcp.pop %v124
        %v172 = vmul.f32 %v170, %v171
        %vm173 = vweird.f32 %v124
        %v174 = vsel %vm173, %v170, %v172
        %175 = vst [vmem:[#allocation2] sm:$0xff] %v174
        %s177 = sshll.u32 1, 4
        %s178 = ssub.s32 %s177, 1
        %v180 = vld [vmem:[#allocation2] sm:%s178]
        %s181 = sshll.u32 1, 4
        %s182 = ssub.s32 %s181, 1
        %183 = vst [vmem:[%s108] sm:%s182] %v180
        %s184 = sand.u32 %s8, 1
        %s185 = sand.u32 %s8, 1
        %s186 = smul.addr %s185, 4
        %s187 = scalar_lea.vmem [#allocation3], %s186
        %s188 = sadd.s32 %s17, %s16
        %s189 = sadd.s32 %s188, %s15
        %s190 = sadd.s32 %s189, %s14
        %s191 = smul.addr %s190, 4
        %s192 = scalar_lea.vmem %s1, %s191
        // Predicated region
        $region51: #{custom-call.26} parent=49 // pred_check
          _
        $region52: #{custom-call.26} parent=49 // pred_check_branch
          %194 = sbr.rel (0) target = $region54
        $region53: #{custom-call.26} parent=49 // pred_region
          // Predicated region
          $region55: #{custom-call.26} parent=53 // pred_check
            _
          $region56: #{custom-call.26} parent=53 // pred_check_branch
            %196 = sbr.rel target = $region58
          $region57: #{custom-call.26} parent=53 // pred_region
            // Predicated region
            $region70: #{custom-call.26} parent=57 // pred_check
              _
            $region71: #{custom-call.26} parent=57 // pred_check_branch
              %212 = sbr.rel (0) target = $region73
            $region72: #{custom-call.26} parent=57 // pred_region
              %s214 = ssub.s32 16, 1
              loop: start=0, step=1, limit=1
              $region74: #{custom-call.26} parent=72 // loop_pre_header
                _
              $region75: #{custom-call.26} parent=72 // loop_header
                %s216 = sphi 0, %s220
                %p217 = scmp.ge.s32.totalorder %s216, 1
                %s221 = sphi %s187, %s187
                %s222 = sphi %s192, %s192
              $region76: #{custom-call.26} parent=72 // loop_header_branch
                %219 = sbr.rel (%p217) target = $region80
              $region77: #{custom-call.26} parent=72 // loop_body
                %v223 = vld [vmem:[%s221] sm:%s214]
                %224 = vst [vmem:[%s222] sm:%s214] %v223
              $region78: #{custom-call.26} parent=72 // loop_footer
                %s220 = sadd.s32 1, %s216
              $region79: #{custom-call.26} parent=72 // loop_footer_branch
                %215 = sbr.rel target = $region75
              $region80: #{custom-call.26} parent=72 // loop_exit
                _
            $region73: #{custom-call.26} parent=57 // pred_fallthru
              _
          $region58: #{custom-call.26} parent=53 // pred_fallthru
            _
          // Predicated region
          $region59: #{custom-call.26} parent=53 // pred_check
            _
          $region60: #{custom-call.26} parent=53 // pred_check_branch
            %198 = sbr.rel (0) target = $region62
          $region61: #{custom-call.26} parent=53 // pred_region
            %s200 = ssub.s32 16, 1
            loop: start=0, step=1, limit=1
            $region63: #{custom-call.26} parent=61 // loop_pre_header
              _
            $region64: #{custom-call.26} parent=61 // loop_header
              %s202 = sphi 0, %s206
              %p203 = scmp.ge.s32.totalorder %s202, 1
              %s207 = sphi %s187, %s187
              %s208 = sphi %s192, %s192
            $region65: #{custom-call.26} parent=61 // loop_header_branch
              %205 = sbr.rel (%p203) target = $region69
            $region66: #{custom-call.26} parent=61 // loop_body
              %v209 = vld [vmem:[%s207] sm:%s200]
              %210 = vst [vmem:[%s208] sm:%s200] %v209
            $region67: #{custom-call.26} parent=61 // loop_footer
              %s206 = sadd.s32 1, %s202
            $region68: #{custom-call.26} parent=61 // loop_footer_branch
              %201 = sbr.rel target = $region64
            $region69: #{custom-call.26} parent=61 // loop_exit
              _
          $region62: #{custom-call.26} parent=53 // pred_fallthru
            _
        $region54: #{custom-call.26} parent=49 // pred_fallthru
          _
        %225 = vnop
      $region50: #{custom-call.26} parent=5 // pred_fallthru
        _
      %p226 = scmp.le.s32.totalorder 2, %s3
      // Predicated region
      $region81: #{custom-call.26} parent=5 // pred_check
        %p227 = pneg %p226
      $region82: #{custom-call.26} parent=5 // pred_check_branch
        %229 = sbr.rel (%p227) target = $region84
      $region83: #{custom-call.26} parent=5 // pred_region
        %s230 = ssub.s32 %s3, 2
        %s231 = sand.u32 %s9, 1
        %s232 = sand.u32 %s9, 1
        %s233 = smul.addr %s232, 4
        %s234 = scalar_lea.vmem [#allocation3], %s233
      $region84: #{custom-call.26} parent=5 // pred_fallthru
        _
    $region6: #{custom-call.26} parent=1 // loop_footer
      %s7 = sadd.s32 1, %s3
    $region7: #{custom-call.26} parent=1 // loop_footer_branch
      %2 = sbr.rel target = $region3
    $region8: #{custom-call.26} parent=1 // loop_exit
      _

</llo_original>
